<compile_context>
chip_gen: v7x
topology: tpu7x:2x2x1
jax: 0.10.0
libtpu: 0.0.40
codegen_flags: <defaults>
</compile_context>

<pallas_src>
import functools

import jax
import jax.numpy as jnp
from jax.experimental import pallas as pl
from jax.experimental.pallas import tpu as pltpu


# ---------------------------------------------------------------------------
# Fused (ReLU'd) depthwise(dilated, grouped) x pointwise conv as K accumulating
# MXU matmuls per sample, plus per-sample BatchNorm partial statistics.
# ---------------------------------------------------------------------------
def _dilconv_kernel(x_ref, wt_ref, z_ref, stats_ref, xr_ref, *,
                    K, dil, stride, pad_d, D_in, TD):
    """One batch-sample grid step.

    x_ref:     (1, D_in, Hp*Wp*Cin)        ReLU'd, H/W-padded sample (bf16), H/W/C on lanes
    wt_ref:    (K, Hp*Wp*Cin, Ho*Wo*Cout)  Toeplitz weight (kh/kw taps + strides folded)
    z_ref:     (1, TD, Ho*Wo*Cout)         pre-BN conv output (f32, lane-dense minor dim)
    stats_ref: (1, 2, Ho*Wo*Cout)          per-sample [sum, sum_sq] BN partials
    xr_ref:    (D_in + 2*pad_d, Hp*Wp*Cin) VMEM scratch: zero-padded D window
    """
    HWoC = wt_ref.shape[-1]

    # Zero-filled D halo; interior planes are the (already ReLU'd, bf16) sample.
    # TODO(synk): for much larger H/W, fold the H/W zero-pad in here too (masked lane
    # stores) instead of padding in the XLA pre-copy.
    xr_ref[...] = jnp.zeros_like(xr_ref)
    xr_ref[pl.ds(pad_d, D_in), :] = x_ref[0]

    # K accumulating MXU matmuls: taps / channel mix / spatial strides all live in the
    # precomputed weight, so every LHS is a plain (strided) sublane slice and the
    # accumulator is already the lane-dense output tile (no repack before the store).
    acc = jnp.zeros((TD, HWoC), jnp.float32)
    for kd in range(K):
        if stride == 1:
            lhs = xr_ref[pl.ds(kd * dil, TD), :]
        else:
            lhs = xr_ref[pl.ds(kd * dil, TD, stride), :]
        acc = acc + jnp.dot(lhs, wt_ref[kd], preferred_element_type=jnp.float32)

    # Per-sample partial sums (per (oh, ow, cout) lane; folded per-channel in XLA).
    stats_ref[0, 0:1, :] = jnp.sum(acc, axis=0, keepdims=True)
    stats_ref[0, 1:2, :] = jnp.sum(acc * acc, axis=0, keepdims=True)

    # Lane-dense store (minor dim Ho*Wo*Cout = 512 -> unmasked full vst).
    z_ref[0] = acc


def dilconv_forward(x, dw, pw, gamma, beta, *,
                    kernel_size=3, stride=1, padding=2, dilation=2, eps=1e-5):
    """x: (N, Cin, D, H, W) NCDHW (PyTorch convention). Returns (N, Cout, Do, Ho, Wo)."""
    N, Cin, D, H, W = x.shape
    Cout = pw.shape[1]
    K, dil, pad = kernel_size, dilation, padding

    def out_len(n):
        return (n + 2 * pad - dil * (K - 1) - 1) // stride + 1

    Do, Ho, Wo = out_len(D), out_len(H), out_len(W)
    Hp, Wp = H + 2 * pad, W + 2 * pad
    HWC, HWoC = Hp * Wp * Cin, Ho * Wo * Cout
    M = N * Do * Ho * Wo

    # --- glue: NCDHW -> channels-last, ReLU (f32 compare), H/W pad, bf16 cast.  XLA
    # fuses all of this into the single layout copy it must do anyway; the D pad is
    # handled in-kernel via the halo scratch (no padded-D copy in HBM).
    xc = jnp.transpose(x, (0, 2, 3, 4, 1)).astype(jnp.float32)           # (N,D,H,W,Cin)
    xr = jnp.maximum(xc, 0.0)
    xp = jnp.pad(xr, ((0, 0), (0, 0), (pad, pad), (pad, pad), (0, 0)))
    xm = xp.reshape(N, D, HWC).astype(jnp.bfloat16)

    # --- Toeplitz weight: kh/kw taps, H/W strides and the channel mix folded in.
    # wt[kd, (h*Wp+w)*Cin+c, (oh*Wo+ow)*Cout+co] = dw[kd,kh,kw,c] * pw[c,co]
    #   with h = oh*stride + kh*dil, w = ow*stride + kw*dil.
    # Built with one einsum against one-hot selectors (no chained .at[].add updates).
    ks = jnp.arange(K)
    selH = (jnp.arange(Hp)[None, None, :] ==
            (jnp.arange(Ho)[None, :, None] * stride + ks[:, None, None] * dil)
            ).astype(jnp.float32)                                        # (K, Ho, Hp)
    selW = (jnp.arange(Wp)[None, None, :] ==
            (jnp.arange(Wo)[None, :, None] * stride + ks[:, None, None] * dil)
            ).astype(jnp.float32)                                        # (K, Wo, Wp)
    wt = jnp.einsum('abgc,co,bph,gqw->ahwcpqo',
                    dw.astype(jnp.float32), pw.astype(jnp.float32), selH, selW)
    wt = wt.reshape(K, HWC, HWoC).astype(jnp.bfloat16)

    # --- single Pallas pass: whole-sample D tile, grid=(N,) fully parallel -------------
    TD = Do                       # whole output-D extent per grid step
    Dp = D + 2 * pad              # zero-padded D extent held in VMEM scratch
    # TODO(synk): for large D on v7x (64 MiB VMEM), tile D with halo input blocks
    # (pl.Element on the D axis) instead of the whole-sample block.

    kernel = functools.partial(_dilconv_kernel, K=K, dil=dil, stride=stride,
                               pad_d=pad, D_in=D, TD=TD)

    z_slab, stats = pl.pallas_call(
        kernel,
        grid=(N,),
        in_specs=[
            pl.BlockSpec((1, D, HWC), lambda n: (n, 0, 0)),
            pl.BlockSpec((K, HWC, HWoC), lambda n: (0, 0, 0)),
        ],
        out_specs=(
            pl.BlockSpec((1, TD, HWoC), lambda n: (n, 0, 0)),
            pl.BlockSpec((1, 2, HWoC), lambda n: (n, 0, 0)),
        ),
        out_shape=(
            jax.ShapeDtypeStruct((N, TD, HWoC), jnp.float32),
            jax.ShapeDtypeStruct((N, 2, HWoC), jnp.float32),
        ),
        scratch_shapes=[pltpu.VMEM((Dp, HWC), jnp.bfloat16)],
        compiler_params=pltpu.CompilerParams(
            dimension_semantics=("parallel",),          # 2 steps -> both v7x TCs busy
            vmem_limit_bytes=32 * 1024 * 1024),         # ~3.6 MiB used; fits all chips
        cost_estimate=pl.CostEstimate(
            flops=2 * N * K * TD * HWC * HWoC,
            transcendentals=0,
            bytes_accessed=2 * (xm.size + wt.size) + 4 * (M * Cout + N * 2 * HWoC)),
    )(xm, wt)

    # --- BN epilogue in XLA: tiny per-channel reductions; the affine fuses with the
    # reshape/transpose copy back to NCDHW (no second Pallas pass over the output).
    ssum = jnp.sum(stats[:, 0, :].reshape(N, Ho * Wo, Cout), axis=(0, 1))
    ssq = jnp.sum(stats[:, 1, :].reshape(N, Ho * Wo, Cout), axis=(0, 1))
    mean = ssum / M
    var = jnp.maximum(ssq / M - mean * mean, 0.0)       # biased training-mode variance
    scale = gamma.astype(jnp.float32) * jax.lax.rsqrt(var + eps)
    shift = beta.astype(jnp.float32) - mean * scale

    out = z_slab.reshape(N, Do, Ho, Wo, Cout) * scale + shift
    return out.transpose(0, 4, 1, 2, 3)


def dilconv_reference(x, dw, pw, gamma, beta, *,
                      stride=1, padding=2, dilation=2, eps=1e-5):
    """Pure-JAX (XLA conv) reference matching the PyTorch module semantics (f32)."""
    Cin = x.shape[1]
    r = jnp.maximum(x, 0.0)
    dw_oidhw = jnp.transpose(dw, (3, 0, 1, 2))[:, None]              # (Cin,1,K,K,K)
    y = jax.lax.conv_general_dilated(
        r, dw_oidhw, window_strides=(stride,) * 3,
        padding=[(padding, padding)] * 3, rhs_dilation=(dilation,) * 3,
        dimension_numbers=("NCDHW", "OIDHW", "NCDHW"),
        feature_group_count=Cin)
    pw_oidhw = jnp.transpose(pw, (1, 0))[:, :, None, None, None]     # (Cout,Cin,1,1,1)
    z = jax.lax.conv_general_dilated(
        y, pw_oidhw, window_strides=(1, 1, 1), padding=[(0, 0)] * 3,
        dimension_numbers=("NCDHW", "OIDHW", "NCDHW"))
    mean = jnp.mean(z, axis=(0, 2, 3, 4), keepdims=True)
    var = jnp.mean(jnp.square(z - mean), axis=(0, 2, 3, 4), keepdims=True)
    zhat = (z - mean) * jax.lax.rsqrt(var + eps)
    return zhat * gamma[None, :, None, None, None] + beta[None, :, None, None, None]


if __name__ == "__main__":
    # DilConv(in_C=4, out_C=8, kernel_size=3, stride=1, padding=2) with dilation=2.
    in_C, out_C, K, stride, padding, dilation = 4, 8, 3, 1, 2, 2
    N, D, H, W = 2, 8, 8, 8

    key = jax.random.PRNGKey(0)
    kx, kdw, kpw = jax.random.split(key, 3)
    x = jax.random.normal(kx, (N, in_C, D, H, W), jnp.float32)           # NCDHW
    # Deterministic synthetic parameters (shapes implied by nn.Conv3d / nn.BatchNorm3d):
    dw = 0.2 * jax.random.normal(kdw, (K, K, K, in_C), jnp.float32)      # depthwise
    pw = 0.2 * jax.random.normal(kpw, (in_C, out_C), jnp.float32)        # pointwise
    gamma = 1.0 + 0.1 * jnp.arange(out_C, dtype=jnp.float32)             # BN affine
    beta = 0.01 * jnp.arange(out_C, dtype=jnp.float32)

    fwd = jax.jit(functools.partial(dilconv_forward, kernel_size=K, stride=stride,
                                    padding=padding, dilation=dilation))
    out = jax.block_until_ready(fwd(x, dw, pw, gamma, beta))

    ref = dilconv_reference(x, dw, pw, gamma, beta,
                            stride=stride, padding=padding, dilation=dilation)
    assert out.shape == ref.shape, (out.shape, ref.shape)
    # bf16 LHS / weight with f32 accumulation -> bf16-appropriate tolerance vs f32 ref.
    if not jnp.allclose(out, ref, atol=8e-2, rtol=2e-2):
        raise AssertionError("Pallas DilConv output does not match reference")
    print("KERNEL_OK")
</pallas_src>

<mosaic_0001>
module attributes {stable_mosaic.version = 11 : i64} {
  func.func @_dilconv_kernel(%arg0: i32, %arg1: memref<1x8x576xbf16, #tpu.memory_space<vmem>>, %arg2: memref<3x576x512xbf16, #tpu.memory_space<vmem>>, %arg3: memref<1x8x512xf32, #tpu.memory_space<vmem>>, %arg4: memref<1x2x512xf32, #tpu.memory_space<vmem>>, %arg5: memref<12x576xbf16, #tpu.memory_space<vmem>>) attributes {dimension_semantics = [#tpu.dimension_semantics<parallel>], iteration_bounds = array<i64: 2>, scalar_prefetch = 0 : i64, scratch_operands = 1 : i64, tpu.core_type = #tpu.core_type<tc>, window_params = [{transform_indices = @transform_0, window_bounds = array<i64: 1, 8, 576>}, {pipeline_mode = #tpu.pipeline_mode<synchronous>, transform_indices = @transform_1, window_bounds = array<i64: 3, 576, 512>}, {transform_indices = @transform_2, window_bounds = array<i64: 1, 8, 512>}, {transform_indices = @transform_3, window_bounds = array<i64: 1, 2, 512>}]} {
    %cst = arith.constant 0.000000e+00 : bf16
    %0 = vector.broadcast %cst : bf16 to vector<12x576xbf16>
    %c0 = arith.constant 0 : index
    %c0_0 = arith.constant 0 : index
    %1 = vector.load %arg5[%c0, %c0_0] : memref<12x576xbf16, #tpu.memory_space<vmem>>, vector<12x576xbf16>
    tpu.vector_store %arg5[%c0, %c0_0], %0 {strides = array<i32>} : memref<12x576xbf16, #tpu.memory_space<vmem>>, vector<12x576xbf16>,
    %c0_1 = arith.constant 0 : index
    %c0_2 = arith.constant 0 : index
    %c0_3 = arith.constant 0 : index
    %2 = vector.load %arg1[%c0_1, %c0_2, %c0_3] : memref<1x8x576xbf16, #tpu.memory_space<vmem>>, vector<1x8x576xbf16>
    %3 = vector.shape_cast %2 : vector<1x8x576xbf16> to vector<8x576xbf16>
    %c2 = arith.constant 2 : index
    %c0_4 = arith.constant 0 : index
    %4 = vector.load %arg5[%c2, %c0_4] : memref<12x576xbf16, #tpu.memory_space<vmem>>, vector<8x576xbf16>
    tpu.vector_store %arg5[%c2, %c0_4], %3 {strides = array<i32>} : memref<12x576xbf16, #tpu.memory_space<vmem>>, vector<8x576xbf16>,
    %cst_5 = arith.constant 0.000000e+00 : f32
    %5 = vector.broadcast %cst_5 : f32 to vector<8x512xf32>
    %c0_6 = arith.constant 0 : index
    %c0_7 = arith.constant 0 : index
    %6 = vector.load %arg5[%c0_6, %c0_7] : memref<12x576xbf16, #tpu.memory_space<vmem>>, vector<8x576xbf16>
    %c0_8 = arith.constant 0 : index
    %c0_9 = arith.constant 0 : index
    %c0_10 = arith.constant 0 : index
    %7 = vector.load %arg2[%c0_8, %c0_9, %c0_10] : memref<3x576x512xbf16, #tpu.memory_space<vmem>>, vector<1x576x512xbf16>
    %8 = vector.shape_cast %7 : vector<1x576x512xbf16> to vector<576x512xbf16>
    %cst_11 = arith.constant dense<0.000000e+00> : vector<8x512xf32>
    %9 = tpu.matmul %6, %8, %cst_11 {dimension_numbers = #tpu.dot_dimension_numbers<[1], [0], [0], [1], [0, 0, 1, 1], [], []>} : vector<8x576xbf16>, vector<576x512xbf16>, vector<8x512xf32> -> vector<8x512xf32>
    %10 = arith.addf %5, %9 : vector<8x512xf32>
    %c2_12 = arith.constant 2 : index
    %c0_13 = arith.constant 0 : index
    %11 = vector.load %arg5[%c2_12, %c0_13] : memref<12x576xbf16, #tpu.memory_space<vmem>>, vector<8x576xbf16>
    %c1 = arith.constant 1 : index
    %c0_14 = arith.constant 0 : index
    %c0_15 = arith.constant 0 : index
    %12 = vector.load %arg2[%c1, %c0_14, %c0_15] : memref<3x576x512xbf16, #tpu.memory_space<vmem>>, vector<1x576x512xbf16>
    %13 = vector.shape_cast %12 : vector<1x576x512xbf16> to vector<576x512xbf16>
    %cst_16 = arith.constant dense<0.000000e+00> : vector<8x512xf32>
    %14 = tpu.matmul %11, %13, %cst_16 {dimension_numbers = #tpu.dot_dimension_numbers<[1], [0], [0], [1], [0, 0, 1, 1], [], []>} : vector<8x576xbf16>, vector<576x512xbf16>, vector<8x512xf32> -> vector<8x512xf32>
    %15 = arith.addf %10, %14 : vector<8x512xf32>
    %c4 = arith.constant 4 : index
    %c0_17 = arith.constant 0 : index
    %16 = vector.load %arg5[%c4, %c0_17] : memref<12x576xbf16, #tpu.memory_space<vmem>>, vector<8x576xbf16>
    %c2_18 = arith.constant 2 : index
    %c0_19 = arith.constant 0 : index
    %c0_20 = arith.constant 0 : index
    %17 = vector.load %arg2[%c2_18, %c0_19, %c0_20] : memref<3x576x512xbf16, #tpu.memory_space<vmem>>, vector<1x576x512xbf16>
    %18 = vector.shape_cast %17 : vector<1x576x512xbf16> to vector<576x512xbf16>
    %cst_21 = arith.constant dense<0.000000e+00> : vector<8x512xf32>
    %19 = tpu.matmul %16, %18, %cst_21 {dimension_numbers = #tpu.dot_dimension_numbers<[1], [0], [0], [1], [0, 0, 1, 1], [], []>} : vector<8x576xbf16>, vector<576x512xbf16>, vector<8x512xf32> -> vector<8x512xf32>
    %20 = arith.addf %15, %19 : vector<8x512xf32>
    %cst_22 = arith.constant dense<0.000000e+00> : vector<512xf32>
    %21 = vector.multi_reduction <add>, %20, %cst_22 [0] : vector<8x512xf32> to vector<512xf32>
    %22 = vector.shape_cast %21 : vector<512xf32> to vector<1x512xf32>
    %c0_23 = arith.constant 0 : index
    %c0_24 = arith.constant 0 : index
    %c0_25 = arith.constant 0 : index
    %23 = vector.load %arg4[%c0_23, %c0_24, %c0_25] : memref<1x2x512xf32, #tpu.memory_space<vmem>>, vector<1x1x512xf32>
    %24 = vector.shape_cast %23 : vector<1x1x512xf32> to vector<1x512xf32>
    %25 = vector.shape_cast %22 : vector<1x512xf32> to vector<1x1x512xf32>
    tpu.vector_store %arg4[%c0_23, %c0_24, %c0_25], %25 {strides = array<i32>} : memref<1x2x512xf32, #tpu.memory_space<vmem>>, vector<1x1x512xf32>,
    %26 = arith.mulf %20, %20 : vector<8x512xf32>
    %cst_26 = arith.constant dense<0.000000e+00> : vector<512xf32>
    %27 = vector.multi_reduction <add>, %26, %cst_26 [0] : vector<8x512xf32> to vector<512xf32>
    %28 = vector.shape_cast %27 : vector<512xf32> to vector<1x512xf32>
    %c0_27 = arith.constant 0 : index
    %c1_28 = arith.constant 1 : index
    %c0_29 = arith.constant 0 : index
    %29 = vector.load %arg4[%c0_27, %c1_28, %c0_29] : memref<1x2x512xf32, #tpu.memory_space<vmem>>, vector<1x1x512xf32>
    %30 = vector.shape_cast %29 : vector<1x1x512xf32> to vector<1x512xf32>
    %31 = vector.shape_cast %28 : vector<1x512xf32> to vector<1x1x512xf32>
    tpu.vector_store %arg4[%c0_27, %c1_28, %c0_29], %31 {strides = array<i32>} : memref<1x2x512xf32, #tpu.memory_space<vmem>>, vector<1x1x512xf32>,
    %c0_30 = arith.constant 0 : index
    %c0_31 = arith.constant 0 : index
    %c0_32 = arith.constant 0 : index
    %32 = vector.load %arg3[%c0_30, %c0_31, %c0_32] : memref<1x8x512xf32, #tpu.memory_space<vmem>>, vector<1x8x512xf32>
    %33 = vector.shape_cast %32 : vector<1x8x512xf32> to vector<8x512xf32>
    %34 = vector.shape_cast %20 : vector<8x512xf32> to vector<1x8x512xf32>
    tpu.vector_store %arg3[%c0_30, %c0_31, %c0_32], %34 {strides = array<i32>} : memref<1x8x512xf32, #tpu.memory_space<vmem>>, vector<1x8x512xf32>,
    return
  }
  func.func @transform_0(%arg0: i32) -> (i32, i32, i32) {
    %c0_i32 = arith.constant 0 : i32
    %c0_i32_0 = arith.constant 0 : i32
    %c0_i32_1 = arith.constant 0 : i32
    return %arg0, %c0_i32, %c0_i32_0 : i32, i32, i32
  }
  func.func @transform_1(%arg0: i32) -> (i32, i32, i32) {
    %c0_i32 = arith.constant 0 : i32
    %c0_i32_0 = arith.constant 0 : i32
    %c0_i32_1 = arith.constant 0 : i32
    %c0_i32_2 = arith.constant 0 : i32
    return %c0_i32, %c0_i32_0, %c0_i32_1 : i32, i32, i32
  }
  func.func @transform_2(%arg0: i32) -> (i32, i32, i32) {
    %c0_i32 = arith.constant 0 : i32
    %c0_i32_0 = arith.constant 0 : i32
    %c0_i32_1 = arith.constant 0 : i32
    return %arg0, %c0_i32, %c0_i32_0 : i32, i32, i32
  }
  func.func @transform_3(%arg0: i32) -> (i32, i32, i32) {
    %c0_i32 = arith.constant 0 : i32
    %c0_i32_0 = arith.constant 0 : i32
    %c0_i32_1 = arith.constant 0 : i32
    return %arg0, %c0_i32, %c0_i32_0 : i32, i32, i32
  }
}

</mosaic_0001>

<llo_original>
// kernel: dilconv_forward.1
$region0: #{dilconv_forward.1}
  #allocation0 [shape = 'u32[]', space=smem, size = 0x4, offset = 0x4, fixed_abs, tag = 'smem constant byte address 0x4 - core index']
  #allocation1 [shape = 'u32[144,128]{1,0:T(1,128)}', space=vmem, size = 0x12000, scoped, tag = 'internal scratch']
  #allocation2 [shape = 'bf16[12,576]{1,0:T(8,128)(2,1)}', space=vmem, size = 0x5000, scoped, tag = 'scratch operand']
  %s0 = inlined_call_operand.vmem [shape: bf16[2,8,576], index: 0, kind: input, shape index: {}]
  %s1 = inlined_call_operand.vmem [shape: bf16[3,576,512], index: 1, kind: input, shape index: {}]
  %s2 = inlined_call_operand.vmem [shape: f32[2,8,512], index: 2, kind: output, shape index: {0}]
  %s3 = inlined_call_operand.vmem [shape: f32[2,2,512], index: 3, kind: output, shape index: {1}]
  %4 = xla_tuple %s2, %s3
  %s5 = sld [smem:[#allocation0]]
  $region49: #{dilconv_forward.1} parent=0
    _
  %s7 = ssub.s32 1, %s5
  %s8 = scalar_select 0, %s7, %s5
  loop: start=0, step=1, limit=4
  $region2: #{dilconv_forward.1} parent=0 // loop_pre_header
    _
  $region3: #{dilconv_forward.1} parent=0 // loop_header
    %s10 = sphi 0, %s14
    %p11 = scmp.ge.s32.totalorder %s10, 4
    %s20 = sphi 0, %s22
    %s23 = sphi 0, %s20
    %s24 = sphi 0, %s23
    %s40 = sphi 0, %s24
    %s44 = sphi 0, %s44
    %s46 = sphi 0, %s44
    %s47 = sphi 0, %s46
    %s61 = sphi 0, %s47
    %s67 = sphi 0, %s69
    %s70 = sphi 0, %s67
    %s71 = sphi 0, %s70
    %s87 = sphi 0, %s71
    %s93 = sphi 0, %s95
    %s96 = sphi 0, %s93
    %s97 = sphi 0, %s96
    %s113 = sphi 0, %s97
  $region4: #{dilconv_forward.1} parent=0 // loop_header_branch
    %13 = sbr.rel (%p11) target = $region8
  $region5: #{dilconv_forward.1} parent=0 // loop_body
    %s15 = ssub.s32 %s10, 1
    %s16 = ssub.s32 %s10, 2
    %s17 = sadd.s32 %s10, 1
    %s18 = ssub.s32 %s10, %s17
    %p19 = scmp.eq.s32.totalorder %s18, 0
    %s21 = sadd.s32 %s20, 1
    %s22 = scalar_select %p19, %s20, %s21
    %p25 = pneg %p19
    %p26 = scmp.eq.s32.totalorder %s10, 1
    %p27 = por %p25, %p26
    %p28 = scmp.ne.s32.totalorder %s20, %s23
    %p29 = scmp.eq.s32.totalorder %s10, 0
    %p30 = por %p28, %p29
    %p31 = scmp.ne.s32.totalorder %s20, %s23
    %p32 = scmp.eq.s32.totalorder %s15, 1
    %p33 = por %p31, %p32
    %p34 = scmp.ne.s32.totalorder %s23, %s24
    %p35 = scmp.eq.s32.totalorder %s15, 0
    %p36 = por %p34, %p35
    %p37 = scmp.ne.s32.totalorder %s23, %s24
    %p38 = scmp.eq.s32.totalorder %s16, 1
    %p39 = por %p37, %p38
    %p41 = scmp.ne.s32.totalorder %s24, %s40
    %p42 = scmp.eq.s32.totalorder %s16, 0
    %p43 = por %p41, %p42
    %s45 = sadd.s32 %s44, 1
    %p48 = scmp.eq.s32.totalorder %s10, 1
    %p49 = scmp.ne.s32.totalorder %s44, %s46
    %p50 = scmp.eq.s32.totalorder %s10, 0
    %p51 = por %p49, %p50
    %p52 = scmp.ne.s32.totalorder %s44, %s46
    %p53 = scmp.eq.s32.totalorder %s15, 1
    %p54 = por %p52, %p53
    %p55 = scmp.ne.s32.totalorder %s46, %s47
    %p56 = scmp.eq.s32.totalorder %s15, 0
    %p57 = por %p55, %p56
    %p58 = scmp.ne.s32.totalorder %s46, %s47
    %p59 = scmp.eq.s32.totalorder %s16, 1
    %p60 = por %p58, %p59
    %p62 = scmp.ne.s32.totalorder %s47, %s61
    %p63 = scmp.eq.s32.totalorder %s16, 0
    %p64 = por %p62, %p63
    %s65 = ssub.s32 %s10, %s17
    %p66 = scmp.eq.s32.totalorder %s65, 0
    %s68 = sadd.s32 %s67, 1
    %s69 = scalar_select %p66, %s67, %s68
    %p72 = pneg %p66
    %p73 = scmp.eq.s32.totalorder %s10, 1
    %p74 = por %p72, %p73
    %p75 = scmp.ne.s32.totalorder %s67, %s70
    %p76 = scmp.eq.s32.totalorder %s10, 0
    %p77 = por %p75, %p76
    %p78 = scmp.ne.s32.totalorder %s67, %s70
    %p79 = scmp.eq.s32.totalorder %s15, 1
    %p80 = por %p78, %p79
    %p81 = scmp.ne.s32.totalorder %s70, %s71
    %p82 = scmp.eq.s32.totalorder %s15, 0
    %p83 = por %p81, %p82
    %p84 = scmp.ne.s32.totalorder %s70, %s71
    %p85 = scmp.eq.s32.totalorder %s16, 1
    %p86 = por %p84, %p85
    %p88 = scmp.ne.s32.totalorder %s71, %s87
    %p89 = scmp.eq.s32.totalorder %s16, 0
    %p90 = por %p88, %p89
    %s91 = ssub.s32 %s10, %s17
    %p92 = scmp.eq.s32.totalorder %s91, 0
    %s94 = sadd.s32 %s93, 1
    %s95 = scalar_select %p92, %s93, %s94
    %p98 = pneg %p92
    %p99 = scmp.eq.s32.totalorder %s10, 1
    %p100 = por %p98, %p99
    %p101 = scmp.ne.s32.totalorder %s93, %s96
    %p102 = scmp.eq.s32.totalorder %s10, 0
    %p103 = por %p101, %p102
    %p104 = scmp.ne.s32.totalorder %s93, %s96
    %p105 = scmp.eq.s32.totalorder %s15, 1
    %p106 = por %p104, %p105
    %p107 = scmp.ne.s32.totalorder %s96, %s97
    %p108 = scmp.eq.s32.totalorder %s15, 0
    %p109 = por %p107, %p108
    %p110 = scmp.ne.s32.totalorder %s96, %s97
    %p111 = scmp.eq.s32.totalorder %s16, 1
    %p112 = por %p110, %p111
    %p114 = scmp.ne.s32.totalorder %s97, %s113
    %p115 = scmp.eq.s32.totalorder %s16, 0
    %p116 = por %p114, %p115
    %p117 = scmp.le.s32.totalorder 1, %s10
    %p118 = scmp.lt.s32.totalorder %s10, 3
    %p119 = pnand %p117, %p118
    %p120 = pneg %p119
    // Predicated region
    $region9: #{dilconv_forward.1} parent=5 // pred_check
      _
    $region10: #{dilconv_forward.1} parent=5 // pred_check_branch
      %122 = sbr.rel (%p119) target = $region12
    $region11: #{dilconv_forward.1} parent=5 // pred_region
      %s123 = ssub.s32 %s10, 1
      // Predicated region
      $region13: #{dilconv_forward.1} parent=11 // pred_check
        %p124 = pneg %p57
      $region14: #{dilconv_forward.1} parent=11 // pred_check_branch
        %126 = sbr.rel (%p124) target = $region16
      $region15: #{dilconv_forward.1} parent=11 // pred_region
        _
      $region16: #{dilconv_forward.1} parent=11 // pred_fallthru
        _
    $region12: #{dilconv_forward.1} parent=5 // pred_fallthru
      _
    %p127 = scmp.lt.s32.totalorder %s10, 2
    // Predicated region
    $region17: #{dilconv_forward.1} parent=5 // pred_check
      %p128 = pneg %p127
    $region18: #{dilconv_forward.1} parent=5 // pred_check_branch
      %130 = sbr.rel (%p128) target = $region20
    $region19: #{dilconv_forward.1} parent=5 // pred_region
      // Predicated region
      $region21: #{dilconv_forward.1} parent=19 // pred_check
        %p131 = pneg %p30
      $region22: #{dilconv_forward.1} parent=19 // pred_check_branch
        %133 = sbr.rel (%p131) target = $region24
      $region23: #{dilconv_forward.1} parent=19 // pred_region
        %p134 = scmp.lt.s32.totalorder %s10, 1
        %s135 = scalar_select %p134, %s10, 1
        %s136 = smul.addr %s135, 5
        %s137 = smul.addr %s136, 4
        %s138 = scalar_lea.vmem %s0, %s137
      $region24: #{dilconv_forward.1} parent=19 // pred_fallthru
        _
    $region20: #{dilconv_forward.1} parent=5 // pred_fallthru
      _
    %p139 = scmp.le.s32.totalorder 1, %s10
    %p140 = scmp.lt.s32.totalorder %s10, 3
    %p141 = pnand %p139, %p140
    %p142 = pneg %p141
    // Predicated region
    $region25: #{dilconv_forward.1} parent=5 // pred_check
      _
    $region26: #{dilconv_forward.1} parent=5 // pred_check_branch
      %144 = sbr.rel (%p141) target = $region28
    $region27: #{dilconv_forward.1} parent=5 // pred_region
      %s145 = ssub.s32 %s10, 1
      %p146 = scmp.lt.s32.totalorder %s15, 1
      %s147 = scalar_select %p146, %s15, 1
      %s148 = smul.addr %s147, 5
      %s149 = smul.addr %s148, 4
      %s150 = scalar_lea.vmem %s0, %s149
      %p151 = pneg %p36
      %p152 = pneg %p33
      %p153 = pneg %p57
      %p154 = pneg %p54
      %p155 = pneg %p83
      %p156 = pneg %p80
      %p157 = scmp.lt.s32.totalorder %s15, 1
      %s158 = scalar_select %p157, %s15, 1
      %s159 = smul.addr %s158, 4
      %s160 = smul.addr %s159, 8
      %s161 = scalar_lea.vmem %s2, %s160
      %p162 = pneg %p109
      %p163 = pneg %p106
      %p164 = scmp.lt.s32.totalorder %s15, 1
      %s165 = scalar_select %p164, %s15, 1
      %s166 = smul.addr %s165, 4
      %s167 = smul.addr %s166, 2
      %s168 = scalar_lea.vmem %s3, %s167
      %p169 = scmp.lt.s32.totalorder %s15, 1
      %s170 = scalar_select %p169, %s15, 1
      %s171 = smul.addr %s170, 5
      %s172 = smul.addr %s171, 4
      %s173 = scalar_lea.vmem %s0, %s172
      %p174 = scmp.lt.s32.totalorder %s15, 1
      %s175 = scalar_select %p174, %s15, 1
      %s176 = smul.addr %s175, 4
      %s177 = smul.addr %s176, 8
      %s178 = scalar_lea.vmem %s2, %s177
      %p179 = scmp.lt.s32.totalorder %s15, 1
      %s180 = scalar_select %p179, %s15, 1
      %s181 = smul.addr %s180, 4
      %s182 = smul.addr %s181, 2
      %s183 = scalar_lea.vmem %s3, %s182
      %185 = vst [vmem:[#allocation2] sm:$0xff] 0
      %186 = vst [vmem:[#allocation2 + $0x8] sm:$0xff] 0
      %vm187 = vcmask 519168
      %188 = vst.msk [vmem:[#allocation2 + $0x10] sm:$0xf] %vm187, 0
      %189 = vst [vmem:[#allocation2 + $0x14] sm:$0x33] 0
      %190 = vst [vmem:[#allocation2 + $0x1c] sm:$0x33] 0
      %vm191 = vcmask 517120
      %192 = vst.msk [vmem:[#allocation2 + $0x24] sm:$0x3] %vm191, 0
      %v193 = vld [vmem:[%s173] sm:$0xff]
      %v194 = vld [vmem:[%s173 + $0x8] sm:$0xff]
      %v195 = vld [vmem:[%s173 + $0x10] sm:$0xf]
      %v199 = vrot.slane %v193, 7
      %v200 = vrot.slane %v194, 7
      %v201 = vrot.slane %v195, 7
      %v202 = vrot.slane %v199, 4
      %v203 = vrot.slane %v200, 4
      %v204 = vrot.slane %v201, 4
      %211 = vst [vmem:[#allocation2] sm:$0xee] %v199
      %212 = vst [vmem:[#allocation2 + $0x8] sm:$0xee] %v200
      %vm213 = vcmask 519169
      %214 = vst.msk [vmem:[#allocation2 + $0x10] sm:$0xe] %vm213, %v201
      %215 = vst [vmem:[#allocation2 + $0x14] sm:$0x11] %v202
      %216 = vst [vmem:[#allocation2 + $0x1c] sm:$0x11] %v203
      %vm217 = vcmask 516096
      %218 = vst.msk [vmem:[#allocation2 + $0x24] sm:$0x1] %vm217, %v204
      %v219 = vld [vmem:[#allocation2] sm:$0xff]
      %v220 = vld [vmem:[#allocation2 + $0x8] sm:$0xff]
      %v221 = vld [vmem:[#allocation2 + $0x10] sm:$0xf]
      %v222 = vld [vmem:[%s1] sm:$0xff]
      %v223 = vld [vmem:[%s1 + $0x8] sm:$0xff]
      %v224 = vld [vmem:[%s1 + $0x10] sm:$0xff]
      %v225 = vld [vmem:[%s1 + $0x18] sm:$0xff]
      %v226 = vld [vmem:[%s1 + $0x20] sm:$0xff]
      %v227 = vld [vmem:[%s1 + $0x28] sm:$0xff]
      %v228 = vld [vmem:[%s1 + $0x30] sm:$0xff]
      %v229 = vld [vmem:[%s1 + $0x38] sm:$0xff]
      %v230 = vld [vmem:[%s1 + $0x40] sm:$0xff]
      %v231 = vld [vmem:[%s1 + $0x48] sm:$0xff]
      %v232 = vld [vmem:[%s1 + $0x50] sm:$0xff]
      %v233 = vld [vmem:[%s1 + $0x58] sm:$0xff]
      %v234 = vld [vmem:[%s1 + $0x60] sm:$0xff]
      %v235 = vld [vmem:[%s1 + $0x68] sm:$0xff]
      %v236 = vld [vmem:[%s1 + $0x70] sm:$0xff]
      %v237 = vld [vmem:[%s1 + $0x78] sm:$0xff]
      %v238 = vld [vmem:[%s1 + $0x80] sm:$0xff]
      %v239 = vld [vmem:[%s1 + $0x88] sm:$0xff]
      %v240 = vld [vmem:[%s1 + $0x90] sm:$0xff]
      %v241 = vld [vmem:[%s1 + $0x98] sm:$0xff]
      %v242 = vld [vmem:[%s1 + $0xa0] sm:$0xff]
      %v243 = vld [vmem:[%s1 + $0xa8] sm:$0xff]
      %v244 = vld [vmem:[%s1 + $0xb0] sm:$0xff]
      %v245 = vld [vmem:[%s1 + $0xb8] sm:$0xff]
      %v246 = vld [vmem:[%s1 + $0xc0] sm:$0xff]
      %v247 = vld [vmem:[%s1 + $0xc8] sm:$0xff]
      %v248 = vld [vmem:[%s1 + $0xd0] sm:$0xff]
      %v249 = vld [vmem:[%s1 + $0xd8] sm:$0xff]
      %v250 = vld [vmem:[%s1 + $0xe0] sm:$0xff]
      %v251 = vld [vmem:[%s1 + $0xe8] sm:$0xff]
      %v252 = vld [vmem:[%s1 + $0xf0] sm:$0xff]
      %v253 = vld [vmem:[%s1 + $0xf8] sm:$0xff]
      %v254 = vld [vmem:[%s1 + $0x100] sm:$0xff]
      %v255 = vld [vmem:[%s1 + $0x108] sm:$0xff]
      %v256 = vld [vmem:[%s1 + $0x110] sm:$0xff]
      %v257 = vld [vmem:[%s1 + $0x118] sm:$0xff]
      %v258 = vld [vmem:[%s1 + $0x120] sm:$0xff]
      %v259 = vld [vmem:[%s1 + $0x128] sm:$0xff]
      %v260 = vld [vmem:[%s1 + $0x130] sm:$0xff]
      %v261 = vld [vmem:[%s1 + $0x138] sm:$0xff]
      %v262 = vld [vmem:[%s1 + $0x140] sm:$0xff]
      %v263 = vld [vmem:[%s1 + $0x148] sm:$0xff]
      %v264 = vld [vmem:[%s1 + $0x150] sm:$0xff]
      %v265 = vld [vmem:[%s1 + $0x158] sm:$0xff]
      %v266 = vld [vmem:[%s1 + $0x160] sm:$0xff]
      %v267 = vld [vmem:[%s1 + $0x168] sm:$0xff]
      %v268 = vld [vmem:[%s1 + $0x170] sm:$0xff]
      %v269 = vld [vmem:[%s1 + $0x178] sm:$0xff]
      %v270 = vld [vmem:[%s1 + $0x180] sm:$0xff]
      %v271 = vld [vmem:[%s1 + $0x188] sm:$0xff]
      %v272 = vld [vmem:[%s1 + $0x190] sm:$0xff]
      %v273 = vld [vmem:[%s1 + $0x198] sm:$0xff]
      %v274 = vld [vmem:[%s1 + $0x1a0] sm:$0xff]
      %v275 = vld [vmem:[%s1 + $0x1a8] sm:$0xff]
      %v276 = vld [vmem:[%s1 + $0x1b0] sm:$0xff]
      %v277 = vld [vmem:[%s1 + $0x1b8] sm:$0xff]
      %v278 = vld [vmem:[%s1 + $0x1c0] sm:$0xff]
      %v279 = vld [vmem:[%s1 + $0x1c8] sm:$0xff]
      %v280 = vld [vmem:[%s1 + $0x1d0] sm:$0xff]
      %v281 = vld [vmem:[%s1 + $0x1d8] sm:$0xff]
      %v282 = vld [vmem:[%s1 + $0x1e0] sm:$0xff]
      %v283 = vld [vmem:[%s1 + $0x1e8] sm:$0xff]
      %v284 = vld [vmem:[%s1 + $0x1f0] sm:$0xff]
      %v285 = vld [vmem:[%s1 + $0x1f8] sm:$0xff]
      %v286 = vld [vmem:[%s1 + $0x200] sm:$0xff]
      %v287 = vld [vmem:[%s1 + $0x208] sm:$0xff]
      %v288 = vld [vmem:[%s1 + $0x210] sm:$0xff]
      %v289 = vld [vmem:[%s1 + $0x218] sm:$0xff]
      %v290 = vld [vmem:[%s1 + $0x220] sm:$0xff]
      %v291 = vld [vmem:[%s1 + $0x228] sm:$0xff]
      %v292 = vld [vmem:[%s1 + $0x230] sm:$0xff]
      %v293 = vld [vmem:[%s1 + $0x238] sm:$0xff]
      %v294 = vld [vmem:[%s1 + $0x240] sm:$0xff]
      %v295 = vld [vmem:[%s1 + $0x248] sm:$0xff]
      %v296 = vld [vmem:[%s1 + $0x250] sm:$0xff]
      %v297 = vld [vmem:[%s1 + $0x258] sm:$0xff]
      %v298 = vld [vmem:[%s1 + $0x260] sm:$0xff]
      %v299 = vld [vmem:[%s1 + $0x268] sm:$0xff]
      %v300 = vld [vmem:[%s1 + $0x270] sm:$0xff]
      %v301 = vld [vmem:[%s1 + $0x278] sm:$0xff]
      %v302 = vld [vmem:[%s1 + $0x280] sm:$0xff]
      %v303 = vld [vmem:[%s1 + $0x288] sm:$0xff]
      %v304 = vld [vmem:[%s1 + $0x290] sm:$0xff]
      %v305 = vld [vmem:[%s1 + $0x298] sm:$0xff]
      %v306 = vld [vmem:[%s1 + $0x2a0] sm:$0xff]
      %v307 = vld [vmem:[%s1 + $0x2a8] sm:$0xff]
      %v308 = vld [vmem:[%s1 + $0x2b0] sm:$0xff]
      %v309 = vld [vmem:[%s1 + $0x2b8] sm:$0xff]
      %v310 = vld [vmem:[%s1 + $0x2c0] sm:$0xff]
      %v311 = vld [vmem:[%s1 + $0x2c8] sm:$0xff]
      %v312 = vld [vmem:[%s1 + $0x2d0] sm:$0xff]
      %v313 = vld [vmem:[%s1 + $0x2d8] sm:$0xff]
      %v314 = vld [vmem:[%s1 + $0x2e0] sm:$0xff]
      %v315 = vld [vmem:[%s1 + $0x2e8] sm:$0xff]
      %v316 = vld [vmem:[%s1 + $0x2f0] sm:$0xff]
      %v317 = vld [vmem:[%s1 + $0x2f8] sm:$0xff]
      %v318 = vld [vmem:[%s1 + $0x300] sm:$0xff]
      %v319 = vld [vmem:[%s1 + $0x308] sm:$0xff]
      %v320 = vld [vmem:[%s1 + $0x310] sm:$0xff]
      %v321 = vld [vmem:[%s1 + $0x318] sm:$0xff]
      %v322 = vld [vmem:[%s1 + $0x320] sm:$0xff]
      %v323 = vld [vmem:[%s1 + $0x328] sm:$0xff]
      %v324 = vld [vmem:[%s1 + $0x330] sm:$0xff]
      %v325 = vld [vmem:[%s1 + $0x338] sm:$0xff]
      %v326 = vld [vmem:[%s1 + $0x340] sm:$0xff]
      %v327 = vld [vmem:[%s1 + $0x348] sm:$0xff]
      %v328 = vld [vmem:[%s1 + $0x350] sm:$0xff]
      %v329 = vld [vmem:[%s1 + $0x358] sm:$0xff]
      %v330 = vld [vmem:[%s1 + $0x360] sm:$0xff]
      %v331 = vld [vmem:[%s1 + $0x368] sm:$0xff]
      %v332 = vld [vmem:[%s1 + $0x370] sm:$0xff]
      %v333 = vld [vmem:[%s1 + $0x378] sm:$0xff]
      %v334 = vld [vmem:[%s1 + $0x380] sm:$0xff]
      %v335 = vld [vmem:[%s1 + $0x388] sm:$0xff]
      %v336 = vld [vmem:[%s1 + $0x390] sm:$0xff]
      %v337 = vld [vmem:[%s1 + $0x398] sm:$0xff]
      %v338 = vld [vmem:[%s1 + $0x3a0] sm:$0xff]
      %v339 = vld [vmem:[%s1 + $0x3a8] sm:$0xff]
      %v340 = vld [vmem:[%s1 + $0x3b0] sm:$0xff]
      %v341 = vld [vmem:[%s1 + $0x3b8] sm:$0xff]
      %v342 = vld [vmem:[%s1 + $0x3c0] sm:$0xff]
      %v343 = vld [vmem:[%s1 + $0x3c8] sm:$0xff]
      %v344 = vld [vmem:[%s1 + $0x3d0] sm:$0xff]
      %v345 = vld [vmem:[%s1 + $0x3d8] sm:$0xff]
      %v346 = vld [vmem:[%s1 + $0x3e0] sm:$0xff]
      %v347 = vld [vmem:[%s1 + $0x3e8] sm:$0xff]
      %v348 = vld [vmem:[%s1 + $0x3f0] sm:$0xff]
      %v349 = vld [vmem:[%s1 + $0x3f8] sm:$0xff]
      %v350 = vld [vmem:[%s1 + $0x400] sm:$0xff]
      %v351 = vld [vmem:[%s1 + $0x408] sm:$0xff]
      %v352 = vld [vmem:[%s1 + $0x410] sm:$0xff]
      %v353 = vld [vmem:[%s1 + $0x418] sm:$0xff]
      %v354 = vld [vmem:[%s1 + $0x420] sm:$0xff]
      %v355 = vld [vmem:[%s1 + $0x428] sm:$0xff]
      %v356 = vld [vmem:[%s1 + $0x430] sm:$0xff]
      %v357 = vld [vmem:[%s1 + $0x438] sm:$0xff]
      %v358 = vld [vmem:[%s1 + $0x440] sm:$0xff]
      %v359 = vld [vmem:[%s1 + $0x448] sm:$0xff]
      %v360 = vld [vmem:[%s1 + $0x450] sm:$0xff]
      %v361 = vld [vmem:[%s1 + $0x458] sm:$0xff]
      %v362 = vld [vmem:[%s1 + $0x460] sm:$0xff]
      %v363 = vld [vmem:[%s1 + $0x468] sm:$0xff]
      %v364 = vld [vmem:[%s1 + $0x470] sm:$0xff]
      %v365 = vld [vmem:[%s1 + $0x478] sm:$0xff]
      %v366 = vld [vmem:[#allocation2] sm:$0xee]
      %v367 = vld [vmem:[#allocation2 + $0x8] sm:$0xee]
      %v368 = vld [vmem:[#allocation2 + $0x10] sm:$0xe]
      %v369 = vld [vmem:[#allocation2 + $0x14] sm:$0x11]
      %v370 = vld [vmem:[#allocation2 + $0x1c] sm:$0x11]
      %v371 = vld [vmem:[#allocation2 + $0x24] sm:$0x1]
      %s372 = scalar_lea.vmem %s1, 1152
      %v373 = vld [vmem:[%s372] sm:$0xff]
      %v374 = vld [vmem:[%s372 + $0x8] sm:$0xff]
      %v375 = vld [vmem:[%s372 + $0x10] sm:$0xff]
      %v376 = vld [vmem:[%s372 + $0x18] sm:$0xff]
      %v377 = vld [vmem:[%s372 + $0x20] sm:$0xff]
      %v378 = vld [vmem:[%s372 + $0x28] sm:$0xff]
      %v379 = vld [vmem:[%s372 + $0x30] sm:$0xff]
      %v380 = vld [vmem:[%s372 + $0x38] sm:$0xff]
      %v381 = vld [vmem:[%s372 + $0x40] sm:$0xff]
      %v382 = vld [vmem:[%s372 + $0x48] sm:$0xff]
      %v383 = vld [vmem:[%s372 + $0x50] sm:$0xff]
      %v384 = vld [vmem:[%s372 + $0x58] sm:$0xff]
      %v385 = vld [vmem:[%s372 + $0x60] sm:$0xff]
      %v386 = vld [vmem:[%s372 + $0x68] sm:$0xff]
      %v387 = vld [vmem:[%s372 + $0x70] sm:$0xff]
      %v388 = vld [vmem:[%s372 + $0x78] sm:$0xff]
      %v389 = vld [vmem:[%s372 + $0x80] sm:$0xff]
      %v390 = vld [vmem:[%s372 + $0x88] sm:$0xff]
      %v391 = vld [vmem:[%s372 + $0x90] sm:$0xff]
      %v392 = vld [vmem:[%s372 + $0x98] sm:$0xff]
      %v393 = vld [vmem:[%s372 + $0xa0] sm:$0xff]
      %v394 = vld [vmem:[%s372 + $0xa8] sm:$0xff]
      %v395 = vld [vmem:[%s372 + $0xb0] sm:$0xff]
      %v396 = vld [vmem:[%s372 + $0xb8] sm:$0xff]
      %v397 = vld [vmem:[%s372 + $0xc0] sm:$0xff]
      %v398 = vld [vmem:[%s372 + $0xc8] sm:$0xff]
      %v399 = vld [vmem:[%s372 + $0xd0] sm:$0xff]
      %v400 = vld [vmem:[%s372 + $0xd8] sm:$0xff]
      %v401 = vld [vmem:[%s372 + $0xe0] sm:$0xff]
      %v402 = vld [vmem:[%s372 + $0xe8] sm:$0xff]
      %v403 = vld [vmem:[%s372 + $0xf0] sm:$0xff]
      %v404 = vld [vmem:[%s372 + $0xf8] sm:$0xff]
      %v405 = vld [vmem:[%s372 + $0x100] sm:$0xff]
      %v406 = vld [vmem:[%s372 + $0x108] sm:$0xff]
      %v407 = vld [vmem:[%s372 + $0x110] sm:$0xff]
      %v408 = vld [vmem:[%s372 + $0x118] sm:$0xff]
      %v409 = vld [vmem:[%s372 + $0x120] sm:$0xff]
      %v410 = vld [vmem:[%s372 + $0x128] sm:$0xff]
      %v411 = vld [vmem:[%s372 + $0x130] sm:$0xff]
      %v412 = vld [vmem:[%s372 + $0x138] sm:$0xff]
      %v413 = vld [vmem:[%s372 + $0x140] sm:$0xff]
      %v414 = vld [vmem:[%s372 + $0x148] sm:$0xff]
      %v415 = vld [vmem:[%s372 + $0x150] sm:$0xff]
      %v416 = vld [vmem:[%s372 + $0x158] sm:$0xff]
      %v417 = vld [vmem:[%s372 + $0x160] sm:$0xff]
      %v418 = vld [vmem:[%s372 + $0x168] sm:$0xff]
      %v419 = vld [vmem:[%s372 + $0x170] sm:$0xff]
      %v420 = vld [vmem:[%s372 + $0x178] sm:$0xff]
      %v421 = vld [vmem:[%s372 + $0x180] sm:$0xff]
      %v422 = vld [vmem:[%s372 + $0x188] sm:$0xff]
      %v423 = vld [vmem:[%s372 + $0x190] sm:$0xff]
      %v424 = vld [vmem:[%s372 + $0x198] sm:$0xff]
      %v425 = vld [vmem:[%s372 + $0x1a0] sm:$0xff]
      %v426 = vld [vmem:[%s372 + $0x1a8] sm:$0xff]
      %v427 = vld [vmem:[%s372 + $0x1b0] sm:$0xff]
      %v428 = vld [vmem:[%s372 + $0x1b8] sm:$0xff]
      %v429 = vld [vmem:[%s372 + $0x1c0] sm:$0xff]
      %v430 = vld [vmem:[%s372 + $0x1c8] sm:$0xff]
      %v431 = vld [vmem:[%s372 + $0x1d0] sm:$0xff]
      %v432 = vld [vmem:[%s372 + $0x1d8] sm:$0xff]
      %v433 = vld [vmem:[%s372 + $0x1e0] sm:$0xff]
      %v434 = vld [vmem:[%s372 + $0x1e8] sm:$0xff]
      %v435 = vld [vmem:[%s372 + $0x1f0] sm:$0xff]
      %v436 = vld [vmem:[%s372 + $0x1f8] sm:$0xff]
      %v437 = vld [vmem:[%s372 + $0x200] sm:$0xff]
      %v438 = vld [vmem:[%s372 + $0x208] sm:$0xff]
      %v439 = vld [vmem:[%s372 + $0x210] sm:$0xff]
      %v440 = vld [vmem:[%s372 + $0x218] sm:$0xff]
      %v441 = vld [vmem:[%s372 + $0x220] sm:$0xff]
      %v442 = vld [vmem:[%s372 + $0x228] sm:$0xff]
      %v443 = vld [vmem:[%s372 + $0x230] sm:$0xff]
      %v444 = vld [vmem:[%s372 + $0x238] sm:$0xff]
      %v445 = vld [vmem:[%s372 + $0x240] sm:$0xff]
      %v446 = vld [vmem:[%s372 + $0x248] sm:$0xff]
      %v447 = vld [vmem:[%s372 + $0x250] sm:$0xff]
      %v448 = vld [vmem:[%s372 + $0x258] sm:$0xff]
      %v449 = vld [vmem:[%s372 + $0x260] sm:$0xff]
      %v450 = vld [vmem:[%s372 + $0x268] sm:$0xff]
      %v451 = vld [vmem:[%s372 + $0x270] sm:$0xff]
      %v452 = vld [vmem:[%s372 + $0x278] sm:$0xff]
      %v453 = vld [vmem:[%s372 + $0x280] sm:$0xff]
      %v454 = vld [vmem:[%s372 + $0x288] sm:$0xff]
      %v455 = vld [vmem:[%s372 + $0x290] sm:$0xff]
      %v456 = vld [vmem:[%s372 + $0x298] sm:$0xff]
      %v457 = vld [vmem:[%s372 + $0x2a0] sm:$0xff]
      %v458 = vld [vmem:[%s372 + $0x2a8] sm:$0xff]
      %v459 = vld [vmem:[%s372 + $0x2b0] sm:$0xff]
      %v460 = vld [vmem:[%s372 + $0x2b8] sm:$0xff]
      %v461 = vld [vmem:[%s372 + $0x2c0] sm:$0xff]
      %v462 = vld [vmem:[%s372 + $0x2c8] sm:$0xff]
      %v463 = vld [vmem:[%s372 + $0x2d0] sm:$0xff]
      %v464 = vld [vmem:[%s372 + $0x2d8] sm:$0xff]
      %v465 = vld [vmem:[%s372 + $0x2e0] sm:$0xff]
      %v466 = vld [vmem:[%s372 + $0x2e8] sm:$0xff]
      %v467 = vld [vmem:[%s372 + $0x2f0] sm:$0xff]
      %v468 = vld [vmem:[%s372 + $0x2f8] sm:$0xff]
      %v469 = vld [vmem:[%s372 + $0x300] sm:$0xff]
      %v470 = vld [vmem:[%s372 + $0x308] sm:$0xff]
      %v471 = vld [vmem:[%s372 + $0x310] sm:$0xff]
      %v472 = vld [vmem:[%s372 + $0x318] sm:$0xff]
      %v473 = vld [vmem:[%s372 + $0x320] sm:$0xff]
      %v474 = vld [vmem:[%s372 + $0x328] sm:$0xff]
      %v475 = vld [vmem:[%s372 + $0x330] sm:$0xff]
      %v476 = vld [vmem:[%s372 + $0x338] sm:$0xff]
      %v477 = vld [vmem:[%s372 + $0x340] sm:$0xff]
      %v478 = vld [vmem:[%s372 + $0x348] sm:$0xff]
      %v479 = vld [vmem:[%s372 + $0x350] sm:$0xff]
      %v480 = vld [vmem:[%s372 + $0x358] sm:$0xff]
      %v481 = vld [vmem:[%s372 + $0x360] sm:$0xff]
      %v482 = vld [vmem:[%s372 + $0x368] sm:$0xff]
      %v483 = vld [vmem:[%s372 + $0x370] sm:$0xff]
      %v484 = vld [vmem:[%s372 + $0x378] sm:$0xff]
      %v485 = vld [vmem:[%s372 + $0x380] sm:$0xff]
      %v486 = vld [vmem:[%s372 + $0x388] sm:$0xff]
      %v487 = vld [vmem:[%s372 + $0x390] sm:$0xff]
      %v488 = vld [vmem:[%s372 + $0x398] sm:$0xff]
      %v489 = vld [vmem:[%s372 + $0x3a0] sm:$0xff]
      %v490 = vld [vmem:[%s372 + $0x3a8] sm:$0xff]
      %v491 = vld [vmem:[%s372 + $0x3b0] sm:$0xff]
      %v492 = vld [vmem:[%s372 + $0x3b8] sm:$0xff]
      %v493 = vld [vmem:[%s372 + $0x3c0] sm:$0xff]
      %v494 = vld [vmem:[%s372 + $0x3c8] sm:$0xff]
      %v495 = vld [vmem:[%s372 + $0x3d0] sm:$0xff]
      %v496 = vld [vmem:[%s372 + $0x3d8] sm:$0xff]
      %v497 = vld [vmem:[%s372 + $0x3e0] sm:$0xff]
      %v498 = vld [vmem:[%s372 + $0x3e8] sm:$0xff]
      %v499 = vld [vmem:[%s372 + $0x3f0] sm:$0xff]
      %v500 = vld [vmem:[%s372 + $0x3f8] sm:$0xff]
      %v501 = vld [vmem:[%s372 + $0x400] sm:$0xff]
      %v502 = vld [vmem:[%s372 + $0x408] sm:$0xff]
      %v503 = vld [vmem:[%s372 + $0x410] sm:$0xff]
      %v504 = vld [vmem:[%s372 + $0x418] sm:$0xff]
      %v505 = vld [vmem:[%s372 + $0x420] sm:$0xff]
      %v506 = vld [vmem:[%s372 + $0x428] sm:$0xff]
      %v507 = vld [vmem:[%s372 + $0x430] sm:$0xff]
      %v508 = vld [vmem:[%s372 + $0x438] sm:$0xff]
      %v509 = vld [vmem:[%s372 + $0x440] sm:$0xff]
      %v510 = vld [vmem:[%s372 + $0x448] sm:$0xff]
      %v511 = vld [vmem:[%s372 + $0x450] sm:$0xff]
      %v512 = vld [vmem:[%s372 + $0x458] sm:$0xff]
      %v513 = vld [vmem:[%s372 + $0x460] sm:$0xff]
      %v514 = vld [vmem:[%s372 + $0x468] sm:$0xff]
      %v515 = vld [vmem:[%s372 + $0x470] sm:$0xff]
      %v516 = vld [vmem:[%s372 + $0x478] sm:$0xff]
      %v523 = vunpack.c.l.b16 %v366
      %v524 = vunpack.c.h.b16 %v366
      %v525 = vunpack.c.l.b16 %v367
      %v526 = vunpack.c.h.b16 %v367
      %v527 = vunpack.c.l.b16 %v368
      %v528 = vunpack.c.l.b16 %v369
      %v529 = vunpack.c.h.b16 %v369
      %v530 = vunpack.c.l.b16 %v370
      %v531 = vunpack.c.h.b16 %v370
      %v532 = vunpack.c.l.b16 %v371
      %v533 = vpack.c.b16 %v528, %v523
      %v534 = vpack.c.b16 %v529, %v524
      %v535 = vpack.c.b16 %v530, %v525
      %v536 = vpack.c.b16 %v531, %v526
      %v537 = vpack.c.b16 %v532, %v527
      %v538 = vrot.slane %v533, 1
      %v539 = vrot.slane %v534, 1
      %v540 = vrot.slane %v535, 1
      %v541 = vrot.slane %v536, 1
      %v542 = vrot.slane %v537, 1
      %v691 = vunpack.c.l.b16 %v373
      %v692 = vunpack.c.h.b16 %v373
      %v693 = vunpack.c.l.b16 %v374
      %v694 = vunpack.c.h.b16 %v374
      %v695 = vunpack.c.l.b16 %v375
      %v696 = vunpack.c.h.b16 %v375
      %v697 = vunpack.c.l.b16 %v376
      %v698 = vunpack.c.h.b16 %v376
      %v699 = vunpack.c.l.b16 %v377
      %v700 = vunpack.c.h.b16 %v377
      %v701 = vunpack.c.l.b16 %v378
      %v702 = vunpack.c.h.b16 %v378
      %v703 = vunpack.c.l.b16 %v379
      %v704 = vunpack.c.h.b16 %v379
      %v705 = vunpack.c.l.b16 %v380
      %v706 = vunpack.c.h.b16 %v380
      %v707 = vunpack.c.l.b16 %v381
      %v708 = vunpack.c.h.b16 %v381
      %v709 = vunpack.c.l.b16 %v382
      %v710 = vunpack.c.h.b16 %v382
      %v711 = vunpack.c.l.b16 %v383
      %v712 = vunpack.c.h.b16 %v383
      %v713 = vunpack.c.l.b16 %v384
      %v714 = vunpack.c.h.b16 %v384
      %v715 = vunpack.c.l.b16 %v385
      %v716 = vunpack.c.h.b16 %v385
      %v717 = vunpack.c.l.b16 %v386
      %v718 = vunpack.c.h.b16 %v386
      %v719 = vunpack.c.l.b16 %v387
      %v720 = vunpack.c.h.b16 %v387
      %v721 = vunpack.c.l.b16 %v388
      %v722 = vunpack.c.h.b16 %v388
      %v723 = vunpack.c.l.b16 %v389
      %v724 = vunpack.c.h.b16 %v389
      %v725 = vunpack.c.l.b16 %v390
      %v726 = vunpack.c.h.b16 %v390
      %v727 = vunpack.c.l.b16 %v391
      %v728 = vunpack.c.h.b16 %v391
      %v729 = vunpack.c.l.b16 %v392
      %v730 = vunpack.c.h.b16 %v392
      %v731 = vunpack.c.l.b16 %v393
      %v732 = vunpack.c.h.b16 %v393
      %v733 = vunpack.c.l.b16 %v394
      %v734 = vunpack.c.h.b16 %v394
      %v735 = vunpack.c.l.b16 %v395
      %v736 = vunpack.c.h.b16 %v395
      %v737 = vunpack.c.l.b16 %v396
      %v738 = vunpack.c.h.b16 %v396
      %v739 = vunpack.c.l.b16 %v397
      %v740 = vunpack.c.h.b16 %v397
      %v741 = vunpack.c.l.b16 %v398
      %v742 = vunpack.c.h.b16 %v398
      %v743 = vunpack.c.l.b16 %v399
      %v744 = vunpack.c.h.b16 %v399
      %v745 = vunpack.c.l.b16 %v400
      %v746 = vunpack.c.h.b16 %v400
      %v747 = vunpack.c.l.b16 %v401
      %v748 = vunpack.c.h.b16 %v401
      %v749 = vunpack.c.l.b16 %v402
      %v750 = vunpack.c.h.b16 %v402
      %v751 = vunpack.c.l.b16 %v403
      %v752 = vunpack.c.h.b16 %v403
      %v753 = vunpack.c.l.b16 %v404
      %v754 = vunpack.c.h.b16 %v404
      %v755 = vunpack.c.l.b16 %v405
      %v756 = vunpack.c.h.b16 %v405
      %v757 = vunpack.c.l.b16 %v406
      %v758 = vunpack.c.h.b16 %v406
      %v759 = vunpack.c.l.b16 %v407
      %v760 = vunpack.c.h.b16 %v407
      %v761 = vunpack.c.l.b16 %v408
      %v762 = vunpack.c.h.b16 %v408
      %v763 = vunpack.c.l.b16 %v409
      %v764 = vunpack.c.h.b16 %v409
      %v765 = vunpack.c.l.b16 %v410
      %v766 = vunpack.c.h.b16 %v410
      %v767 = vunpack.c.l.b16 %v411
      %v768 = vunpack.c.h.b16 %v411
      %v769 = vunpack.c.l.b16 %v412
      %v770 = vunpack.c.h.b16 %v412
      %v771 = vunpack.c.l.b16 %v413
      %v772 = vunpack.c.h.b16 %v413
      %v773 = vunpack.c.l.b16 %v414
      %v774 = vunpack.c.h.b16 %v414
      %v775 = vunpack.c.l.b16 %v415
      %v776 = vunpack.c.h.b16 %v415
      %v777 = vunpack.c.l.b16 %v416
      %v778 = vunpack.c.h.b16 %v416
      %v779 = vunpack.c.l.b16 %v417
      %v780 = vunpack.c.h.b16 %v417
      %v781 = vunpack.c.l.b16 %v418
      %v782 = vunpack.c.h.b16 %v418
      %v783 = vunpack.c.l.b16 %v419
      %v784 = vunpack.c.h.b16 %v419
      %v785 = vunpack.c.l.b16 %v420
      %v786 = vunpack.c.h.b16 %v420
      %v787 = vunpack.c.l.b16 %v421
      %v788 = vunpack.c.h.b16 %v421
      %v789 = vunpack.c.l.b16 %v422
      %v790 = vunpack.c.h.b16 %v422
      %v791 = vunpack.c.l.b16 %v423
      %v792 = vunpack.c.h.b16 %v423
      %v793 = vunpack.c.l.b16 %v424
      %v794 = vunpack.c.h.b16 %v424
      %v795 = vunpack.c.l.b16 %v425
      %v796 = vunpack.c.h.b16 %v425
      %v797 = vunpack.c.l.b16 %v426
      %v798 = vunpack.c.h.b16 %v426
      %v799 = vunpack.c.l.b16 %v427
      %v800 = vunpack.c.h.b16 %v427
      %v801 = vunpack.c.l.b16 %v428
      %v802 = vunpack.c.h.b16 %v428
      %v803 = vunpack.c.l.b16 %v429
      %v804 = vunpack.c.h.b16 %v429
      %v805 = vunpack.c.l.b16 %v430
      %v806 = vunpack.c.h.b16 %v430
      %v807 = vunpack.c.l.b16 %v431
      %v808 = vunpack.c.h.b16 %v431
      %v809 = vunpack.c.l.b16 %v432
      %v810 = vunpack.c.h.b16 %v432
      %v811 = vunpack.c.l.b16 %v433
      %v812 = vunpack.c.h.b16 %v433
      %v813 = vunpack.c.l.b16 %v434
      %v814 = vunpack.c.h.b16 %v434
      %v815 = vunpack.c.l.b16 %v435
      %v816 = vunpack.c.h.b16 %v435
      %v817 = vunpack.c.l.b16 %v436
      %v818 = vunpack.c.h.b16 %v436
      %v819 = vunpack.c.l.b16 %v437
      %v820 = vunpack.c.h.b16 %v437
      %v821 = vunpack.c.l.b16 %v438
      %v822 = vunpack.c.h.b16 %v438
      %v823 = vunpack.c.l.b16 %v439
      %v824 = vunpack.c.h.b16 %v439
      %v825 = vunpack.c.l.b16 %v440
      %v826 = vunpack.c.h.b16 %v440
      %v827 = vunpack.c.l.b16 %v441
      %v828 = vunpack.c.h.b16 %v441
      %v829 = vunpack.c.l.b16 %v442
      %v830 = vunpack.c.h.b16 %v442
      %v831 = vunpack.c.l.b16 %v443
      %v832 = vunpack.c.h.b16 %v443
      %v833 = vunpack.c.l.b16 %v444
      %v834 = vunpack.c.h.b16 %v444
      %v835 = vunpack.c.l.b16 %v445
      %v836 = vunpack.c.h.b16 %v445
      %v837 = vunpack.c.l.b16 %v446
      %v838 = vunpack.c.h.b16 %v446
      %v839 = vunpack.c.l.b16 %v447
      %v840 = vunpack.c.h.b16 %v447
      %v841 = vunpack.c.l.b16 %v448
      %v842 = vunpack.c.h.b16 %v448
      %v843 = vunpack.c.l.b16 %v449
      %v844 = vunpack.c.h.b16 %v449
      %v845 = vunpack.c.l.b16 %v450
      %v846 = vunpack.c.h.b16 %v450
      %v847 = vunpack.c.l.b16 %v451
      %v848 = vunpack.c.h.b16 %v451
      %v849 = vunpack.c.l.b16 %v452
      %v850 = vunpack.c.h.b16 %v452
      %v851 = vunpack.c.l.b16 %v453
      %v852 = vunpack.c.h.b16 %v453
      %v853 = vunpack.c.l.b16 %v454
      %v854 = vunpack.c.h.b16 %v454
      %v855 = vunpack.c.l.b16 %v455
      %v856 = vunpack.c.h.b16 %v455
      %v857 = vunpack.c.l.b16 %v456
      %v858 = vunpack.c.h.b16 %v456
      %v859 = vunpack.c.l.b16 %v457
      %v860 = vunpack.c.h.b16 %v457
      %v861 = vunpack.c.l.b16 %v458
      %v862 = vunpack.c.h.b16 %v458
      %v863 = vunpack.c.l.b16 %v459
      %v864 = vunpack.c.h.b16 %v459
      %v865 = vunpack.c.l.b16 %v460
      %v866 = vunpack.c.h.b16 %v460
      %v867 = vunpack.c.l.b16 %v461
      %v868 = vunpack.c.h.b16 %v461
      %v869 = vunpack.c.l.b16 %v462
      %v870 = vunpack.c.h.b16 %v462
      %v871 = vunpack.c.l.b16 %v463
      %v872 = vunpack.c.h.b16 %v463
      %v873 = vunpack.c.l.b16 %v464
      %v874 = vunpack.c.h.b16 %v464
      %v875 = vunpack.c.l.b16 %v465
      %v876 = vunpack.c.h.b16 %v465
      %v877 = vunpack.c.l.b16 %v466
      %v878 = vunpack.c.h.b16 %v466
      %v879 = vunpack.c.l.b16 %v467
      %v880 = vunpack.c.h.b16 %v467
      %v881 = vunpack.c.l.b16 %v468
      %v882 = vunpack.c.h.b16 %v468
      %v883 = vunpack.c.l.b16 %v469
      %v884 = vunpack.c.h.b16 %v469
      %v885 = vunpack.c.l.b16 %v470
      %v886 = vunpack.c.h.b16 %v470
      %v887 = vunpack.c.l.b16 %v471
      %v888 = vunpack.c.h.b16 %v471
      %v889 = vunpack.c.l.b16 %v472
      %v890 = vunpack.c.h.b16 %v472
      %v891 = vunpack.c.l.b16 %v473
      %v892 = vunpack.c.h.b16 %v473
      %v893 = vunpack.c.l.b16 %v474
      %v894 = vunpack.c.h.b16 %v474
      %v895 = vunpack.c.l.b16 %v475
      %v896 = vunpack.c.h.b16 %v475
      %v897 = vunpack.c.l.b16 %v476
      %v898 = vunpack.c.h.b16 %v476
      %v899 = vunpack.c.l.b16 %v477
      %v900 = vunpack.c.h.b16 %v477
      %v901 = vunpack.c.l.b16 %v478
      %v902 = vunpack.c.h.b16 %v478
      %v903 = vunpack.c.l.b16 %v479
      %v904 = vunpack.c.h.b16 %v479
      %v905 = vunpack.c.l.b16 %v480
      %v906 = vunpack.c.h.b16 %v480
      %v907 = vunpack.c.l.b16 %v481
      %v908 = vunpack.c.h.b16 %v481
      %v909 = vunpack.c.l.b16 %v482
      %v910 = vunpack.c.h.b16 %v482
      %v911 = vunpack.c.l.b16 %v483
      %v912 = vunpack.c.h.b16 %v483
      %v913 = vunpack.c.l.b16 %v484
      %v914 = vunpack.c.h.b16 %v484
      %v915 = vunpack.c.l.b16 %v485
      %v916 = vunpack.c.h.b16 %v485
      %v917 = vunpack.c.l.b16 %v486
      %v918 = vunpack.c.h.b16 %v486
      %v919 = vunpack.c.l.b16 %v487
      %v920 = vunpack.c.h.b16 %v487
      %v921 = vunpack.c.l.b16 %v488
      %v922 = vunpack.c.h.b16 %v488
      %v923 = vunpack.c.l.b16 %v489
      %v924 = vunpack.c.h.b16 %v489
      %v925 = vunpack.c.l.b16 %v490
      %v926 = vunpack.c.h.b16 %v490
      %v927 = vunpack.c.l.b16 %v491
      %v928 = vunpack.c.h.b16 %v491
      %v929 = vunpack.c.l.b16 %v492
      %v930 = vunpack.c.h.b16 %v492
      %v931 = vunpack.c.l.b16 %v493
      %v932 = vunpack.c.h.b16 %v493
      %v933 = vunpack.c.l.b16 %v494
      %v934 = vunpack.c.h.b16 %v494
      %v935 = vunpack.c.l.b16 %v495
      %v936 = vunpack.c.h.b16 %v495
      %v937 = vunpack.c.l.b16 %v496
      %v938 = vunpack.c.h.b16 %v496
      %v939 = vunpack.c.l.b16 %v497
      %v940 = vunpack.c.h.b16 %v497
      %v941 = vunpack.c.l.b16 %v498
      %v942 = vunpack.c.h.b16 %v498
      %v943 = vunpack.c.l.b16 %v499
      %v944 = vunpack.c.h.b16 %v499
      %v945 = vunpack.c.l.b16 %v500
      %v946 = vunpack.c.h.b16 %v500
      %v947 = vunpack.c.l.b16 %v501
      %v948 = vunpack.c.h.b16 %v501
      %v949 = vunpack.c.l.b16 %v502
      %v950 = vunpack.c.h.b16 %v502
      %v951 = vunpack.c.l.b16 %v503
      %v952 = vunpack.c.h.b16 %v503
      %v953 = vunpack.c.l.b16 %v504
      %v954 = vunpack.c.h.b16 %v504
      %v955 = vunpack.c.l.b16 %v505
      %v956 = vunpack.c.h.b16 %v505
      %v957 = vunpack.c.l.b16 %v506
      %v958 = vunpack.c.h.b16 %v506
      %v959 = vunpack.c.l.b16 %v507
      %v960 = vunpack.c.h.b16 %v507
      %v961 = vunpack.c.l.b16 %v508
      %v962 = vunpack.c.h.b16 %v508
      %v963 = vunpack.c.l.b16 %v509
      %v964 = vunpack.c.h.b16 %v509
      %v965 = vunpack.c.l.b16 %v510
      %v966 = vunpack.c.h.b16 %v510
      %v967 = vunpack.c.l.b16 %v511
      %v968 = vunpack.c.h.b16 %v511
      %v969 = vunpack.c.l.b16 %v512
      %v970 = vunpack.c.h.b16 %v512
      %v971 = vunpack.c.l.b16 %v513
      %v972 = vunpack.c.h.b16 %v513
      %v973 = vunpack.c.l.b16 %v514
      %v974 = vunpack.c.h.b16 %v514
      %v975 = vunpack.c.l.b16 %v515
      %v976 = vunpack.c.h.b16 %v515
      %v977 = vunpack.c.l.b16 %v516
      %v978 = vunpack.c.h.b16 %v516
      %v979 = vpack.c.b16 %v695, %v691
      %v980 = vpack.c.b16 %v696, %v692
      %v981 = vpack.c.b16 %v697, %v693
      %v982 = vpack.c.b16 %v698, %v694
      %v983 = vpack.c.b16 %v703, %v699
      %v984 = vpack.c.b16 %v704, %v700
      %v985 = vpack.c.b16 %v705, %v701
      %v986 = vpack.c.b16 %v706, %v702
      %v987 = vpack.c.b16 %v711, %v707
      %v988 = vpack.c.b16 %v712, %v708
      %v989 = vpack.c.b16 %v713, %v709
      %v990 = vpack.c.b16 %v714, %v710
      %v991 = vpack.c.b16 %v719, %v715
      %v992 = vpack.c.b16 %v720, %v716
      %v993 = vpack.c.b16 %v721, %v717
      %v994 = vpack.c.b16 %v722, %v718
      %v995 = vpack.c.b16 %v727, %v723
      %v996 = vpack.c.b16 %v728, %v724
      %v997 = vpack.c.b16 %v729, %v725
      %v998 = vpack.c.b16 %v730, %v726
      %v999 = vpack.c.b16 %v735, %v731
      %v1000 = vpack.c.b16 %v736, %v732
      %v1001 = vpack.c.b16 %v737, %v733
      %v1002 = vpack.c.b16 %v738, %v734
      %v1003 = vpack.c.b16 %v743, %v739
      %v1004 = vpack.c.b16 %v744, %v740
      %v1005 = vpack.c.b16 %v745, %v741
      %v1006 = vpack.c.b16 %v746, %v742
      %v1007 = vpack.c.b16 %v751, %v747
      %v1008 = vpack.c.b16 %v752, %v748
      %v1009 = vpack.c.b16 %v753, %v749
      %v1010 = vpack.c.b16 %v754, %v750
      %v1011 = vpack.c.b16 %v759, %v755
      %v1012 = vpack.c.b16 %v760, %v756
      %v1013 = vpack.c.b16 %v761, %v757
      %v1014 = vpack.c.b16 %v762, %v758
      %v1015 = vpack.c.b16 %v767, %v763
      %v1016 = vpack.c.b16 %v768, %v764
      %v1017 = vpack.c.b16 %v769, %v765
      %v1018 = vpack.c.b16 %v770, %v766
      %v1019 = vpack.c.b16 %v775, %v771
      %v1020 = vpack.c.b16 %v776, %v772
      %v1021 = vpack.c.b16 %v777, %v773
      %v1022 = vpack.c.b16 %v778, %v774
      %v1023 = vpack.c.b16 %v783, %v779
      %v1024 = vpack.c.b16 %v784, %v780
      %v1025 = vpack.c.b16 %v785, %v781
      %v1026 = vpack.c.b16 %v786, %v782
      %v1027 = vpack.c.b16 %v791, %v787
      %v1028 = vpack.c.b16 %v792, %v788
      %v1029 = vpack.c.b16 %v793, %v789
      %v1030 = vpack.c.b16 %v794, %v790
      %v1031 = vpack.c.b16 %v799, %v795
      %v1032 = vpack.c.b16 %v800, %v796
      %v1033 = vpack.c.b16 %v801, %v797
      %v1034 = vpack.c.b16 %v802, %v798
      %v1035 = vpack.c.b16 %v807, %v803
      %v1036 = vpack.c.b16 %v808, %v804
      %v1037 = vpack.c.b16 %v809, %v805
      %v1038 = vpack.c.b16 %v810, %v806
      %v1039 = vpack.c.b16 %v815, %v811
      %v1040 = vpack.c.b16 %v816, %v812
      %v1041 = vpack.c.b16 %v817, %v813
      %v1042 = vpack.c.b16 %v818, %v814
      %v1043 = vpack.c.b16 %v823, %v819
      %v1044 = vpack.c.b16 %v824, %v820
      %v1045 = vpack.c.b16 %v825, %v821
      %v1046 = vpack.c.b16 %v826, %v822
      %v1047 = vpack.c.b16 %v831, %v827
      %v1048 = vpack.c.b16 %v832, %v828
      %v1049 = vpack.c.b16 %v833, %v829
      %v1050 = vpack.c.b16 %v834, %v830
      %v1051 = vpack.c.b16 %v839, %v835
      %v1052 = vpack.c.b16 %v840, %v836
      %v1053 = vpack.c.b16 %v841, %v837
      %v1054 = vpack.c.b16 %v842, %v838
      %v1055 = vpack.c.b16 %v847, %v843
      %v1056 = vpack.c.b16 %v848, %v844
      %v1057 = vpack.c.b16 %v849, %v845
      %v1058 = vpack.c.b16 %v850, %v846
      %v1059 = vpack.c.b16 %v855, %v851
      %v1060 = vpack.c.b16 %v856, %v852
      %v1061 = vpack.c.b16 %v857, %v853
      %v1062 = vpack.c.b16 %v858, %v854
      %v1063 = vpack.c.b16 %v863, %v859
      %v1064 = vpack.c.b16 %v864, %v860
      %v1065 = vpack.c.b16 %v865, %v861
      %v1066 = vpack.c.b16 %v866, %v862
      %v1067 = vpack.c.b16 %v871, %v867
      %v1068 = vpack.c.b16 %v872, %v868
      %v1069 = vpack.c.b16 %v873, %v869
      %v1070 = vpack.c.b16 %v874, %v870
      %v1071 = vpack.c.b16 %v879, %v875
      %v1072 = vpack.c.b16 %v880, %v876
      %v1073 = vpack.c.b16 %v881, %v877
      %v1074 = vpack.c.b16 %v882, %v878
      %v1075 = vpack.c.b16 %v887, %v883
      %v1076 = vpack.c.b16 %v888, %v884
      %v1077 = vpack.c.b16 %v889, %v885
      %v1078 = vpack.c.b16 %v890, %v886
      %v1079 = vpack.c.b16 %v895, %v891
      %v1080 = vpack.c.b16 %v896, %v892
      %v1081 = vpack.c.b16 %v897, %v893
      %v1082 = vpack.c.b16 %v898, %v894
      %v1083 = vpack.c.b16 %v903, %v899
      %v1084 = vpack.c.b16 %v904, %v900
      %v1085 = vpack.c.b16 %v905, %v901
      %v1086 = vpack.c.b16 %v906, %v902
      %v1087 = vpack.c.b16 %v911, %v907
      %v1088 = vpack.c.b16 %v912, %v908
      %v1089 = vpack.c.b16 %v913, %v909
      %v1090 = vpack.c.b16 %v914, %v910
      %v1091 = vpack.c.b16 %v919, %v915
      %v1092 = vpack.c.b16 %v920, %v916
      %v1093 = vpack.c.b16 %v921, %v917
      %v1094 = vpack.c.b16 %v922, %v918
      %v1095 = vpack.c.b16 %v927, %v923
      %v1096 = vpack.c.b16 %v928, %v924
      %v1097 = vpack.c.b16 %v929, %v925
      %v1098 = vpack.c.b16 %v930, %v926
      %v1099 = vpack.c.b16 %v935, %v931
      %v1100 = vpack.c.b16 %v936, %v932
      %v1101 = vpack.c.b16 %v937, %v933
      %v1102 = vpack.c.b16 %v938, %v934
      %v1103 = vpack.c.b16 %v943, %v939
      %v1104 = vpack.c.b16 %v944, %v940
      %v1105 = vpack.c.b16 %v945, %v941
      %v1106 = vpack.c.b16 %v946, %v942
      %v1107 = vpack.c.b16 %v951, %v947
      %v1108 = vpack.c.b16 %v952, %v948
      %v1109 = vpack.c.b16 %v953, %v949
      %v1110 = vpack.c.b16 %v954, %v950
      %v1111 = vpack.c.b16 %v959, %v955
      %v1112 = vpack.c.b16 %v960, %v956
      %v1113 = vpack.c.b16 %v961, %v957
      %v1114 = vpack.c.b16 %v962, %v958
      %v1115 = vpack.c.b16 %v967, %v963
      %v1116 = vpack.c.b16 %v968, %v964
      %v1117 = vpack.c.b16 %v969, %v965
      %v1118 = vpack.c.b16 %v970, %v966
      %v1119 = vpack.c.b16 %v975, %v971
      %v1120 = vpack.c.b16 %v976, %v972
      %v1121 = vpack.c.b16 %v977, %v973
      %v1122 = vpack.c.b16 %v978, %v974
      %vm1267 = vcmask 523264
      %v1269 = vsel %vm1267, %v542, 0
      %1271 = vmatprep.subr.bf16.mxu0 %v980
      %1272 = vmatpush1.bf16.msra.mxu0 %v979
      %1273 = vmatprep.subr.bf16.mxu0 %v984
      %1274 = vmatpush1.bf16.msra.mxu0 %v983
      %1275 = vmatprep.subr.bf16.mxu0 %v988
      %1276 = vmatpush1.bf16.msra.mxu0 %v987
      %1277 = vmatprep.subr.bf16.mxu0 %v992
      %1278 = vmatpush1.bf16.msra.mxu0 %v991
      %1279 = vmatprep.subr.bf16.mxu0 %v996
      %1280 = vmatpush1.bf16.msra.mxu0 %v995
      %1281 = vmatprep.subr.bf16.mxu0 %v1000
      %1282 = vmatpush1.bf16.msra.mxu0 %v999
      %1283 = vmatprep.subr.bf16.mxu0 %v1004
      %1284 = vmatpush1.bf16.msra.mxu0 %v1003
      %1285 = vmatprep.subr.bf16.mxu0 %v1008
      %1286 = vmatpush1.bf16.msra.mxu0 %v1007
      %1287 = vmatprep.subr.bf16.mxu0 %v1012
      %1288 = vmatpush1.bf16.msra.mxu0 %v1011
      %1289 = vmatprep.subr.bf16.mxu0 %v1016
      %1290 = vmatpush1.bf16.msra.mxu0 %v1015
      %1291 = vmatprep.subr.bf16.mxu0 %v1020
      %1292 = vmatpush1.bf16.msra.mxu0 %v1019
      %1293 = vmatprep.subr.bf16.mxu0 %v1024
      %1294 = vmatpush1.bf16.msra.mxu0 %v1023
      %1295 = vmatprep.subr.bf16.mxu0 %v1028
      %1296 = vmatpush1.bf16.msra.mxu0 %v1027
      %1297 = vmatprep.subr.bf16.mxu0 %v1032
      %1298 = vmatpush1.bf16.msra.mxu0 %v1031
      %1299 = vmatprep.subr.bf16.mxu0 %v1036
      %1300 = vmatpush1.bf16.msra.mxu0 %v1035
      %1301 = vmatprep.subr.bf16.mxu0 %v1040
      %1302 = vmatpush1.bf16.msra.mxu0 %v1039
      %1303 = vmatprep.mubr.bf16.mxu0 %v539
      %1304 = vmatmul.mubr.bf16.gmra.mrb[0].mxu0 %v538
      %v1305 = vpop.f32.mrb[0].mxu0
      %v1306 = vadd.f32 0.0, %v1305
      %v1307 = vpop.f32.mrb[0].mxu0
      %v1308 = vadd.f32 0.0, %v1307
      %v1309 = vpop.f32.mrb[0].mxu0
      %v1310 = vpop.f32.mrb[0].mxu0
      %1311 = vdwg.mxu0
      %1312 = vmatprep.subr.bf16.mxu0 %v1044
      %1313 = vmatpush1.bf16.msra.mxu0 %v1043
      %1314 = vmatprep.subr.bf16.mxu0 %v1048
      %1315 = vmatpush1.bf16.msra.mxu0 %v1047
      %1316 = vmatprep.subr.bf16.mxu0 %v1052
      %1317 = vmatpush1.bf16.msra.mxu0 %v1051
      %1318 = vmatprep.subr.bf16.mxu0 %v1056
      %1319 = vmatpush1.bf16.msra.mxu0 %v1055
      %1320 = vmatprep.subr.bf16.mxu0 %v1060
      %1321 = vmatpush1.bf16.msra.mxu0 %v1059
      %1322 = vmatprep.subr.bf16.mxu0 %v1064
      %1323 = vmatpush1.bf16.msra.mxu0 %v1063
      %1324 = vmatprep.subr.bf16.mxu0 %v1068
      %1325 = vmatpush1.bf16.msra.mxu0 %v1067
      %1326 = vmatprep.subr.bf16.mxu0 %v1072
      %1327 = vmatpush1.bf16.msra.mxu0 %v1071
      %1328 = vmatprep.subr.bf16.mxu0 %v1076
      %1329 = vmatpush1.bf16.msra.mxu0 %v1075
      %1330 = vmatprep.subr.bf16.mxu0 %v1080
      %1331 = vmatpush1.bf16.msra.mxu0 %v1079
      %1332 = vmatprep.subr.bf16.mxu0 %v1084
      %1333 = vmatpush1.bf16.msra.mxu0 %v1083
      %1334 = vmatprep.subr.bf16.mxu0 %v1088
      %1335 = vmatpush1.bf16.msra.mxu0 %v1087
      %1336 = vmatprep.subr.bf16.mxu0 %v1092
      %1337 = vmatpush1.bf16.msra.mxu0 %v1091
      %1338 = vmatprep.subr.bf16.mxu0 %v1096
      %1339 = vmatpush1.bf16.msra.mxu0 %v1095
      %1340 = vmatprep.subr.bf16.mxu0 %v1100
      %1341 = vmatpush1.bf16.msra.mxu0 %v1099
      %1342 = vmatprep.subr.bf16.mxu0 %v1104
      %1343 = vmatpush1.bf16.msra.mxu0 %v1103
      %1344 = vmatprep.mubr.bf16.mxu0 %v541
      %1345 = vmatmul.mubr.bf16.gmra.mrb[0].mxu0 %v540
      %v1346 = vpop.f32.mrb[0].mxu0
      %v1347 = vadd.f32 %v1306, %v1346
      %v1348 = vpop.f32.mrb[0].mxu0
      %v1349 = vadd.f32 %v1308, %v1348
      %v1350 = vpop.f32.mrb[0].mxu0
      %v1351 = vpop.f32.mrb[0].mxu0
      %1352 = vdwg.mxu0
      %1353 = vmatprep.subr.bf16.mxu0 %v1108
      %1354 = vmatpush1.bf16.msra.mxu0 %v1107
      %1355 = vmatprep.subr.bf16.mxu0 %v1112
      %1356 = vmatpush1.bf16.msra.mxu0 %v1111
      %1357 = vmatprep.subr.bf16.mxu0 %v1116
      %1358 = vmatpush1.bf16.msra.mxu0 %v1115
      %1359 = vmatprep.subr.bf16.mxu0 %v1120
      %1360 = vmatpush1.bf16.msra.mxu0 %v1119
      %1361 = vmatprep.subr.bf16.mxu0 0
      %1362 = vmatpush1.bf16.msra.mxu0 0
      %1363 = vmatprep.subr.bf16.mxu0 0
      %1364 = vmatpush1.bf16.msra.mxu0 0
      %1365 = vmatprep.subr.bf16.mxu0 0
      %1366 = vmatpush1.bf16.msra.mxu0 0
      %1367 = vmatprep.subr.bf16.mxu0 0
      %1368 = vmatpush1.bf16.msra.mxu0 0
      %1369 = vmatprep.subr.bf16.mxu0 0
      %1370 = vmatpush1.bf16.msra.mxu0 0
      %1371 = vmatprep.subr.bf16.mxu0 0
      %1372 = vmatpush1.bf16.msra.mxu0 0
      %1373 = vmatprep.subr.bf16.mxu0 0
      %1374 = vmatpush1.bf16.msra.mxu0 0
      %1375 = vmatprep.subr.bf16.mxu0 0
      %1376 = vmatpush1.bf16.msra.mxu0 0
      %1377 = vmatprep.subr.bf16.mxu0 0
      %1378 = vmatpush1.bf16.msra.mxu0 0
      %1379 = vmatprep.subr.bf16.mxu0 0
      %1380 = vmatpush1.bf16.msra.mxu0 0
      %1381 = vmatprep.subr.bf16.mxu0 0
      %1382 = vmatpush1.bf16.msra.mxu0 0
      %1383 = vmatprep.subr.bf16.mxu0 0
      %1384 = vmatpush1.bf16.msra.mxu0 0
      %1385 = vmatprep.mubr.bf16.mxu0 0
      %1386 = vmatmul.mubr.bf16.gmra.mrb[0].mxu0 %v1269
      %v1387 = vpop.f32.mrb[0].mxu0
      %v1388 = vadd.f32 %v1347, %v1387
      %v1389 = vpop.f32.mrb[0].mxu0
      %v1390 = vadd.f32 %v1349, %v1389
      %v1391 = vpop.f32.mrb[0].mxu0
      %v1392 = vpop.f32.mrb[0].mxu0
      %1393 = vdwg.mxu0
      %1394 = vmatprep.subr.bf16.mxu0 %v982
      %1395 = vmatpush1.bf16.msra.mxu0 %v981
      %1396 = vmatprep.subr.bf16.mxu0 %v986
      %1397 = vmatpush1.bf16.msra.mxu0 %v985
      %1398 = vmatprep.subr.bf16.mxu0 %v990
      %1399 = vmatpush1.bf16.msra.mxu0 %v989
      %1400 = vmatprep.subr.bf16.mxu0 %v994
      %1401 = vmatpush1.bf16.msra.mxu0 %v993
      %1402 = vmatprep.subr.bf16.mxu0 %v998
      %1403 = vmatpush1.bf16.msra.mxu0 %v997
      %1404 = vmatprep.subr.bf16.mxu0 %v1002
      %1405 = vmatpush1.bf16.msra.mxu0 %v1001
      %1406 = vmatprep.subr.bf16.mxu0 %v1006
      %1407 = vmatpush1.bf16.msra.mxu0 %v1005
      %1408 = vmatprep.subr.bf16.mxu0 %v1010
      %1409 = vmatpush1.bf16.msra.mxu0 %v1009
      %1410 = vmatprep.subr.bf16.mxu0 %v1014
      %1411 = vmatpush1.bf16.msra.mxu0 %v1013
      %1412 = vmatprep.subr.bf16.mxu0 %v1018
      %1413 = vmatpush1.bf16.msra.mxu0 %v1017
      %1414 = vmatprep.subr.bf16.mxu0 %v1022
      %1415 = vmatpush1.bf16.msra.mxu0 %v1021
      %1416 = vmatprep.subr.bf16.mxu0 %v1026
      %1417 = vmatpush1.bf16.msra.mxu0 %v1025
      %1418 = vmatprep.subr.bf16.mxu0 %v1030
      %1419 = vmatpush1.bf16.msra.mxu0 %v1029
      %1420 = vmatprep.subr.bf16.mxu0 %v1034
      %1421 = vmatpush1.bf16.msra.mxu0 %v1033
      %1422 = vmatprep.subr.bf16.mxu0 %v1038
      %1423 = vmatpush1.bf16.msra.mxu0 %v1037
      %1424 = vmatprep.subr.bf16.mxu0 %v1042
      %1425 = vmatpush1.bf16.msra.mxu0 %v1041
      %1426 = vmatprep.mubr.bf16.mxu0 %v539
      %1427 = vmatmul.mubr.bf16.gmra.mrb[0].mxu0 %v538
      %v1428 = vpop.f32.mrb[0].mxu0
      %v1429 = vadd.f32 0.0, %v1428
      %v1430 = vpop.f32.mrb[0].mxu0
      %v1431 = vadd.f32 0.0, %v1430
      %v1432 = vpop.f32.mrb[0].mxu0
      %v1433 = vpop.f32.mrb[0].mxu0
      %1434 = vdwg.mxu0
      %1435 = vmatprep.subr.bf16.mxu0 %v1046
      %1436 = vmatpush1.bf16.msra.mxu0 %v1045
      %1437 = vmatprep.subr.bf16.mxu0 %v1050
      %1438 = vmatpush1.bf16.msra.mxu0 %v1049
      %1439 = vmatprep.subr.bf16.mxu0 %v1054
      %1440 = vmatpush1.bf16.msra.mxu0 %v1053
      %1441 = vmatprep.subr.bf16.mxu0 %v1058
      %1442 = vmatpush1.bf16.msra.mxu0 %v1057
      %1443 = vmatprep.subr.bf16.mxu0 %v1062
      %1444 = vmatpush1.bf16.msra.mxu0 %v1061
      %1445 = vmatprep.subr.bf16.mxu0 %v1066
      %1446 = vmatpush1.bf16.msra.mxu0 %v1065
      %1447 = vmatprep.subr.bf16.mxu0 %v1070
      %1448 = vmatpush1.bf16.msra.mxu0 %v1069
      %1449 = vmatprep.subr.bf16.mxu0 %v1074
      %1450 = vmatpush1.bf16.msra.mxu0 %v1073
      %1451 = vmatprep.subr.bf16.mxu0 %v1078
      %1452 = vmatpush1.bf16.msra.mxu0 %v1077
      %1453 = vmatprep.subr.bf16.mxu0 %v1082
      %1454 = vmatpush1.bf16.msra.mxu0 %v1081
      %1455 = vmatprep.subr.bf16.mxu0 %v1086
      %1456 = vmatpush1.bf16.msra.mxu0 %v1085
      %1457 = vmatprep.subr.bf16.mxu0 %v1090
      %1458 = vmatpush1.bf16.msra.mxu0 %v1089
      %1459 = vmatprep.subr.bf16.mxu0 %v1094
      %1460 = vmatpush1.bf16.msra.mxu0 %v1093
      %1461 = vmatprep.subr.bf16.mxu0 %v1098
      %1462 = vmatpush1.bf16.msra.mxu0 %v1097
      %1463 = vmatprep.subr.bf16.mxu0 %v1102
      %1464 = vmatpush1.bf16.msra.mxu0 %v1101
      %1465 = vmatprep.subr.bf16.mxu0 %v1106
      %1466 = vmatpush1.bf16.msra.mxu0 %v1105
      %1467 = vmatprep.mubr.bf16.mxu0 %v541
      %1468 = vmatmul.mubr.bf16.gmra.mrb[0].mxu0 %v540
      %v1469 = vpop.f32.mrb[0].mxu0
      %v1470 = vadd.f32 %v1429, %v1469
      %v1471 = vpop.f32.mrb[0].mxu0
      %v1472 = vadd.f32 %v1431, %v1471
      %v1473 = vpop.f32.mrb[0].mxu0
      %v1474 = vpop.f32.mrb[0].mxu0
      %1475 = vdwg.mxu0
      %1476 = vmatprep.subr.bf16.mxu0 %v1110
      %1477 = vmatpush1.bf16.msra.mxu0 %v1109
      %1478 = vmatprep.subr.bf16.mxu0 %v1114
      %1479 = vmatpush1.bf16.msra.mxu0 %v1113
      %1480 = vmatprep.subr.bf16.mxu0 %v1118
      %1481 = vmatpush1.bf16.msra.mxu0 %v1117
      %1482 = vmatprep.subr.bf16.mxu0 %v1122
      %1483 = vmatpush1.bf16.msra.mxu0 %v1121
      %1484 = vmatprep.subr.bf16.mxu0 0
      %1485 = vmatpush1.bf16.msra.mxu0 0
      %1486 = vmatprep.subr.bf16.mxu0 0
      %1487 = vmatpush1.bf16.msra.mxu0 0
      %1488 = vmatprep.subr.bf16.mxu0 0
      %1489 = vmatpush1.bf16.msra.mxu0 0
      %1490 = vmatprep.subr.bf16.mxu0 0
      %1491 = vmatpush1.bf16.msra.mxu0 0
      %1492 = vmatprep.subr.bf16.mxu0 0
      %1493 = vmatpush1.bf16.msra.mxu0 0
      %1494 = vmatprep.subr.bf16.mxu0 0
      %1495 = vmatpush1.bf16.msra.mxu0 0
      %1496 = vmatprep.subr.bf16.mxu0 0
      %1497 = vmatpush1.bf16.msra.mxu0 0
      %1498 = vmatprep.subr.bf16.mxu0 0
      %1499 = vmatpush1.bf16.msra.mxu0 0
      %1500 = vmatprep.subr.bf16.mxu0 0
      %1501 = vmatpush1.bf16.msra.mxu0 0
      %1502 = vmatprep.subr.bf16.mxu0 0
      %1503 = vmatpush1.bf16.msra.mxu0 0
      %1504 = vmatprep.subr.bf16.mxu0 0
      %1505 = vmatpush1.bf16.msra.mxu0 0
      %1506 = vmatprep.subr.bf16.mxu0 0
      %1507 = vmatpush1.bf16.msra.mxu0 0
      %1508 = vmatprep.mubr.bf16.mxu0 0
      %1509 = vmatmul.mubr.bf16.gmra.mrb[0].mxu0 %v1269
      %v1510 = vpop.f32.mrb[0].mxu0
      %v1511 = vadd.f32 %v1470, %v1510
      %v1512 = vpop.f32.mrb[0].mxu0
      %v1513 = vadd.f32 %v1472, %v1512
      %v1514 = vpop.f32.mrb[0].mxu0
      %v1515 = vpop.f32.mrb[0].mxu0
      %1516 = vdwg.mxu0
      %v1520 = vunpack.c.l.b16 %v219
      %v1521 = vunpack.c.h.b16 %v219
      %v1522 = vunpack.c.l.b16 %v220
      %v1523 = vunpack.c.h.b16 %v220
      %v1524 = vunpack.c.l.b16 %v221
      %v1525 = vpack.c.b16 %v1520, %v1520
      %v1526 = vpack.c.b16 %v1521, %v1521
      %v1527 = vpack.c.b16 %v1522, %v1522
      %v1528 = vpack.c.b16 %v1523, %v1523
      %v1529 = vpack.c.b16 %v1524, %v1524
      %v1678 = vunpack.c.l.b16 %v222
      %v1679 = vunpack.c.h.b16 %v222
      %v1680 = vunpack.c.l.b16 %v223
      %v1681 = vunpack.c.h.b16 %v223
      %v1682 = vunpack.c.l.b16 %v224
      %v1683 = vunpack.c.h.b16 %v224
      %v1684 = vunpack.c.l.b16 %v225
      %v1685 = vunpack.c.h.b16 %v225
      %v1686 = vunpack.c.l.b16 %v226
      %v1687 = vunpack.c.h.b16 %v226
      %v1688 = vunpack.c.l.b16 %v227
      %v1689 = vunpack.c.h.b16 %v227
      %v1690 = vunpack.c.l.b16 %v228
      %v1691 = vunpack.c.h.b16 %v228
      %v1692 = vunpack.c.l.b16 %v229
      %v1693 = vunpack.c.h.b16 %v229
      %v1694 = vunpack.c.l.b16 %v230
      %v1695 = vunpack.c.h.b16 %v230
      %v1696 = vunpack.c.l.b16 %v231
      %v1697 = vunpack.c.h.b16 %v231
      %v1698 = vunpack.c.l.b16 %v232
      %v1699 = vunpack.c.h.b16 %v232
      %v1700 = vunpack.c.l.b16 %v233
      %v1701 = vunpack.c.h.b16 %v233
      %v1702 = vunpack.c.l.b16 %v234
      %v1703 = vunpack.c.h.b16 %v234
      %v1704 = vunpack.c.l.b16 %v235
      %v1705 = vunpack.c.h.b16 %v235
      %v1706 = vunpack.c.l.b16 %v236
      %v1707 = vunpack.c.h.b16 %v236
      %v1708 = vunpack.c.l.b16 %v237
      %v1709 = vunpack.c.h.b16 %v237
      %v1710 = vunpack.c.l.b16 %v238
      %v1711 = vunpack.c.h.b16 %v238
      %v1712 = vunpack.c.l.b16 %v239
      %v1713 = vunpack.c.h.b16 %v239
      %v1714 = vunpack.c.l.b16 %v240
      %v1715 = vunpack.c.h.b16 %v240
      %v1716 = vunpack.c.l.b16 %v241
      %v1717 = vunpack.c.h.b16 %v241
      %v1718 = vunpack.c.l.b16 %v242
      %v1719 = vunpack.c.h.b16 %v242
      %v1720 = vunpack.c.l.b16 %v243
      %v1721 = vunpack.c.h.b16 %v243
      %v1722 = vunpack.c.l.b16 %v244
      %v1723 = vunpack.c.h.b16 %v244
      %v1724 = vunpack.c.l.b16 %v245
      %v1725 = vunpack.c.h.b16 %v245
      %v1726 = vunpack.c.l.b16 %v246
      %v1727 = vunpack.c.h.b16 %v246
      %v1728 = vunpack.c.l.b16 %v247
      %v1729 = vunpack.c.h.b16 %v247
      %v1730 = vunpack.c.l.b16 %v248
      %v1731 = vunpack.c.h.b16 %v248
      %v1732 = vunpack.c.l.b16 %v249
      %v1733 = vunpack.c.h.b16 %v249
      %v1734 = vunpack.c.l.b16 %v250
      %v1735 = vunpack.c.h.b16 %v250
      %v1736 = vunpack.c.l.b16 %v251
      %v1737 = vunpack.c.h.b16 %v251
      %v1738 = vunpack.c.l.b16 %v252
      %v1739 = vunpack.c.h.b16 %v252
      %v1740 = vunpack.c.l.b16 %v253
      %v1741 = vunpack.c.h.b16 %v253
      %v1742 = vunpack.c.l.b16 %v254
      %v1743 = vunpack.c.h.b16 %v254
      %v1744 = vunpack.c.l.b16 %v255
      %v1745 = vunpack.c.h.b16 %v255
      %v1746 = vunpack.c.l.b16 %v256
      %v1747 = vunpack.c.h.b16 %v256
      %v1748 = vunpack.c.l.b16 %v257
      %v1749 = vunpack.c.h.b16 %v257
      %v1750 = vunpack.c.l.b16 %v258
      %v1751 = vunpack.c.h.b16 %v258
      %v1752 = vunpack.c.l.b16 %v259
      %v1753 = vunpack.c.h.b16 %v259
      %v1754 = vunpack.c.l.b16 %v260
      %v1755 = vunpack.c.h.b16 %v260
      %v1756 = vunpack.c.l.b16 %v261
      %v1757 = vunpack.c.h.b16 %v261
      %v1758 = vunpack.c.l.b16 %v262
      %v1759 = vunpack.c.h.b16 %v262
      %v1760 = vunpack.c.l.b16 %v263
      %v1761 = vunpack.c.h.b16 %v263
      %v1762 = vunpack.c.l.b16 %v264
      %v1763 = vunpack.c.h.b16 %v264
      %v1764 = vunpack.c.l.b16 %v265
      %v1765 = vunpack.c.h.b16 %v265
      %v1766 = vunpack.c.l.b16 %v266
      %v1767 = vunpack.c.h.b16 %v266
      %v1768 = vunpack.c.l.b16 %v267
      %v1769 = vunpack.c.h.b16 %v267
      %v1770 = vunpack.c.l.b16 %v268
      %v1771 = vunpack.c.h.b16 %v268
      %v1772 = vunpack.c.l.b16 %v269
      %v1773 = vunpack.c.h.b16 %v269
      %v1774 = vunpack.c.l.b16 %v270
      %v1775 = vunpack.c.h.b16 %v270
      %v1776 = vunpack.c.l.b16 %v271
      %v1777 = vunpack.c.h.b16 %v271
      %v1778 = vunpack.c.l.b16 %v272
      %v1779 = vunpack.c.h.b16 %v272
      %v1780 = vunpack.c.l.b16 %v273
      %v1781 = vunpack.c.h.b16 %v273
      %v1782 = vunpack.c.l.b16 %v274
      %v1783 = vunpack.c.h.b16 %v274
      %v1784 = vunpack.c.l.b16 %v275
      %v1785 = vunpack.c.h.b16 %v275
      %v1786 = vunpack.c.l.b16 %v276
      %v1787 = vunpack.c.h.b16 %v276
      %v1788 = vunpack.c.l.b16 %v277
      %v1789 = vunpack.c.h.b16 %v277
      %v1790 = vunpack.c.l.b16 %v278
      %v1791 = vunpack.c.h.b16 %v278
      %v1792 = vunpack.c.l.b16 %v279
      %v1793 = vunpack.c.h.b16 %v279
      %v1794 = vunpack.c.l.b16 %v280
      %v1795 = vunpack.c.h.b16 %v280
      %v1796 = vunpack.c.l.b16 %v281
      %v1797 = vunpack.c.h.b16 %v281
      %v1798 = vunpack.c.l.b16 %v282
      %v1799 = vunpack.c.h.b16 %v282
      %v1800 = vunpack.c.l.b16 %v283
      %v1801 = vunpack.c.h.b16 %v283
      %v1802 = vunpack.c.l.b16 %v284
      %v1803 = vunpack.c.h.b16 %v284
      %v1804 = vunpack.c.l.b16 %v285
      %v1805 = vunpack.c.h.b16 %v285
      %v1806 = vunpack.c.l.b16 %v286
      %v1807 = vunpack.c.h.b16 %v286
      %v1808 = vunpack.c.l.b16 %v287
      %v1809 = vunpack.c.h.b16 %v287
      %v1810 = vunpack.c.l.b16 %v288
      %v1811 = vunpack.c.h.b16 %v288
      %v1812 = vunpack.c.l.b16 %v289
      %v1813 = vunpack.c.h.b16 %v289
      %v1814 = vunpack.c.l.b16 %v290
      %v1815 = vunpack.c.h.b16 %v290
      %v1816 = vunpack.c.l.b16 %v291
      %v1817 = vunpack.c.h.b16 %v291
      %v1818 = vunpack.c.l.b16 %v292
      %v1819 = vunpack.c.h.b16 %v292
      %v1820 = vunpack.c.l.b16 %v293
      %v1821 = vunpack.c.h.b16 %v293
      %v1822 = vunpack.c.l.b16 %v294
      %v1823 = vunpack.c.h.b16 %v294
      %v1824 = vunpack.c.l.b16 %v295
      %v1825 = vunpack.c.h.b16 %v295
      %v1826 = vunpack.c.l.b16 %v296
      %v1827 = vunpack.c.h.b16 %v296
      %v1828 = vunpack.c.l.b16 %v297
      %v1829 = vunpack.c.h.b16 %v297
      %v1830 = vunpack.c.l.b16 %v298
      %v1831 = vunpack.c.h.b16 %v298
      %v1832 = vunpack.c.l.b16 %v299
      %v1833 = vunpack.c.h.b16 %v299
      %v1834 = vunpack.c.l.b16 %v300
      %v1835 = vunpack.c.h.b16 %v300
      %v1836 = vunpack.c.l.b16 %v301
      %v1837 = vunpack.c.h.b16 %v301
      %v1838 = vunpack.c.l.b16 %v302
      %v1839 = vunpack.c.h.b16 %v302
      %v1840 = vunpack.c.l.b16 %v303
      %v1841 = vunpack.c.h.b16 %v303
      %v1842 = vunpack.c.l.b16 %v304
      %v1843 = vunpack.c.h.b16 %v304
      %v1844 = vunpack.c.l.b16 %v305
      %v1845 = vunpack.c.h.b16 %v305
      %v1846 = vunpack.c.l.b16 %v306
      %v1847 = vunpack.c.h.b16 %v306
      %v1848 = vunpack.c.l.b16 %v307
      %v1849 = vunpack.c.h.b16 %v307
      %v1850 = vunpack.c.l.b16 %v308
      %v1851 = vunpack.c.h.b16 %v308
      %v1852 = vunpack.c.l.b16 %v309
      %v1853 = vunpack.c.h.b16 %v309
      %v1854 = vunpack.c.l.b16 %v310
      %v1855 = vunpack.c.h.b16 %v310
      %v1856 = vunpack.c.l.b16 %v311
      %v1857 = vunpack.c.h.b16 %v311
      %v1858 = vunpack.c.l.b16 %v312
      %v1859 = vunpack.c.h.b16 %v312
      %v1860 = vunpack.c.l.b16 %v313
      %v1861 = vunpack.c.h.b16 %v313
      %v1862 = vunpack.c.l.b16 %v314
      %v1863 = vunpack.c.h.b16 %v314
      %v1864 = vunpack.c.l.b16 %v315
      %v1865 = vunpack.c.h.b16 %v315
      %v1866 = vunpack.c.l.b16 %v316
      %v1867 = vunpack.c.h.b16 %v316
      %v1868 = vunpack.c.l.b16 %v317
      %v1869 = vunpack.c.h.b16 %v317
      %v1870 = vunpack.c.l.b16 %v318
      %v1871 = vunpack.c.h.b16 %v318
      %v1872 = vunpack.c.l.b16 %v319
      %v1873 = vunpack.c.h.b16 %v319
      %v1874 = vunpack.c.l.b16 %v320
      %v1875 = vunpack.c.h.b16 %v320
      %v1876 = vunpack.c.l.b16 %v321
      %v1877 = vunpack.c.h.b16 %v321
      %v1878 = vunpack.c.l.b16 %v322
      %v1879 = vunpack.c.h.b16 %v322
      %v1880 = vunpack.c.l.b16 %v323
      %v1881 = vunpack.c.h.b16 %v323
      %v1882 = vunpack.c.l.b16 %v324
      %v1883 = vunpack.c.h.b16 %v324
      %v1884 = vunpack.c.l.b16 %v325
      %v1885 = vunpack.c.h.b16 %v325
      %v1886 = vunpack.c.l.b16 %v326
      %v1887 = vunpack.c.h.b16 %v326
      %v1888 = vunpack.c.l.b16 %v327
      %v1889 = vunpack.c.h.b16 %v327
      %v1890 = vunpack.c.l.b16 %v328
      %v1891 = vunpack.c.h.b16 %v328
      %v1892 = vunpack.c.l.b16 %v329
      %v1893 = vunpack.c.h.b16 %v329
      %v1894 = vunpack.c.l.b16 %v330
      %v1895 = vunpack.c.h.b16 %v330
      %v1896 = vunpack.c.l.b16 %v331
      %v1897 = vunpack.c.h.b16 %v331
      %v1898 = vunpack.c.l.b16 %v332
      %v1899 = vunpack.c.h.b16 %v332
      %v1900 = vunpack.c.l.b16 %v333
      %v1901 = vunpack.c.h.b16 %v333
      %v1902 = vunpack.c.l.b16 %v334
      %v1903 = vunpack.c.h.b16 %v334
      %v1904 = vunpack.c.l.b16 %v335
      %v1905 = vunpack.c.h.b16 %v335
      %v1906 = vunpack.c.l.b16 %v336
      %v1907 = vunpack.c.h.b16 %v336
      %v1908 = vunpack.c.l.b16 %v337
      %v1909 = vunpack.c.h.b16 %v337
      %v1910 = vunpack.c.l.b16 %v338
      %v1911 = vunpack.c.h.b16 %v338
      %v1912 = vunpack.c.l.b16 %v339
      %v1913 = vunpack.c.h.b16 %v339
      %v1914 = vunpack.c.l.b16 %v340
      %v1915 = vunpack.c.h.b16 %v340
      %v1916 = vunpack.c.l.b16 %v341
      %v1917 = vunpack.c.h.b16 %v341
      %v1918 = vunpack.c.l.b16 %v342
      %v1919 = vunpack.c.h.b16 %v342
      %v1920 = vunpack.c.l.b16 %v343
      %v1921 = vunpack.c.h.b16 %v343
      %v1922 = vunpack.c.l.b16 %v344
      %v1923 = vunpack.c.h.b16 %v344
      %v1924 = vunpack.c.l.b16 %v345
      %v1925 = vunpack.c.h.b16 %v345
      %v1926 = vunpack.c.l.b16 %v346
      %v1927 = vunpack.c.h.b16 %v346
      %v1928 = vunpack.c.l.b16 %v347
      %v1929 = vunpack.c.h.b16 %v347
      %v1930 = vunpack.c.l.b16 %v348
      %v1931 = vunpack.c.h.b16 %v348
      %v1932 = vunpack.c.l.b16 %v349
      %v1933 = vunpack.c.h.b16 %v349
      %v1934 = vunpack.c.l.b16 %v350
      %v1935 = vunpack.c.h.b16 %v350
      %v1936 = vunpack.c.l.b16 %v351
      %v1937 = vunpack.c.h.b16 %v351
      %v1938 = vunpack.c.l.b16 %v352
      %v1939 = vunpack.c.h.b16 %v352
      %v1940 = vunpack.c.l.b16 %v353
      %v1941 = vunpack.c.h.b16 %v353
      %v1942 = vunpack.c.l.b16 %v354
      %v1943 = vunpack.c.h.b16 %v354
      %v1944 = vunpack.c.l.b16 %v355
      %v1945 = vunpack.c.h.b16 %v355
      %v1946 = vunpack.c.l.b16 %v356
      %v1947 = vunpack.c.h.b16 %v356
      %v1948 = vunpack.c.l.b16 %v357
      %v1949 = vunpack.c.h.b16 %v357
      %v1950 = vunpack.c.l.b16 %v358
      %v1951 = vunpack.c.h.b16 %v358
      %v1952 = vunpack.c.l.b16 %v359
      %v1953 = vunpack.c.h.b16 %v359
      %v1954 = vunpack.c.l.b16 %v360
      %v1955 = vunpack.c.h.b16 %v360
      %v1956 = vunpack.c.l.b16 %v361
      %v1957 = vunpack.c.h.b16 %v361
      %v1958 = vunpack.c.l.b16 %v362
      %v1959 = vunpack.c.h.b16 %v362
      %v1960 = vunpack.c.l.b16 %v363
      %v1961 = vunpack.c.h.b16 %v363
      %v1962 = vunpack.c.l.b16 %v364
      %v1963 = vunpack.c.h.b16 %v364
      %v1964 = vunpack.c.l.b16 %v365
      %v1965 = vunpack.c.h.b16 %v365
      %v1966 = vpack.c.b16 %v1682, %v1678
      %v1967 = vpack.c.b16 %v1683, %v1679
      %v1968 = vpack.c.b16 %v1684, %v1680
      %v1969 = vpack.c.b16 %v1685, %v1681
      %v1970 = vpack.c.b16 %v1690, %v1686
      %v1971 = vpack.c.b16 %v1691, %v1687
      %v1972 = vpack.c.b16 %v1692, %v1688
      %v1973 = vpack.c.b16 %v1693, %v1689
      %v1974 = vpack.c.b16 %v1698, %v1694
      %v1975 = vpack.c.b16 %v1699, %v1695
      %v1976 = vpack.c.b16 %v1700, %v1696
      %v1977 = vpack.c.b16 %v1701, %v1697
      %v1978 = vpack.c.b16 %v1706, %v1702
      %v1979 = vpack.c.b16 %v1707, %v1703
      %v1980 = vpack.c.b16 %v1708, %v1704
      %v1981 = vpack.c.b16 %v1709, %v1705
      %v1982 = vpack.c.b16 %v1714, %v1710
      %v1983 = vpack.c.b16 %v1715, %v1711
      %v1984 = vpack.c.b16 %v1716, %v1712
      %v1985 = vpack.c.b16 %v1717, %v1713
      %v1986 = vpack.c.b16 %v1722, %v1718
      %v1987 = vpack.c.b16 %v1723, %v1719
      %v1988 = vpack.c.b16 %v1724, %v1720
      %v1989 = vpack.c.b16 %v1725, %v1721
      %v1990 = vpack.c.b16 %v1730, %v1726
      %v1991 = vpack.c.b16 %v1731, %v1727
      %v1992 = vpack.c.b16 %v1732, %v1728
      %v1993 = vpack.c.b16 %v1733, %v1729
      %v1994 = vpack.c.b16 %v1738, %v1734
      %v1995 = vpack.c.b16 %v1739, %v1735
      %v1996 = vpack.c.b16 %v1740, %v1736
      %v1997 = vpack.c.b16 %v1741, %v1737
      %v1998 = vpack.c.b16 %v1746, %v1742
      %v1999 = vpack.c.b16 %v1747, %v1743
      %v2000 = vpack.c.b16 %v1748, %v1744
      %v2001 = vpack.c.b16 %v1749, %v1745
      %v2002 = vpack.c.b16 %v1754, %v1750
      %v2003 = vpack.c.b16 %v1755, %v1751
      %v2004 = vpack.c.b16 %v1756, %v1752
      %v2005 = vpack.c.b16 %v1757, %v1753
      %v2006 = vpack.c.b16 %v1762, %v1758
      %v2007 = vpack.c.b16 %v1763, %v1759
      %v2008 = vpack.c.b16 %v1764, %v1760
      %v2009 = vpack.c.b16 %v1765, %v1761
      %v2010 = vpack.c.b16 %v1770, %v1766
      %v2011 = vpack.c.b16 %v1771, %v1767
      %v2012 = vpack.c.b16 %v1772, %v1768
      %v2013 = vpack.c.b16 %v1773, %v1769
      %v2014 = vpack.c.b16 %v1778, %v1774
      %v2015 = vpack.c.b16 %v1779, %v1775
      %v2016 = vpack.c.b16 %v1780, %v1776
      %v2017 = vpack.c.b16 %v1781, %v1777
      %v2018 = vpack.c.b16 %v1786, %v1782
      %v2019 = vpack.c.b16 %v1787, %v1783
      %v2020 = vpack.c.b16 %v1788, %v1784
      %v2021 = vpack.c.b16 %v1789, %v1785
      %v2022 = vpack.c.b16 %v1794, %v1790
      %v2023 = vpack.c.b16 %v1795, %v1791
      %v2024 = vpack.c.b16 %v1796, %v1792
      %v2025 = vpack.c.b16 %v1797, %v1793
      %v2026 = vpack.c.b16 %v1802, %v1798
      %v2027 = vpack.c.b16 %v1803, %v1799
      %v2028 = vpack.c.b16 %v1804, %v1800
      %v2029 = vpack.c.b16 %v1805, %v1801
      %v2030 = vpack.c.b16 %v1810, %v1806
      %v2031 = vpack.c.b16 %v1811, %v1807
      %v2032 = vpack.c.b16 %v1812, %v1808
      %v2033 = vpack.c.b16 %v1813, %v1809
      %v2034 = vpack.c.b16 %v1818, %v1814
      %v2035 = vpack.c.b16 %v1819, %v1815
      %v2036 = vpack.c.b16 %v1820, %v1816
      %v2037 = vpack.c.b16 %v1821, %v1817
      %v2038 = vpack.c.b16 %v1826, %v1822
      %v2039 = vpack.c.b16 %v1827, %v1823
      %v2040 = vpack.c.b16 %v1828, %v1824
      %v2041 = vpack.c.b16 %v1829, %v1825
      %v2042 = vpack.c.b16 %v1834, %v1830
      %v2043 = vpack.c.b16 %v1835, %v1831
      %v2044 = vpack.c.b16 %v1836, %v1832
      %v2045 = vpack.c.b16 %v1837, %v1833
      %v2046 = vpack.c.b16 %v1842, %v1838
      %v2047 = vpack.c.b16 %v1843, %v1839
      %v2048 = vpack.c.b16 %v1844, %v1840
      %v2049 = vpack.c.b16 %v1845, %v1841
      %v2050 = vpack.c.b16 %v1850, %v1846
      %v2051 = vpack.c.b16 %v1851, %v1847
      %v2052 = vpack.c.b16 %v1852, %v1848
      %v2053 = vpack.c.b16 %v1853, %v1849
      %v2054 = vpack.c.b16 %v1858, %v1854
      %v2055 = vpack.c.b16 %v1859, %v1855
      %v2056 = vpack.c.b16 %v1860, %v1856
      %v2057 = vpack.c.b16 %v1861, %v1857
      %v2058 = vpack.c.b16 %v1866, %v1862
      %v2059 = vpack.c.b16 %v1867, %v1863
      %v2060 = vpack.c.b16 %v1868, %v1864
      %v2061 = vpack.c.b16 %v1869, %v1865
      %v2062 = vpack.c.b16 %v1874, %v1870
      %v2063 = vpack.c.b16 %v1875, %v1871
      %v2064 = vpack.c.b16 %v1876, %v1872
      %v2065 = vpack.c.b16 %v1877, %v1873
      %v2066 = vpack.c.b16 %v1882, %v1878
      %v2067 = vpack.c.b16 %v1883, %v1879
      %v2068 = vpack.c.b16 %v1884, %v1880
      %v2069 = vpack.c.b16 %v1885, %v1881
      %v2070 = vpack.c.b16 %v1890, %v1886
      %v2071 = vpack.c.b16 %v1891, %v1887
      %v2072 = vpack.c.b16 %v1892, %v1888
      %v2073 = vpack.c.b16 %v1893, %v1889
      %v2074 = vpack.c.b16 %v1898, %v1894
      %v2075 = vpack.c.b16 %v1899, %v1895
      %v2076 = vpack.c.b16 %v1900, %v1896
      %v2077 = vpack.c.b16 %v1901, %v1897
      %v2078 = vpack.c.b16 %v1906, %v1902
      %v2079 = vpack.c.b16 %v1907, %v1903
      %v2080 = vpack.c.b16 %v1908, %v1904
      %v2081 = vpack.c.b16 %v1909, %v1905
      %v2082 = vpack.c.b16 %v1914, %v1910
      %v2083 = vpack.c.b16 %v1915, %v1911
      %v2084 = vpack.c.b16 %v1916, %v1912
      %v2085 = vpack.c.b16 %v1917, %v1913
      %v2086 = vpack.c.b16 %v1922, %v1918
      %v2087 = vpack.c.b16 %v1923, %v1919
      %v2088 = vpack.c.b16 %v1924, %v1920
      %v2089 = vpack.c.b16 %v1925, %v1921
      %v2090 = vpack.c.b16 %v1930, %v1926
      %v2091 = vpack.c.b16 %v1931, %v1927
      %v2092 = vpack.c.b16 %v1932, %v1928
      %v2093 = vpack.c.b16 %v1933, %v1929
      %v2094 = vpack.c.b16 %v1938, %v1934
      %v2095 = vpack.c.b16 %v1939, %v1935
      %v2096 = vpack.c.b16 %v1940, %v1936
      %v2097 = vpack.c.b16 %v1941, %v1937
      %v2098 = vpack.c.b16 %v1946, %v1942
      %v2099 = vpack.c.b16 %v1947, %v1943
      %v2100 = vpack.c.b16 %v1948, %v1944
      %v2101 = vpack.c.b16 %v1949, %v1945
      %v2102 = vpack.c.b16 %v1954, %v1950
      %v2103 = vpack.c.b16 %v1955, %v1951
      %v2104 = vpack.c.b16 %v1956, %v1952
      %v2105 = vpack.c.b16 %v1957, %v1953
      %v2106 = vpack.c.b16 %v1962, %v1958
      %v2107 = vpack.c.b16 %v1963, %v1959
      %v2108 = vpack.c.b16 %v1964, %v1960
      %v2109 = vpack.c.b16 %v1965, %v1961
      %v2255 = vsel %vm1267, %v1529, 0
      %2257 = vmatprep.subr.bf16.mxu0 %v1967
      %2258 = vmatpush1.bf16.msra.mxu0 %v1966
      %2259 = vmatprep.subr.bf16.mxu0 %v1971
      %2260 = vmatpush1.bf16.msra.mxu0 %v1970
      %2261 = vmatprep.subr.bf16.mxu0 %v1975
      %2262 = vmatpush1.bf16.msra.mxu0 %v1974
      %2263 = vmatprep.subr.bf16.mxu0 %v1979
      %2264 = vmatpush1.bf16.msra.mxu0 %v1978
      %2265 = vmatprep.subr.bf16.mxu0 %v1983
      %2266 = vmatpush1.bf16.msra.mxu0 %v1982
      %2267 = vmatprep.subr.bf16.mxu0 %v1987
      %2268 = vmatpush1.bf16.msra.mxu0 %v1986
      %2269 = vmatprep.subr.bf16.mxu0 %v1991
      %2270 = vmatpush1.bf16.msra.mxu0 %v1990
      %2271 = vmatprep.subr.bf16.mxu0 %v1995
      %2272 = vmatpush1.bf16.msra.mxu0 %v1994
      %2273 = vmatprep.subr.bf16.mxu0 %v1999
      %2274 = vmatpush1.bf16.msra.mxu0 %v1998
      %2275 = vmatprep.subr.bf16.mxu0 %v2003
      %2276 = vmatpush1.bf16.msra.mxu0 %v2002
      %2277 = vmatprep.subr.bf16.mxu0 %v2007
      %2278 = vmatpush1.bf16.msra.mxu0 %v2006
      %2279 = vmatprep.subr.bf16.mxu0 %v2011
      %2280 = vmatpush1.bf16.msra.mxu0 %v2010
      %2281 = vmatprep.subr.bf16.mxu0 %v2015
      %2282 = vmatpush1.bf16.msra.mxu0 %v2014
      %2283 = vmatprep.subr.bf16.mxu0 %v2019
      %2284 = vmatpush1.bf16.msra.mxu0 %v2018
      %2285 = vmatprep.subr.bf16.mxu0 %v2023
      %2286 = vmatpush1.bf16.msra.mxu0 %v2022
      %2287 = vmatprep.subr.bf16.mxu0 %v2027
      %2288 = vmatpush1.bf16.msra.mxu0 %v2026
      %2289 = vmatprep.mubr.bf16.mxu0 %v1526
      %2290 = vmatmul.mubr.bf16.gmra.mrb[0].mxu0 %v1525
      %v2291 = vpop.f32.mrb[0].mxu0
      %v2292 = vadd.f32 %v1388, %v2291
      %v2293 = vpop.f32.mrb[0].mxu0
      %v2294 = vadd.f32 %v1390, %v2293
      %v2295 = vpop.f32.mrb[0].mxu0
      %v2296 = vpop.f32.mrb[0].mxu0
      %2297 = vdwg.mxu0
      %2298 = vmatprep.subr.bf16.mxu0 %v2031
      %2299 = vmatpush1.bf16.msra.mxu0 %v2030
      %2300 = vmatprep.subr.bf16.mxu0 %v2035
      %2301 = vmatpush1.bf16.msra.mxu0 %v2034
      %2302 = vmatprep.subr.bf16.mxu0 %v2039
      %2303 = vmatpush1.bf16.msra.mxu0 %v2038
      %2304 = vmatprep.subr.bf16.mxu0 %v2043
      %2305 = vmatpush1.bf16.msra.mxu0 %v2042
      %2306 = vmatprep.subr.bf16.mxu0 %v2047
      %2307 = vmatpush1.bf16.msra.mxu0 %v2046
      %2308 = vmatprep.subr.bf16.mxu0 %v2051
      %2309 = vmatpush1.bf16.msra.mxu0 %v2050
      %2310 = vmatprep.subr.bf16.mxu0 %v2055
      %2311 = vmatpush1.bf16.msra.mxu0 %v2054
      %2312 = vmatprep.subr.bf16.mxu0 %v2059
      %2313 = vmatpush1.bf16.msra.mxu0 %v2058
      %2314 = vmatprep.subr.bf16.mxu0 %v2063
      %2315 = vmatpush1.bf16.msra.mxu0 %v2062
      %2316 = vmatprep.subr.bf16.mxu0 %v2067
      %2317 = vmatpush1.bf16.msra.mxu0 %v2066
      %2318 = vmatprep.subr.bf16.mxu0 %v2071
      %2319 = vmatpush1.bf16.msra.mxu0 %v2070
      %2320 = vmatprep.subr.bf16.mxu0 %v2075
      %2321 = vmatpush1.bf16.msra.mxu0 %v2074
      %2322 = vmatprep.subr.bf16.mxu0 %v2079
      %2323 = vmatpush1.bf16.msra.mxu0 %v2078
      %2324 = vmatprep.subr.bf16.mxu0 %v2083
      %2325 = vmatpush1.bf16.msra.mxu0 %v2082
      %2326 = vmatprep.subr.bf16.mxu0 %v2087
      %2327 = vmatpush1.bf16.msra.mxu0 %v2086
      %2328 = vmatprep.subr.bf16.mxu0 %v2091
      %2329 = vmatpush1.bf16.msra.mxu0 %v2090
      %2330 = vmatprep.mubr.bf16.mxu0 %v1528
      %2331 = vmatmul.mubr.bf16.gmra.mrb[0].mxu0 %v1527
      %v2332 = vpop.f32.mrb[0].mxu0
      %v2333 = vadd.f32 %v2292, %v2332
      %v2334 = vpop.f32.mrb[0].mxu0
      %v2335 = vadd.f32 %v2294, %v2334
      %v2336 = vpop.f32.mrb[0].mxu0
      %v2337 = vpop.f32.mrb[0].mxu0
      %2338 = vdwg.mxu0
      %2339 = vmatprep.subr.bf16.mxu0 %v2095
      %2340 = vmatpush1.bf16.msra.mxu0 %v2094
      %2341 = vmatprep.subr.bf16.mxu0 %v2099
      %2342 = vmatpush1.bf16.msra.mxu0 %v2098
      %2343 = vmatprep.subr.bf16.mxu0 %v2103
      %2344 = vmatpush1.bf16.msra.mxu0 %v2102
      %2345 = vmatprep.subr.bf16.mxu0 %v2107
      %2346 = vmatpush1.bf16.msra.mxu0 %v2106
      %2347 = vmatprep.subr.bf16.mxu0 0
      %2348 = vmatpush1.bf16.msra.mxu0 0
      %2349 = vmatprep.subr.bf16.mxu0 0
      %2350 = vmatpush1.bf16.msra.mxu0 0
      %2351 = vmatprep.subr.bf16.mxu0 0
      %2352 = vmatpush1.bf16.msra.mxu0 0
      %2353 = vmatprep.subr.bf16.mxu0 0
      %2354 = vmatpush1.bf16.msra.mxu0 0
      %2355 = vmatprep.subr.bf16.mxu0 0
      %2356 = vmatpush1.bf16.msra.mxu0 0
      %2357 = vmatprep.subr.bf16.mxu0 0
      %2358 = vmatpush1.bf16.msra.mxu0 0
      %2359 = vmatprep.subr.bf16.mxu0 0
      %2360 = vmatpush1.bf16.msra.mxu0 0
      %2361 = vmatprep.subr.bf16.mxu0 0
      %2362 = vmatpush1.bf16.msra.mxu0 0
      %2363 = vmatprep.subr.bf16.mxu0 0
      %2364 = vmatpush1.bf16.msra.mxu0 0
      %2365 = vmatprep.subr.bf16.mxu0 0
      %2366 = vmatpush1.bf16.msra.mxu0 0
      %2367 = vmatprep.subr.bf16.mxu0 0
      %2368 = vmatpush1.bf16.msra.mxu0 0
      %2369 = vmatprep.subr.bf16.mxu0 0
      %2370 = vmatpush1.bf16.msra.mxu0 0
      %2371 = vmatprep.mubr.bf16.mxu0 0
      %2372 = vmatmul.mubr.bf16.gmra.mrb[0].mxu0 %v2255
      %v2373 = vpop.f32.mrb[0].mxu0
      %v2374 = vadd.f32 %v2333, %v2373
      %v2375 = vpop.f32.mrb[0].mxu0
      %v2376 = vadd.f32 %v2335, %v2375
      %v2377 = vpop.f32.mrb[0].mxu0
      %v2378 = vpop.f32.mrb[0].mxu0
      %2379 = vdwg.mxu0
      %2380 = vmatprep.subr.bf16.mxu0 %v1969
      %2381 = vmatpush1.bf16.msra.mxu0 %v1968
      %2382 = vmatprep.subr.bf16.mxu0 %v1973
      %2383 = vmatpush1.bf16.msra.mxu0 %v1972
      %2384 = vmatprep.subr.bf16.mxu0 %v1977
      %2385 = vmatpush1.bf16.msra.mxu0 %v1976
      %2386 = vmatprep.subr.bf16.mxu0 %v1981
      %2387 = vmatpush1.bf16.msra.mxu0 %v1980
      %2388 = vmatprep.subr.bf16.mxu0 %v1985
      %2389 = vmatpush1.bf16.msra.mxu0 %v1984
      %2390 = vmatprep.subr.bf16.mxu0 %v1989
      %2391 = vmatpush1.bf16.msra.mxu0 %v1988
      %2392 = vmatprep.subr.bf16.mxu0 %v1993
      %2393 = vmatpush1.bf16.msra.mxu0 %v1992
      %2394 = vmatprep.subr.bf16.mxu0 %v1997
      %2395 = vmatpush1.bf16.msra.mxu0 %v1996
      %2396 = vmatprep.subr.bf16.mxu0 %v2001
      %2397 = vmatpush1.bf16.msra.mxu0 %v2000
      %2398 = vmatprep.subr.bf16.mxu0 %v2005
      %2399 = vmatpush1.bf16.msra.mxu0 %v2004
      %2400 = vmatprep.subr.bf16.mxu0 %v2009
      %2401 = vmatpush1.bf16.msra.mxu0 %v2008
      %2402 = vmatprep.subr.bf16.mxu0 %v2013
      %2403 = vmatpush1.bf16.msra.mxu0 %v2012
      %2404 = vmatprep.subr.bf16.mxu0 %v2017
      %2405 = vmatpush1.bf16.msra.mxu0 %v2016
      %2406 = vmatprep.subr.bf16.mxu0 %v2021
      %2407 = vmatpush1.bf16.msra.mxu0 %v2020
      %2408 = vmatprep.subr.bf16.mxu0 %v2025
      %2409 = vmatpush1.bf16.msra.mxu0 %v2024
      %2410 = vmatprep.subr.bf16.mxu0 %v2029
      %2411 = vmatpush1.bf16.msra.mxu0 %v2028
      %2412 = vmatprep.mubr.bf16.mxu0 %v1526
      %2413 = vmatmul.mubr.bf16.gmra.mrb[0].mxu0 %v1525
      %v2414 = vpop.f32.mrb[0].mxu0
      %v2415 = vadd.f32 %v1511, %v2414
      %v2416 = vpop.f32.mrb[0].mxu0
      %v2417 = vadd.f32 %v1513, %v2416
      %v2418 = vpop.f32.mrb[0].mxu0
      %v2419 = vpop.f32.mrb[0].mxu0
      %2420 = vdwg.mxu0
      %2421 = vmatprep.subr.bf16.mxu0 %v2033
      %2422 = vmatpush1.bf16.msra.mxu0 %v2032
      %2423 = vmatprep.subr.bf16.mxu0 %v2037
      %2424 = vmatpush1.bf16.msra.mxu0 %v2036
      %2425 = vmatprep.subr.bf16.mxu0 %v2041
      %2426 = vmatpush1.bf16.msra.mxu0 %v2040
      %2427 = vmatprep.subr.bf16.mxu0 %v2045
      %2428 = vmatpush1.bf16.msra.mxu0 %v2044
      %2429 = vmatprep.subr.bf16.mxu0 %v2049
      %2430 = vmatpush1.bf16.msra.mxu0 %v2048
      %2431 = vmatprep.subr.bf16.mxu0 %v2053
      %2432 = vmatpush1.bf16.msra.mxu0 %v2052
      %2433 = vmatprep.subr.bf16.mxu0 %v2057
      %2434 = vmatpush1.bf16.msra.mxu0 %v2056
      %2435 = vmatprep.subr.bf16.mxu0 %v2061
      %2436 = vmatpush1.bf16.msra.mxu0 %v2060
      %2437 = vmatprep.subr.bf16.mxu0 %v2065
      %2438 = vmatpush1.bf16.msra.mxu0 %v2064
      %2439 = vmatprep.subr.bf16.mxu0 %v2069
      %2440 = vmatpush1.bf16.msra.mxu0 %v2068
      %2441 = vmatprep.subr.bf16.mxu0 %v2073
      %2442 = vmatpush1.bf16.msra.mxu0 %v2072
      %2443 = vmatprep.subr.bf16.mxu0 %v2077
      %2444 = vmatpush1.bf16.msra.mxu0 %v2076
      %2445 = vmatprep.subr.bf16.mxu0 %v2081
      %2446 = vmatpush1.bf16.msra.mxu0 %v2080
      %2447 = vmatprep.subr.bf16.mxu0 %v2085
      %2448 = vmatpush1.bf16.msra.mxu0 %v2084
      %2449 = vmatprep.subr.bf16.mxu0 %v2089
      %2450 = vmatpush1.bf16.msra.mxu0 %v2088
      %2451 = vmatprep.subr.bf16.mxu0 %v2093
      %2452 = vmatpush1.bf16.msra.mxu0 %v2092
      %2453 = vmatprep.mubr.bf16.mxu0 %v1528
      %2454 = vmatmul.mubr.bf16.gmra.mrb[0].mxu0 %v1527
      %v2455 = vpop.f32.mrb[0].mxu0
      %v2456 = vadd.f32 %v2415, %v2455
      %v2457 = vpop.f32.mrb[0].mxu0
      %v2458 = vadd.f32 %v2417, %v2457
      %v2459 = vpop.f32.mrb[0].mxu0
      %v2460 = vpop.f32.mrb[0].mxu0
      %2461 = vdwg.mxu0
      %2462 = vmatprep.subr.bf16.mxu0 %v2097
      %2463 = vmatpush1.bf16.msra.mxu0 %v2096
      %2464 = vmatprep.subr.bf16.mxu0 %v2101
      %2465 = vmatpush1.bf16.msra.mxu0 %v2100
      %2466 = vmatprep.subr.bf16.mxu0 %v2105
      %2467 = vmatpush1.bf16.msra.mxu0 %v2104
      %2468 = vmatprep.subr.bf16.mxu0 %v2109
      %2469 = vmatpush1.bf16.msra.mxu0 %v2108
      %2470 = vmatprep.subr.bf16.mxu0 0
      %2471 = vmatpush1.bf16.msra.mxu0 0
      %2472 = vmatprep.subr.bf16.mxu0 0
      %2473 = vmatpush1.bf16.msra.mxu0 0
      %2474 = vmatprep.subr.bf16.mxu0 0
      %2475 = vmatpush1.bf16.msra.mxu0 0
      %2476 = vmatprep.subr.bf16.mxu0 0
      %2477 = vmatpush1.bf16.msra.mxu0 0
      %2478 = vmatprep.subr.bf16.mxu0 0
      %2479 = vmatpush1.bf16.msra.mxu0 0
      %2480 = vmatprep.subr.bf16.mxu0 0
      %2481 = vmatpush1.bf16.msra.mxu0 0
      %2482 = vmatprep.subr.bf16.mxu0 0
      %2483 = vmatpush1.bf16.msra.mxu0 0
      %2484 = vmatprep.subr.bf16.mxu0 0
      %2485 = vmatpush1.bf16.msra.mxu0 0
      %2486 = vmatprep.subr.bf16.mxu0 0
      %2487 = vmatpush1.bf16.msra.mxu0 0
      %2488 = vmatprep.subr.bf16.mxu0 0
      %2489 = vmatpush1.bf16.msra.mxu0 0
      %2490 = vmatprep.subr.bf16.mxu0 0
      %2491 = vmatpush1.bf16.msra.mxu0 0
      %2492 = vmatprep.subr.bf16.mxu0 0
      %2493 = vmatpush1.bf16.msra.mxu0 0
      %2494 = vmatprep.mubr.bf16.mxu0 0
      %2495 = vmatmul.mubr.bf16.gmra.mrb[0].mxu0 %v2255
      %v2496 = vpop.f32.mrb[0].mxu0
      %v2497 = vadd.f32 %v2456, %v2496
      %v2498 = vpop.f32.mrb[0].mxu0
      %v2499 = vadd.f32 %v2458, %v2498
      %v2500 = vpop.f32.mrb[0].mxu0
      %v2501 = vpop.f32.mrb[0].mxu0
      %2502 = vdwg.mxu0
      %v2503 = vld [vmem:[#allocation2] sm:$0xcc]
      %v2504 = vld [vmem:[#allocation2 + $0x8] sm:$0xcc]
      %v2505 = vld [vmem:[#allocation2 + $0x10] sm:$0xc]
      %v2506 = vld [vmem:[#allocation2 + $0x14] sm:$0x33]
      %v2507 = vld [vmem:[#allocation2 + $0x1c] sm:$0x33]
      %v2508 = vld [vmem:[#allocation2 + $0x24] sm:$0x3]
      %s2509 = scalar_lea.vmem %s1, 2304
      %v2510 = vld [vmem:[%s2509] sm:$0xff]
      %v2511 = vld [vmem:[%s2509 + $0x8] sm:$0xff]
      %v2512 = vld [vmem:[%s2509 + $0x10] sm:$0xff]
      %v2513 = vld [vmem:[%s2509 + $0x18] sm:$0xff]
      %v2514 = vld [vmem:[%s2509 + $0x20] sm:$0xff]
      %v2515 = vld [vmem:[%s2509 + $0x28] sm:$0xff]
      %v2516 = vld [vmem:[%s2509 + $0x30] sm:$0xff]
      %v2517 = vld [vmem:[%s2509 + $0x38] sm:$0xff]
      %v2518 = vld [vmem:[%s2509 + $0x40] sm:$0xff]
      %v2519 = vld [vmem:[%s2509 + $0x48] sm:$0xff]
      %v2520 = vld [vmem:[%s2509 + $0x50] sm:$0xff]
      %v2521 = vld [vmem:[%s2509 + $0x58] sm:$0xff]
      %v2522 = vld [vmem:[%s2509 + $0x60] sm:$0xff]
      %v2523 = vld [vmem:[%s2509 + $0x68] sm:$0xff]
      %v2524 = vld [vmem:[%s2509 + $0x70] sm:$0xff]
      %v2525 = vld [vmem:[%s2509 + $0x78] sm:$0xff]
      %v2526 = vld [vmem:[%s2509 + $0x80] sm:$0xff]
      %v2527 = vld [vmem:[%s2509 + $0x88] sm:$0xff]
      %v2528 = vld [vmem:[%s2509 + $0x90] sm:$0xff]
      %v2529 = vld [vmem:[%s2509 + $0x98] sm:$0xff]
      %v2530 = vld [vmem:[%s2509 + $0xa0] sm:$0xff]
      %v2531 = vld [vmem:[%s2509 + $0xa8] sm:$0xff]
      %v2532 = vld [vmem:[%s2509 + $0xb0] sm:$0xff]
      %v2533 = vld [vmem:[%s2509 + $0xb8] sm:$0xff]
      %v2534 = vld [vmem:[%s2509 + $0xc0] sm:$0xff]
      %v2535 = vld [vmem:[%s2509 + $0xc8] sm:$0xff]
      %v2536 = vld [vmem:[%s2509 + $0xd0] sm:$0xff]
      %v2537 = vld [vmem:[%s2509 + $0xd8] sm:$0xff]
      %v2538 = vld [vmem:[%s2509 + $0xe0] sm:$0xff]
      %v2539 = vld [vmem:[%s2509 + $0xe8] sm:$0xff]
      %v2540 = vld [vmem:[%s2509 + $0xf0] sm:$0xff]
      %v2541 = vld [vmem:[%s2509 + $0xf8] sm:$0xff]
      %v2542 = vld [vmem:[%s2509 + $0x100] sm:$0xff]
      %v2543 = vld [vmem:[%s2509 + $0x108] sm:$0xff]
      %v2544 = vld [vmem:[%s2509 + $0x110] sm:$0xff]
      %v2545 = vld [vmem:[%s2509 + $0x118] sm:$0xff]
      %v2546 = vld [vmem:[%s2509 + $0x120] sm:$0xff]
      %v2547 = vld [vmem:[%s2509 + $0x128] sm:$0xff]
      %v2548 = vld [vmem:[%s2509 + $0x130] sm:$0xff]
      %v2549 = vld [vmem:[%s2509 + $0x138] sm:$0xff]
      %v2550 = vld [vmem:[%s2509 + $0x140] sm:$0xff]
      %v2551 = vld [vmem:[%s2509 + $0x148] sm:$0xff]
      %v2552 = vld [vmem:[%s2509 + $0x150] sm:$0xff]
      %v2553 = vld [vmem:[%s2509 + $0x158] sm:$0xff]
      %v2554 = vld [vmem:[%s2509 + $0x160] sm:$0xff]
      %v2555 = vld [vmem:[%s2509 + $0x168] sm:$0xff]
      %v2556 = vld [vmem:[%s2509 + $0x170] sm:$0xff]
      %v2557 = vld [vmem:[%s2509 + $0x178] sm:$0xff]
      %v2558 = vld [vmem:[%s2509 + $0x180] sm:$0xff]
      %v2559 = vld [vmem:[%s2509 + $0x188] sm:$0xff]
      %v2560 = vld [vmem:[%s2509 + $0x190] sm:$0xff]
      %v2561 = vld [vmem:[%s2509 + $0x198] sm:$0xff]
      %v2562 = vld [vmem:[%s2509 + $0x1a0] sm:$0xff]
      %v2563 = vld [vmem:[%s2509 + $0x1a8] sm:$0xff]
      %v2564 = vld [vmem:[%s2509 + $0x1b0] sm:$0xff]
      %v2565 = vld [vmem:[%s2509 + $0x1b8] sm:$0xff]
      %v2566 = vld [vmem:[%s2509 + $0x1c0] sm:$0xff]
      %v2567 = vld [vmem:[%s2509 + $0x1c8] sm:$0xff]
      %v2568 = vld [vmem:[%s2509 + $0x1d0] sm:$0xff]
      %v2569 = vld [vmem:[%s2509 + $0x1d8] sm:$0xff]
      %v2570 = vld [vmem:[%s2509 + $0x1e0] sm:$0xff]
      %v2571 = vld [vmem:[%s2509 + $0x1e8] sm:$0xff]
      %v2572 = vld [vmem:[%s2509 + $0x1f0] sm:$0xff]
      %v2573 = vld [vmem:[%s2509 + $0x1f8] sm:$0xff]
      %v2574 = vld [vmem:[%s2509 + $0x200] sm:$0xff]
      %v2575 = vld [vmem:[%s2509 + $0x208] sm:$0xff]
      %v2576 = vld [vmem:[%s2509 + $0x210] sm:$0xff]
      %v2577 = vld [vmem:[%s2509 + $0x218] sm:$0xff]
      %v2578 = vld [vmem:[%s2509 + $0x220] sm:$0xff]
      %v2579 = vld [vmem:[%s2509 + $0x228] sm:$0xff]
      %v2580 = vld [vmem:[%s2509 + $0x230] sm:$0xff]
      %v2581 = vld [vmem:[%s2509 + $0x238] sm:$0xff]
      %v2582 = vld [vmem:[%s2509 + $0x240] sm:$0xff]
      %v2583 = vld [vmem:[%s2509 + $0x248] sm:$0xff]
      %v2584 = vld [vmem:[%s2509 + $0x250] sm:$0xff]
      %v2585 = vld [vmem:[%s2509 + $0x258] sm:$0xff]
      %v2586 = vld [vmem:[%s2509 + $0x260] sm:$0xff]
      %v2587 = vld [vmem:[%s2509 + $0x268] sm:$0xff]
      %v2588 = vld [vmem:[%s2509 + $0x270] sm:$0xff]
      %v2589 = vld [vmem:[%s2509 + $0x278] sm:$0xff]
      %v2590 = vld [vmem:[%s2509 + $0x280] sm:$0xff]
      %v2591 = vld [vmem:[%s2509 + $0x288] sm:$0xff]
      %v2592 = vld [vmem:[%s2509 + $0x290] sm:$0xff]
      %v2593 = vld [vmem:[%s2509 + $0x298] sm:$0xff]
      %v2594 = vld [vmem:[%s2509 + $0x2a0] sm:$0xff]
      %v2595 = vld [vmem:[%s2509 + $0x2a8] sm:$0xff]
      %v2596 = vld [vmem:[%s2509 + $0x2b0] sm:$0xff]
      %v2597 = vld [vmem:[%s2509 + $0x2b8] sm:$0xff]
      %v2598 = vld [vmem:[%s2509 + $0x2c0] sm:$0xff]
      %v2599 = vld [vmem:[%s2509 + $0x2c8] sm:$0xff]
      %v2600 = vld [vmem:[%s2509 + $0x2d0] sm:$0xff]
      %v2601 = vld [vmem:[%s2509 + $0x2d8] sm:$0xff]
      %v2602 = vld [vmem:[%s2509 + $0x2e0] sm:$0xff]
      %v2603 = vld [vmem:[%s2509 + $0x2e8] sm:$0xff]
      %v2604 = vld [vmem:[%s2509 + $0x2f0] sm:$0xff]
      %v2605 = vld [vmem:[%s2509 + $0x2f8] sm:$0xff]
      %v2606 = vld [vmem:[%s2509 + $0x300] sm:$0xff]
      %v2607 = vld [vmem:[%s2509 + $0x308] sm:$0xff]
      %v2608 = vld [vmem:[%s2509 + $0x310] sm:$0xff]
      %v2609 = vld [vmem:[%s2509 + $0x318] sm:$0xff]
      %v2610 = vld [vmem:[%s2509 + $0x320] sm:$0xff]
      %v2611 = vld [vmem:[%s2509 + $0x328] sm:$0xff]
      %v2612 = vld [vmem:[%s2509 + $0x330] sm:$0xff]
      %v2613 = vld [vmem:[%s2509 + $0x338] sm:$0xff]
      %v2614 = vld [vmem:[%s2509 + $0x340] sm:$0xff]
      %v2615 = vld [vmem:[%s2509 + $0x348] sm:$0xff]
      %v2616 = vld [vmem:[%s2509 + $0x350] sm:$0xff]
      %v2617 = vld [vmem:[%s2509 + $0x358] sm:$0xff]
      %v2618 = vld [vmem:[%s2509 + $0x360] sm:$0xff]
      %v2619 = vld [vmem:[%s2509 + $0x368] sm:$0xff]
      %v2620 = vld [vmem:[%s2509 + $0x370] sm:$0xff]
      %v2621 = vld [vmem:[%s2509 + $0x378] sm:$0xff]
      %v2622 = vld [vmem:[%s2509 + $0x380] sm:$0xff]
      %v2623 = vld [vmem:[%s2509 + $0x388] sm:$0xff]
      %v2624 = vld [vmem:[%s2509 + $0x390] sm:$0xff]
      %v2625 = vld [vmem:[%s2509 + $0x398] sm:$0xff]
      %v2626 = vld [vmem:[%s2509 + $0x3a0] sm:$0xff]
      %v2627 = vld [vmem:[%s2509 + $0x3a8] sm:$0xff]
      %v2628 = vld [vmem:[%s2509 + $0x3b0] sm:$0xff]
      %v2629 = vld [vmem:[%s2509 + $0x3b8] sm:$0xff]
      %v2630 = vld [vmem:[%s2509 + $0x3c0] sm:$0xff]
      %v2631 = vld [vmem:[%s2509 + $0x3c8] sm:$0xff]
      %v2632 = vld [vmem:[%s2509 + $0x3d0] sm:$0xff]
      %v2633 = vld [vmem:[%s2509 + $0x3d8] sm:$0xff]
      %v2634 = vld [vmem:[%s2509 + $0x3e0] sm:$0xff]
      %v2635 = vld [vmem:[%s2509 + $0x3e8] sm:$0xff]
      %v2636 = vld [vmem:[%s2509 + $0x3f0] sm:$0xff]
      %v2637 = vld [vmem:[%s2509 + $0x3f8] sm:$0xff]
      %v2638 = vld [vmem:[%s2509 + $0x400] sm:$0xff]
      %v2639 = vld [vmem:[%s2509 + $0x408] sm:$0xff]
      %v2640 = vld [vmem:[%s2509 + $0x410] sm:$0xff]
      %v2641 = vld [vmem:[%s2509 + $0x418] sm:$0xff]
      %v2642 = vld [vmem:[%s2509 + $0x420] sm:$0xff]
      %v2643 = vld [vmem:[%s2509 + $0x428] sm:$0xff]
      %v2644 = vld [vmem:[%s2509 + $0x430] sm:$0xff]
      %v2645 = vld [vmem:[%s2509 + $0x438] sm:$0xff]
      %v2646 = vld [vmem:[%s2509 + $0x440] sm:$0xff]
      %v2647 = vld [vmem:[%s2509 + $0x448] sm:$0xff]
      %v2648 = vld [vmem:[%s2509 + $0x450] sm:$0xff]
      %v2649 = vld [vmem:[%s2509 + $0x458] sm:$0xff]
      %v2650 = vld [vmem:[%s2509 + $0x460] sm:$0xff]
      %v2651 = vld [vmem:[%s2509 + $0x468] sm:$0xff]
      %v2652 = vld [vmem:[%s2509 + $0x470] sm:$0xff]
      %v2653 = vld [vmem:[%s2509 + $0x478] sm:$0xff]
      %v2660 = vunpack.c.l.b16 %v2503
      %v2661 = vunpack.c.h.b16 %v2503
      %v2662 = vunpack.c.l.b16 %v2504
      %v2663 = vunpack.c.h.b16 %v2504
      %v2664 = vunpack.c.l.b16 %v2505
      %v2665 = vunpack.c.l.b16 %v2506
      %v2666 = vunpack.c.h.b16 %v2506
      %v2667 = vunpack.c.l.b16 %v2507
      %v2668 = vunpack.c.h.b16 %v2507
      %v2669 = vunpack.c.l.b16 %v2508
      %v2670 = vpack.c.b16 %v2665, %v2660
      %v2671 = vpack.c.b16 %v2666, %v2661
      %v2672 = vpack.c.b16 %v2667, %v2662
      %v2673 = vpack.c.b16 %v2668, %v2663
      %v2674 = vpack.c.b16 %v2669, %v2664
      %v2675 = vrot.slane %v2670, 2
      %v2676 = vrot.slane %v2671, 2
      %v2677 = vrot.slane %v2672, 2
      %v2678 = vrot.slane %v2673, 2
      %v2679 = vrot.slane %v2674, 2
      %v2828 = vunpack.c.l.b16 %v2510
      %v2829 = vunpack.c.h.b16 %v2510
      %v2830 = vunpack.c.l.b16 %v2511
      %v2831 = vunpack.c.h.b16 %v2511
      %v2832 = vunpack.c.l.b16 %v2512
      %v2833 = vunpack.c.h.b16 %v2512
      %v2834 = vunpack.c.l.b16 %v2513
      %v2835 = vunpack.c.h.b16 %v2513
      %v2836 = vunpack.c.l.b16 %v2514
      %v2837 = vunpack.c.h.b16 %v2514
      %v2838 = vunpack.c.l.b16 %v2515
      %v2839 = vunpack.c.h.b16 %v2515
      %v2840 = vunpack.c.l.b16 %v2516
      %v2841 = vunpack.c.h.b16 %v2516
      %v2842 = vunpack.c.l.b16 %v2517
      %v2843 = vunpack.c.h.b16 %v2517
      %v2844 = vunpack.c.l.b16 %v2518
      %v2845 = vunpack.c.h.b16 %v2518
      %v2846 = vunpack.c.l.b16 %v2519
      %v2847 = vunpack.c.h.b16 %v2519
      %v2848 = vunpack.c.l.b16 %v2520
      %v2849 = vunpack.c.h.b16 %v2520
      %v2850 = vunpack.c.l.b16 %v2521
      %v2851 = vunpack.c.h.b16 %v2521
      %v2852 = vunpack.c.l.b16 %v2522
      %v2853 = vunpack.c.h.b16 %v2522
      %v2854 = vunpack.c.l.b16 %v2523
      %v2855 = vunpack.c.h.b16 %v2523
      %v2856 = vunpack.c.l.b16 %v2524
      %v2857 = vunpack.c.h.b16 %v2524
      %v2858 = vunpack.c.l.b16 %v2525
      %v2859 = vunpack.c.h.b16 %v2525
      %v2860 = vunpack.c.l.b16 %v2526
      %v2861 = vunpack.c.h.b16 %v2526
      %v2862 = vunpack.c.l.b16 %v2527
      %v2863 = vunpack.c.h.b16 %v2527
      %v2864 = vunpack.c.l.b16 %v2528
      %v2865 = vunpack.c.h.b16 %v2528
      %v2866 = vunpack.c.l.b16 %v2529
      %v2867 = vunpack.c.h.b16 %v2529
      %v2868 = vunpack.c.l.b16 %v2530
      %v2869 = vunpack.c.h.b16 %v2530
      %v2870 = vunpack.c.l.b16 %v2531
      %v2871 = vunpack.c.h.b16 %v2531
      %v2872 = vunpack.c.l.b16 %v2532
      %v2873 = vunpack.c.h.b16 %v2532
      %v2874 = vunpack.c.l.b16 %v2533
      %v2875 = vunpack.c.h.b16 %v2533
      %v2876 = vunpack.c.l.b16 %v2534
      %v2877 = vunpack.c.h.b16 %v2534
      %v2878 = vunpack.c.l.b16 %v2535
      %v2879 = vunpack.c.h.b16 %v2535
      %v2880 = vunpack.c.l.b16 %v2536
      %v2881 = vunpack.c.h.b16 %v2536
      %v2882 = vunpack.c.l.b16 %v2537
      %v2883 = vunpack.c.h.b16 %v2537
      %v2884 = vunpack.c.l.b16 %v2538
      %v2885 = vunpack.c.h.b16 %v2538
      %v2886 = vunpack.c.l.b16 %v2539
      %v2887 = vunpack.c.h.b16 %v2539
      %v2888 = vunpack.c.l.b16 %v2540
      %v2889 = vunpack.c.h.b16 %v2540
      %v2890 = vunpack.c.l.b16 %v2541
      %v2891 = vunpack.c.h.b16 %v2541
      %v2892 = vunpack.c.l.b16 %v2542
      %v2893 = vunpack.c.h.b16 %v2542
      %v2894 = vunpack.c.l.b16 %v2543
      %v2895 = vunpack.c.h.b16 %v2543
      %v2896 = vunpack.c.l.b16 %v2544
      %v2897 = vunpack.c.h.b16 %v2544
      %v2898 = vunpack.c.l.b16 %v2545
      %v2899 = vunpack.c.h.b16 %v2545
      %v2900 = vunpack.c.l.b16 %v2546
      %v2901 = vunpack.c.h.b16 %v2546
      %v2902 = vunpack.c.l.b16 %v2547
      %v2903 = vunpack.c.h.b16 %v2547
      %v2904 = vunpack.c.l.b16 %v2548
      %v2905 = vunpack.c.h.b16 %v2548
      %v2906 = vunpack.c.l.b16 %v2549
      %v2907 = vunpack.c.h.b16 %v2549
      %v2908 = vunpack.c.l.b16 %v2550
      %v2909 = vunpack.c.h.b16 %v2550
      %v2910 = vunpack.c.l.b16 %v2551
      %v2911 = vunpack.c.h.b16 %v2551
      %v2912 = vunpack.c.l.b16 %v2552
      %v2913 = vunpack.c.h.b16 %v2552
      %v2914 = vunpack.c.l.b16 %v2553
      %v2915 = vunpack.c.h.b16 %v2553
      %v2916 = vunpack.c.l.b16 %v2554
      %v2917 = vunpack.c.h.b16 %v2554
      %v2918 = vunpack.c.l.b16 %v2555
      %v2919 = vunpack.c.h.b16 %v2555
      %v2920 = vunpack.c.l.b16 %v2556
      %v2921 = vunpack.c.h.b16 %v2556
      %v2922 = vunpack.c.l.b16 %v2557
      %v2923 = vunpack.c.h.b16 %v2557
      %v2924 = vunpack.c.l.b16 %v2558
      %v2925 = vunpack.c.h.b16 %v2558
      %v2926 = vunpack.c.l.b16 %v2559
      %v2927 = vunpack.c.h.b16 %v2559
      %v2928 = vunpack.c.l.b16 %v2560
      %v2929 = vunpack.c.h.b16 %v2560
      %v2930 = vunpack.c.l.b16 %v2561
      %v2931 = vunpack.c.h.b16 %v2561
      %v2932 = vunpack.c.l.b16 %v2562
      %v2933 = vunpack.c.h.b16 %v2562
      %v2934 = vunpack.c.l.b16 %v2563
      %v2935 = vunpack.c.h.b16 %v2563
      %v2936 = vunpack.c.l.b16 %v2564
      %v2937 = vunpack.c.h.b16 %v2564
      %v2938 = vunpack.c.l.b16 %v2565
      %v2939 = vunpack.c.h.b16 %v2565
      %v2940 = vunpack.c.l.b16 %v2566
      %v2941 = vunpack.c.h.b16 %v2566
      %v2942 = vunpack.c.l.b16 %v2567
      %v2943 = vunpack.c.h.b16 %v2567
      %v2944 = vunpack.c.l.b16 %v2568
      %v2945 = vunpack.c.h.b16 %v2568
      %v2946 = vunpack.c.l.b16 %v2569
      %v2947 = vunpack.c.h.b16 %v2569
      %v2948 = vunpack.c.l.b16 %v2570
      %v2949 = vunpack.c.h.b16 %v2570
      %v2950 = vunpack.c.l.b16 %v2571
      %v2951 = vunpack.c.h.b16 %v2571
      %v2952 = vunpack.c.l.b16 %v2572
      %v2953 = vunpack.c.h.b16 %v2572
      %v2954 = vunpack.c.l.b16 %v2573
      %v2955 = vunpack.c.h.b16 %v2573
      %v2956 = vunpack.c.l.b16 %v2574
      %v2957 = vunpack.c.h.b16 %v2574
      %v2958 = vunpack.c.l.b16 %v2575
      %v2959 = vunpack.c.h.b16 %v2575
      %v2960 = vunpack.c.l.b16 %v2576
      %v2961 = vunpack.c.h.b16 %v2576
      %v2962 = vunpack.c.l.b16 %v2577
      %v2963 = vunpack.c.h.b16 %v2577
      %v2964 = vunpack.c.l.b16 %v2578
      %v2965 = vunpack.c.h.b16 %v2578
      %v2966 = vunpack.c.l.b16 %v2579
      %v2967 = vunpack.c.h.b16 %v2579
      %v2968 = vunpack.c.l.b16 %v2580
      %v2969 = vunpack.c.h.b16 %v2580
      %v2970 = vunpack.c.l.b16 %v2581
      %v2971 = vunpack.c.h.b16 %v2581
      %v2972 = vunpack.c.l.b16 %v2582
      %v2973 = vunpack.c.h.b16 %v2582
      %v2974 = vunpack.c.l.b16 %v2583
      %v2975 = vunpack.c.h.b16 %v2583
      %v2976 = vunpack.c.l.b16 %v2584
      %v2977 = vunpack.c.h.b16 %v2584
      %v2978 = vunpack.c.l.b16 %v2585
      %v2979 = vunpack.c.h.b16 %v2585
      %v2980 = vunpack.c.l.b16 %v2586
      %v2981 = vunpack.c.h.b16 %v2586
      %v2982 = vunpack.c.l.b16 %v2587
      %v2983 = vunpack.c.h.b16 %v2587
      %v2984 = vunpack.c.l.b16 %v2588
      %v2985 = vunpack.c.h.b16 %v2588
      %v2986 = vunpack.c.l.b16 %v2589
      %v2987 = vunpack.c.h.b16 %v2589
      %v2988 = vunpack.c.l.b16 %v2590
      %v2989 = vunpack.c.h.b16 %v2590
      %v2990 = vunpack.c.l.b16 %v2591
      %v2991 = vunpack.c.h.b16 %v2591
      %v2992 = vunpack.c.l.b16 %v2592
      %v2993 = vunpack.c.h.b16 %v2592
      %v2994 = vunpack.c.l.b16 %v2593
      %v2995 = vunpack.c.h.b16 %v2593
      %v2996 = vunpack.c.l.b16 %v2594
      %v2997 = vunpack.c.h.b16 %v2594
      %v2998 = vunpack.c.l.b16 %v2595
      %v2999 = vunpack.c.h.b16 %v2595
      %v3000 = vunpack.c.l.b16 %v2596
      %v3001 = vunpack.c.h.b16 %v2596
      %v3002 = vunpack.c.l.b16 %v2597
      %v3003 = vunpack.c.h.b16 %v2597
      %v3004 = vunpack.c.l.b16 %v2598
      %v3005 = vunpack.c.h.b16 %v2598
      %v3006 = vunpack.c.l.b16 %v2599
      %v3007 = vunpack.c.h.b16 %v2599
      %v3008 = vunpack.c.l.b16 %v2600
      %v3009 = vunpack.c.h.b16 %v2600
      %v3010 = vunpack.c.l.b16 %v2601
      %v3011 = vunpack.c.h.b16 %v2601
      %v3012 = vunpack.c.l.b16 %v2602
      %v3013 = vunpack.c.h.b16 %v2602
      %v3014 = vunpack.c.l.b16 %v2603
      %v3015 = vunpack.c.h.b16 %v2603
      %v3016 = vunpack.c.l.b16 %v2604
      %v3017 = vunpack.c.h.b16 %v2604
      %v3018 = vunpack.c.l.b16 %v2605
      %v3019 = vunpack.c.h.b16 %v2605
      %v3020 = vunpack.c.l.b16 %v2606
      %v3021 = vunpack.c.h.b16 %v2606
      %v3022 = vunpack.c.l.b16 %v2607
      %v3023 = vunpack.c.h.b16 %v2607
      %v3024 = vunpack.c.l.b16 %v2608
      %v3025 = vunpack.c.h.b16 %v2608
      %v3026 = vunpack.c.l.b16 %v2609
      %v3027 = vunpack.c.h.b16 %v2609
      %v3028 = vunpack.c.l.b16 %v2610
      %v3029 = vunpack.c.h.b16 %v2610
      %v3030 = vunpack.c.l.b16 %v2611
      %v3031 = vunpack.c.h.b16 %v2611
      %v3032 = vunpack.c.l.b16 %v2612
      %v3033 = vunpack.c.h.b16 %v2612
      %v3034 = vunpack.c.l.b16 %v2613
      %v3035 = vunpack.c.h.b16 %v2613
      %v3036 = vunpack.c.l.b16 %v2614
      %v3037 = vunpack.c.h.b16 %v2614
      %v3038 = vunpack.c.l.b16 %v2615
      %v3039 = vunpack.c.h.b16 %v2615
      %v3040 = vunpack.c.l.b16 %v2616
      %v3041 = vunpack.c.h.b16 %v2616
      %v3042 = vunpack.c.l.b16 %v2617
      %v3043 = vunpack.c.h.b16 %v2617
      %v3044 = vunpack.c.l.b16 %v2618
      %v3045 = vunpack.c.h.b16 %v2618
      %v3046 = vunpack.c.l.b16 %v2619
      %v3047 = vunpack.c.h.b16 %v2619
      %v3048 = vunpack.c.l.b16 %v2620
      %v3049 = vunpack.c.h.b16 %v2620
      %v3050 = vunpack.c.l.b16 %v2621
      %v3051 = vunpack.c.h.b16 %v2621
      %v3052 = vunpack.c.l.b16 %v2622
      %v3053 = vunpack.c.h.b16 %v2622
      %v3054 = vunpack.c.l.b16 %v2623
      %v3055 = vunpack.c.h.b16 %v2623
      %v3056 = vunpack.c.l.b16 %v2624
      %v3057 = vunpack.c.h.b16 %v2624
      %v3058 = vunpack.c.l.b16 %v2625
      %v3059 = vunpack.c.h.b16 %v2625
      %v3060 = vunpack.c.l.b16 %v2626
      %v3061 = vunpack.c.h.b16 %v2626
      %v3062 = vunpack.c.l.b16 %v2627
      %v3063 = vunpack.c.h.b16 %v2627
      %v3064 = vunpack.c.l.b16 %v2628
      %v3065 = vunpack.c.h.b16 %v2628
      %v3066 = vunpack.c.l.b16 %v2629
      %v3067 = vunpack.c.h.b16 %v2629
      %v3068 = vunpack.c.l.b16 %v2630
      %v3069 = vunpack.c.h.b16 %v2630
      %v3070 = vunpack.c.l.b16 %v2631
      %v3071 = vunpack.c.h.b16 %v2631
      %v3072 = vunpack.c.l.b16 %v2632
      %v3073 = vunpack.c.h.b16 %v2632
      %v3074 = vunpack.c.l.b16 %v2633
      %v3075 = vunpack.c.h.b16 %v2633
      %v3076 = vunpack.c.l.b16 %v2634
      %v3077 = vunpack.c.h.b16 %v2634
      %v3078 = vunpack.c.l.b16 %v2635
      %v3079 = vunpack.c.h.b16 %v2635
      %v3080 = vunpack.c.l.b16 %v2636
      %v3081 = vunpack.c.h.b16 %v2636
      %v3082 = vunpack.c.l.b16 %v2637
      %v3083 = vunpack.c.h.b16 %v2637
      %v3084 = vunpack.c.l.b16 %v2638
      %v3085 = vunpack.c.h.b16 %v2638
      %v3086 = vunpack.c.l.b16 %v2639
      %v3087 = vunpack.c.h.b16 %v2639
      %v3088 = vunpack.c.l.b16 %v2640
      %v3089 = vunpack.c.h.b16 %v2640
      %v3090 = vunpack.c.l.b16 %v2641
      %v3091 = vunpack.c.h.b16 %v2641
      %v3092 = vunpack.c.l.b16 %v2642
      %v3093 = vunpack.c.h.b16 %v2642
      %v3094 = vunpack.c.l.b16 %v2643
      %v3095 = vunpack.c.h.b16 %v2643
      %v3096 = vunpack.c.l.b16 %v2644
      %v3097 = vunpack.c.h.b16 %v2644
      %v3098 = vunpack.c.l.b16 %v2645
      %v3099 = vunpack.c.h.b16 %v2645
      %v3100 = vunpack.c.l.b16 %v2646
      %v3101 = vunpack.c.h.b16 %v2646
      %v3102 = vunpack.c.l.b16 %v2647
      %v3103 = vunpack.c.h.b16 %v2647
      %v3104 = vunpack.c.l.b16 %v2648
      %v3105 = vunpack.c.h.b16 %v2648
      %v3106 = vunpack.c.l.b16 %v2649
      %v3107 = vunpack.c.h.b16 %v2649
      %v3108 = vunpack.c.l.b16 %v2650
      %v3109 = vunpack.c.h.b16 %v2650
      %v3110 = vunpack.c.l.b16 %v2651
      %v3111 = vunpack.c.h.b16 %v2651
      %v3112 = vunpack.c.l.b16 %v2652
      %v3113 = vunpack.c.h.b16 %v2652
      %v3114 = vunpack.c.l.b16 %v2653
      %v3115 = vunpack.c.h.b16 %v2653
      %v3116 = vpack.c.b16 %v2832, %v2828
      %v3117 = vpack.c.b16 %v2833, %v2829
      %v3118 = vpack.c.b16 %v2834, %v2830
      %v3119 = vpack.c.b16 %v2835, %v2831
      %v3120 = vpack.c.b16 %v2840, %v2836
      %v3121 = vpack.c.b16 %v2841, %v2837
      %v3122 = vpack.c.b16 %v2842, %v2838
      %v3123 = vpack.c.b16 %v2843, %v2839
      %v3124 = vpack.c.b16 %v2848, %v2844
      %v3125 = vpack.c.b16 %v2849, %v2845
      %v3126 = vpack.c.b16 %v2850, %v2846
      %v3127 = vpack.c.b16 %v2851, %v2847
      %v3128 = vpack.c.b16 %v2856, %v2852
      %v3129 = vpack.c.b16 %v2857, %v2853
      %v3130 = vpack.c.b16 %v2858, %v2854
      %v3131 = vpack.c.b16 %v2859, %v2855
      %v3132 = vpack.c.b16 %v2864, %v2860
      %v3133 = vpack.c.b16 %v2865, %v2861
      %v3134 = vpack.c.b16 %v2866, %v2862
      %v3135 = vpack.c.b16 %v2867, %v2863
      %v3136 = vpack.c.b16 %v2872, %v2868
      %v3137 = vpack.c.b16 %v2873, %v2869
      %v3138 = vpack.c.b16 %v2874, %v2870
      %v3139 = vpack.c.b16 %v2875, %v2871
      %v3140 = vpack.c.b16 %v2880, %v2876
      %v3141 = vpack.c.b16 %v2881, %v2877
      %v3142 = vpack.c.b16 %v2882, %v2878
      %v3143 = vpack.c.b16 %v2883, %v2879
      %v3144 = vpack.c.b16 %v2888, %v2884
      %v3145 = vpack.c.b16 %v2889, %v2885
      %v3146 = vpack.c.b16 %v2890, %v2886
      %v3147 = vpack.c.b16 %v2891, %v2887
      %v3148 = vpack.c.b16 %v2896, %v2892
      %v3149 = vpack.c.b16 %v2897, %v2893
      %v3150 = vpack.c.b16 %v2898, %v2894
      %v3151 = vpack.c.b16 %v2899, %v2895
      %v3152 = vpack.c.b16 %v2904, %v2900
      %v3153 = vpack.c.b16 %v2905, %v2901
      %v3154 = vpack.c.b16 %v2906, %v2902
      %v3155 = vpack.c.b16 %v2907, %v2903
      %v3156 = vpack.c.b16 %v2912, %v2908
      %v3157 = vpack.c.b16 %v2913, %v2909
      %v3158 = vpack.c.b16 %v2914, %v2910
      %v3159 = vpack.c.b16 %v2915, %v2911
      %v3160 = vpack.c.b16 %v2920, %v2916
      %v3161 = vpack.c.b16 %v2921, %v2917
      %v3162 = vpack.c.b16 %v2922, %v2918
      %v3163 = vpack.c.b16 %v2923, %v2919
      %v3164 = vpack.c.b16 %v2928, %v2924
      %v3165 = vpack.c.b16 %v2929, %v2925
      %v3166 = vpack.c.b16 %v2930, %v2926
      %v3167 = vpack.c.b16 %v2931, %v2927
      %v3168 = vpack.c.b16 %v2936, %v2932
      %v3169 = vpack.c.b16 %v2937, %v2933
      %v3170 = vpack.c.b16 %v2938, %v2934
      %v3171 = vpack.c.b16 %v2939, %v2935
      %v3172 = vpack.c.b16 %v2944, %v2940
      %v3173 = vpack.c.b16 %v2945, %v2941
      %v3174 = vpack.c.b16 %v2946, %v2942
      %v3175 = vpack.c.b16 %v2947, %v2943
      %v3176 = vpack.c.b16 %v2952, %v2948
      %v3177 = vpack.c.b16 %v2953, %v2949
      %v3178 = vpack.c.b16 %v2954, %v2950
      %v3179 = vpack.c.b16 %v2955, %v2951
      %v3180 = vpack.c.b16 %v2960, %v2956
      %v3181 = vpack.c.b16 %v2961, %v2957
      %v3182 = vpack.c.b16 %v2962, %v2958
      %v3183 = vpack.c.b16 %v2963, %v2959
      %v3184 = vpack.c.b16 %v2968, %v2964
      %v3185 = vpack.c.b16 %v2969, %v2965
      %v3186 = vpack.c.b16 %v2970, %v2966
      %v3187 = vpack.c.b16 %v2971, %v2967
      %v3188 = vpack.c.b16 %v2976, %v2972
      %v3189 = vpack.c.b16 %v2977, %v2973
      %v3190 = vpack.c.b16 %v2978, %v2974
      %v3191 = vpack.c.b16 %v2979, %v2975
      %v3192 = vpack.c.b16 %v2984, %v2980
      %v3193 = vpack.c.b16 %v2985, %v2981
      %v3194 = vpack.c.b16 %v2986, %v2982
      %v3195 = vpack.c.b16 %v2987, %v2983
      %v3196 = vpack.c.b16 %v2992, %v2988
      %v3197 = vpack.c.b16 %v2993, %v2989
      %v3198 = vpack.c.b16 %v2994, %v2990
      %v3199 = vpack.c.b16 %v2995, %v2991
      %v3200 = vpack.c.b16 %v3000, %v2996
      %v3201 = vpack.c.b16 %v3001, %v2997
      %v3202 = vpack.c.b16 %v3002, %v2998
      %v3203 = vpack.c.b16 %v3003, %v2999
      %v3204 = vpack.c.b16 %v3008, %v3004
      %v3205 = vpack.c.b16 %v3009, %v3005
      %v3206 = vpack.c.b16 %v3010, %v3006
      %v3207 = vpack.c.b16 %v3011, %v3007
      %v3208 = vpack.c.b16 %v3016, %v3012
      %v3209 = vpack.c.b16 %v3017, %v3013
      %v3210 = vpack.c.b16 %v3018, %v3014
      %v3211 = vpack.c.b16 %v3019, %v3015
      %v3212 = vpack.c.b16 %v3024, %v3020
      %v3213 = vpack.c.b16 %v3025, %v3021
      %v3214 = vpack.c.b16 %v3026, %v3022
      %v3215 = vpack.c.b16 %v3027, %v3023
      %v3216 = vpack.c.b16 %v3032, %v3028
      %v3217 = vpack.c.b16 %v3033, %v3029
      %v3218 = vpack.c.b16 %v3034, %v3030
      %v3219 = vpack.c.b16 %v3035, %v3031
      %v3220 = vpack.c.b16 %v3040, %v3036
      %v3221 = vpack.c.b16 %v3041, %v3037
      %v3222 = vpack.c.b16 %v3042, %v3038
      %v3223 = vpack.c.b16 %v3043, %v3039
      %v3224 = vpack.c.b16 %v3048, %v3044
      %v3225 = vpack.c.b16 %v3049, %v3045
      %v3226 = vpack.c.b16 %v3050, %v3046
      %v3227 = vpack.c.b16 %v3051, %v3047
      %v3228 = vpack.c.b16 %v3056, %v3052
      %v3229 = vpack.c.b16 %v3057, %v3053
      %v3230 = vpack.c.b16 %v3058, %v3054
      %v3231 = vpack.c.b16 %v3059, %v3055
      %v3232 = vpack.c.b16 %v3064, %v3060
      %v3233 = vpack.c.b16 %v3065, %v3061
      %v3234 = vpack.c.b16 %v3066, %v3062
      %v3235 = vpack.c.b16 %v3067, %v3063
      %v3236 = vpack.c.b16 %v3072, %v3068
      %v3237 = vpack.c.b16 %v3073, %v3069
      %v3238 = vpack.c.b16 %v3074, %v3070
      %v3239 = vpack.c.b16 %v3075, %v3071
      %v3240 = vpack.c.b16 %v3080, %v3076
      %v3241 = vpack.c.b16 %v3081, %v3077
      %v3242 = vpack.c.b16 %v3082, %v3078
      %v3243 = vpack.c.b16 %v3083, %v3079
      %v3244 = vpack.c.b16 %v3088, %v3084
      %v3245 = vpack.c.b16 %v3089, %v3085
      %v3246 = vpack.c.b16 %v3090, %v3086
      %v3247 = vpack.c.b16 %v3091, %v3087
      %v3248 = vpack.c.b16 %v3096, %v3092
      %v3249 = vpack.c.b16 %v3097, %v3093
      %v3250 = vpack.c.b16 %v3098, %v3094
      %v3251 = vpack.c.b16 %v3099, %v3095
      %v3252 = vpack.c.b16 %v3104, %v3100
      %v3253 = vpack.c.b16 %v3105, %v3101
      %v3254 = vpack.c.b16 %v3106, %v3102
      %v3255 = vpack.c.b16 %v3107, %v3103
      %v3256 = vpack.c.b16 %v3112, %v3108
      %v3257 = vpack.c.b16 %v3113, %v3109
      %v3258 = vpack.c.b16 %v3114, %v3110
      %v3259 = vpack.c.b16 %v3115, %v3111
      %v3405 = vsel %vm1267, %v2679, 0
      %3407 = vmatprep.subr.bf16.mxu0 %v3117
      %3408 = vmatpush1.bf16.msra.mxu0 %v3116
      %3409 = vmatprep.subr.bf16.mxu0 %v3121
      %3410 = vmatpush1.bf16.msra.mxu0 %v3120
      %3411 = vmatprep.subr.bf16.mxu0 %v3125
      %3412 = vmatpush1.bf16.msra.mxu0 %v3124
      %3413 = vmatprep.subr.bf16.mxu0 %v3129
      %3414 = vmatpush1.bf16.msra.mxu0 %v3128
      %3415 = vmatprep.subr.bf16.mxu0 %v3133
      %3416 = vmatpush1.bf16.msra.mxu0 %v3132
      %3417 = vmatprep.subr.bf16.mxu0 %v3137
      %3418 = vmatpush1.bf16.msra.mxu0 %v3136
      %3419 = vmatprep.subr.bf16.mxu0 %v3141
      %3420 = vmatpush1.bf16.msra.mxu0 %v3140
      %3421 = vmatprep.subr.bf16.mxu0 %v3145
      %3422 = vmatpush1.bf16.msra.mxu0 %v3144
      %3423 = vmatprep.subr.bf16.mxu0 %v3149
      %3424 = vmatpush1.bf16.msra.mxu0 %v3148
      %3425 = vmatprep.subr.bf16.mxu0 %v3153
      %3426 = vmatpush1.bf16.msra.mxu0 %v3152
      %3427 = vmatprep.subr.bf16.mxu0 %v3157
      %3428 = vmatpush1.bf16.msra.mxu0 %v3156
      %3429 = vmatprep.subr.bf16.mxu0 %v3161
      %3430 = vmatpush1.bf16.msra.mxu0 %v3160
      %3431 = vmatprep.subr.bf16.mxu0 %v3165
      %3432 = vmatpush1.bf16.msra.mxu0 %v3164
      %3433 = vmatprep.subr.bf16.mxu0 %v3169
      %3434 = vmatpush1.bf16.msra.mxu0 %v3168
      %3435 = vmatprep.subr.bf16.mxu0 %v3173
      %3436 = vmatpush1.bf16.msra.mxu0 %v3172
      %3437 = vmatprep.subr.bf16.mxu0 %v3177
      %3438 = vmatpush1.bf16.msra.mxu0 %v3176
      %3439 = vmatprep.mubr.bf16.mxu0 %v2676
      %3440 = vmatmul.mubr.bf16.gmra.mrb[0].mxu0 %v2675
      %v3441 = vpop.f32.mrb[0].mxu0
      %v3442 = vadd.f32 0.0, %v3441
      %v3443 = vpop.f32.mrb[0].mxu0
      %v3444 = vadd.f32 0.0, %v3443
      %v3445 = vpop.f32.mrb[0].mxu0
      %v3446 = vpop.f32.mrb[0].mxu0
      %3447 = vdwg.mxu0
      %3448 = vmatprep.subr.bf16.mxu0 %v3181
      %3449 = vmatpush1.bf16.msra.mxu0 %v3180
      %3450 = vmatprep.subr.bf16.mxu0 %v3185
      %3451 = vmatpush1.bf16.msra.mxu0 %v3184
      %3452 = vmatprep.subr.bf16.mxu0 %v3189
      %3453 = vmatpush1.bf16.msra.mxu0 %v3188
      %3454 = vmatprep.subr.bf16.mxu0 %v3193
      %3455 = vmatpush1.bf16.msra.mxu0 %v3192
      %3456 = vmatprep.subr.bf16.mxu0 %v3197
      %3457 = vmatpush1.bf16.msra.mxu0 %v3196
      %3458 = vmatprep.subr.bf16.mxu0 %v3201
      %3459 = vmatpush1.bf16.msra.mxu0 %v3200
      %3460 = vmatprep.subr.bf16.mxu0 %v3205
      %3461 = vmatpush1.bf16.msra.mxu0 %v3204
      %3462 = vmatprep.subr.bf16.mxu0 %v3209
      %3463 = vmatpush1.bf16.msra.mxu0 %v3208
      %3464 = vmatprep.subr.bf16.mxu0 %v3213
      %3465 = vmatpush1.bf16.msra.mxu0 %v3212
      %3466 = vmatprep.subr.bf16.mxu0 %v3217
      %3467 = vmatpush1.bf16.msra.mxu0 %v3216
      %3468 = vmatprep.subr.bf16.mxu0 %v3221
      %3469 = vmatpush1.bf16.msra.mxu0 %v3220
      %3470 = vmatprep.subr.bf16.mxu0 %v3225
      %3471 = vmatpush1.bf16.msra.mxu0 %v3224
      %3472 = vmatprep.subr.bf16.mxu0 %v3229
      %3473 = vmatpush1.bf16.msra.mxu0 %v3228
      %3474 = vmatprep.subr.bf16.mxu0 %v3233
      %3475 = vmatpush1.bf16.msra.mxu0 %v3232
      %3476 = vmatprep.subr.bf16.mxu0 %v3237
      %3477 = vmatpush1.bf16.msra.mxu0 %v3236
      %3478 = vmatprep.subr.bf16.mxu0 %v3241
      %3479 = vmatpush1.bf16.msra.mxu0 %v3240
      %3480 = vmatprep.mubr.bf16.mxu0 %v2678
      %3481 = vmatmul.mubr.bf16.gmra.mrb[0].mxu0 %v2677
      %v3482 = vpop.f32.mrb[0].mxu0
      %v3483 = vadd.f32 %v3442, %v3482
      %v3484 = vpop.f32.mrb[0].mxu0
      %v3485 = vadd.f32 %v3444, %v3484
      %v3486 = vpop.f32.mrb[0].mxu0
      %v3487 = vpop.f32.mrb[0].mxu0
      %3488 = vdwg.mxu0
      %3489 = vmatprep.subr.bf16.mxu0 %v3245
      %3490 = vmatpush1.bf16.msra.mxu0 %v3244
      %3491 = vmatprep.subr.bf16.mxu0 %v3249
      %3492 = vmatpush1.bf16.msra.mxu0 %v3248
      %3493 = vmatprep.subr.bf16.mxu0 %v3253
      %3494 = vmatpush1.bf16.msra.mxu0 %v3252
      %3495 = vmatprep.subr.bf16.mxu0 %v3257
      %3496 = vmatpush1.bf16.msra.mxu0 %v3256
      %3497 = vmatprep.subr.bf16.mxu0 0
      %3498 = vmatpush1.bf16.msra.mxu0 0
      %3499 = vmatprep.subr.bf16.mxu0 0
      %3500 = vmatpush1.bf16.msra.mxu0 0
      %3501 = vmatprep.subr.bf16.mxu0 0
      %3502 = vmatpush1.bf16.msra.mxu0 0
      %3503 = vmatprep.subr.bf16.mxu0 0
      %3504 = vmatpush1.bf16.msra.mxu0 0
      %3505 = vmatprep.subr.bf16.mxu0 0
      %3506 = vmatpush1.bf16.msra.mxu0 0
      %3507 = vmatprep.subr.bf16.mxu0 0
      %3508 = vmatpush1.bf16.msra.mxu0 0
      %3509 = vmatprep.subr.bf16.mxu0 0
      %3510 = vmatpush1.bf16.msra.mxu0 0
      %3511 = vmatprep.subr.bf16.mxu0 0
      %3512 = vmatpush1.bf16.msra.mxu0 0
      %3513 = vmatprep.subr.bf16.mxu0 0
      %3514 = vmatpush1.bf16.msra.mxu0 0
      %3515 = vmatprep.subr.bf16.mxu0 0
      %3516 = vmatpush1.bf16.msra.mxu0 0
      %3517 = vmatprep.subr.bf16.mxu0 0
      %3518 = vmatpush1.bf16.msra.mxu0 0
      %3519 = vmatprep.subr.bf16.mxu0 0
      %3520 = vmatpush1.bf16.msra.mxu0 0
      %3521 = vmatprep.mubr.bf16.mxu0 0
      %3522 = vmatmul.mubr.bf16.gmra.mrb[0].mxu0 %v3405
      %v3523 = vpop.f32.mrb[0].mxu0
      %v3524 = vadd.f32 %v3483, %v3523
      %v3525 = vpop.f32.mrb[0].mxu0
      %v3526 = vadd.f32 %v3485, %v3525
      %v3527 = vpop.f32.mrb[0].mxu0
      %v3528 = vpop.f32.mrb[0].mxu0
      %3529 = vdwg.mxu0
      %3530 = vmatprep.subr.bf16.mxu0 %v3119
      %3531 = vmatpush1.bf16.msra.mxu0 %v3118
      %3532 = vmatprep.subr.bf16.mxu0 %v3123
      %3533 = vmatpush1.bf16.msra.mxu0 %v3122
      %3534 = vmatprep.subr.bf16.mxu0 %v3127
      %3535 = vmatpush1.bf16.msra.mxu0 %v3126
      %3536 = vmatprep.subr.bf16.mxu0 %v3131
      %3537 = vmatpush1.bf16.msra.mxu0 %v3130
      %3538 = vmatprep.subr.bf16.mxu0 %v3135
      %3539 = vmatpush1.bf16.msra.mxu0 %v3134
      %3540 = vmatprep.subr.bf16.mxu0 %v3139
      %3541 = vmatpush1.bf16.msra.mxu0 %v3138
      %3542 = vmatprep.subr.bf16.mxu0 %v3143
      %3543 = vmatpush1.bf16.msra.mxu0 %v3142
      %3544 = vmatprep.subr.bf16.mxu0 %v3147
      %3545 = vmatpush1.bf16.msra.mxu0 %v3146
      %3546 = vmatprep.subr.bf16.mxu0 %v3151
      %3547 = vmatpush1.bf16.msra.mxu0 %v3150
      %3548 = vmatprep.subr.bf16.mxu0 %v3155
      %3549 = vmatpush1.bf16.msra.mxu0 %v3154
      %3550 = vmatprep.subr.bf16.mxu0 %v3159
      %3551 = vmatpush1.bf16.msra.mxu0 %v3158
      %3552 = vmatprep.subr.bf16.mxu0 %v3163
      %3553 = vmatpush1.bf16.msra.mxu0 %v3162
      %3554 = vmatprep.subr.bf16.mxu0 %v3167
      %3555 = vmatpush1.bf16.msra.mxu0 %v3166
      %3556 = vmatprep.subr.bf16.mxu0 %v3171
      %3557 = vmatpush1.bf16.msra.mxu0 %v3170
      %3558 = vmatprep.subr.bf16.mxu0 %v3175
      %3559 = vmatpush1.bf16.msra.mxu0 %v3174
      %3560 = vmatprep.subr.bf16.mxu0 %v3179
      %3561 = vmatpush1.bf16.msra.mxu0 %v3178
      %3562 = vmatprep.mubr.bf16.mxu0 %v2676
      %3563 = vmatmul.mubr.bf16.gmra.mrb[0].mxu0 %v2675
      %v3564 = vpop.f32.mrb[0].mxu0
      %v3565 = vadd.f32 0.0, %v3564
      %v3566 = vpop.f32.mrb[0].mxu0
      %v3567 = vadd.f32 0.0, %v3566
      %v3568 = vpop.f32.mrb[0].mxu0
      %v3569 = vpop.f32.mrb[0].mxu0
      %3570 = vdwg.mxu0
      %3571 = vmatprep.subr.bf16.mxu0 %v3183
      %3572 = vmatpush1.bf16.msra.mxu0 %v3182
      %3573 = vmatprep.subr.bf16.mxu0 %v3187
      %3574 = vmatpush1.bf16.msra.mxu0 %v3186
      %3575 = vmatprep.subr.bf16.mxu0 %v3191
      %3576 = vmatpush1.bf16.msra.mxu0 %v3190
      %3577 = vmatprep.subr.bf16.mxu0 %v3195
      %3578 = vmatpush1.bf16.msra.mxu0 %v3194
      %3579 = vmatprep.subr.bf16.mxu0 %v3199
      %3580 = vmatpush1.bf16.msra.mxu0 %v3198
      %3581 = vmatprep.subr.bf16.mxu0 %v3203
      %3582 = vmatpush1.bf16.msra.mxu0 %v3202
      %3583 = vmatprep.subr.bf16.mxu0 %v3207
      %3584 = vmatpush1.bf16.msra.mxu0 %v3206
      %3585 = vmatprep.subr.bf16.mxu0 %v3211
      %3586 = vmatpush1.bf16.msra.mxu0 %v3210
      %3587 = vmatprep.subr.bf16.mxu0 %v3215
      %3588 = vmatpush1.bf16.msra.mxu0 %v3214
      %3589 = vmatprep.subr.bf16.mxu0 %v3219
      %3590 = vmatpush1.bf16.msra.mxu0 %v3218
      %3591 = vmatprep.subr.bf16.mxu0 %v3223
      %3592 = vmatpush1.bf16.msra.mxu0 %v3222
      %3593 = vmatprep.subr.bf16.mxu0 %v3227
      %3594 = vmatpush1.bf16.msra.mxu0 %v3226
      %3595 = vmatprep.subr.bf16.mxu0 %v3231
      %3596 = vmatpush1.bf16.msra.mxu0 %v3230
      %3597 = vmatprep.subr.bf16.mxu0 %v3235
      %3598 = vmatpush1.bf16.msra.mxu0 %v3234
      %3599 = vmatprep.subr.bf16.mxu0 %v3239
      %3600 = vmatpush1.bf16.msra.mxu0 %v3238
      %3601 = vmatprep.subr.bf16.mxu0 %v3243
      %3602 = vmatpush1.bf16.msra.mxu0 %v3242
      %3603 = vmatprep.mubr.bf16.mxu0 %v2678
      %3604 = vmatmul.mubr.bf16.gmra.mrb[0].mxu0 %v2677
      %v3605 = vpop.f32.mrb[0].mxu0
      %v3606 = vadd.f32 %v3565, %v3605
      %v3607 = vpop.f32.mrb[0].mxu0
      %v3608 = vadd.f32 %v3567, %v3607
      %v3609 = vpop.f32.mrb[0].mxu0
      %v3610 = vpop.f32.mrb[0].mxu0
      %3611 = vdwg.mxu0
      %3612 = vmatprep.subr.bf16.mxu0 %v3247
      %3613 = vmatpush1.bf16.msra.mxu0 %v3246
      %3614 = vmatprep.subr.bf16.mxu0 %v3251
      %3615 = vmatpush1.bf16.msra.mxu0 %v3250
      %3616 = vmatprep.subr.bf16.mxu0 %v3255
      %3617 = vmatpush1.bf16.msra.mxu0 %v3254
      %3618 = vmatprep.subr.bf16.mxu0 %v3259
      %3619 = vmatpush1.bf16.msra.mxu0 %v3258
      %3620 = vmatprep.subr.bf16.mxu0 0
      %3621 = vmatpush1.bf16.msra.mxu0 0
      %3622 = vmatprep.subr.bf16.mxu0 0
      %3623 = vmatpush1.bf16.msra.mxu0 0
      %3624 = vmatprep.subr.bf16.mxu0 0
      %3625 = vmatpush1.bf16.msra.mxu0 0
      %3626 = vmatprep.subr.bf16.mxu0 0
      %3627 = vmatpush1.bf16.msra.mxu0 0
      %3628 = vmatprep.subr.bf16.mxu0 0
      %3629 = vmatpush1.bf16.msra.mxu0 0
      %3630 = vmatprep.subr.bf16.mxu0 0
      %3631 = vmatpush1.bf16.msra.mxu0 0
      %3632 = vmatprep.subr.bf16.mxu0 0
      %3633 = vmatpush1.bf16.msra.mxu0 0
      %3634 = vmatprep.subr.bf16.mxu0 0
      %3635 = vmatpush1.bf16.msra.mxu0 0
      %3636 = vmatprep.subr.bf16.mxu0 0
      %3637 = vmatpush1.bf16.msra.mxu0 0
      %3638 = vmatprep.subr.bf16.mxu0 0
      %3639 = vmatpush1.bf16.msra.mxu0 0
      %3640 = vmatprep.subr.bf16.mxu0 0
      %3641 = vmatpush1.bf16.msra.mxu0 0
      %3642 = vmatprep.subr.bf16.mxu0 0
      %3643 = vmatpush1.bf16.msra.mxu0 0
      %3644 = vmatprep.mubr.bf16.mxu0 0
      %3645 = vmatmul.mubr.bf16.gmra.mrb[0].mxu0 %v3405
      %v3646 = vpop.f32.mrb[0].mxu0
      %v3647 = vadd.f32 %v3606, %v3646
      %v3648 = vpop.f32.mrb[0].mxu0
      %v3649 = vadd.f32 %v3608, %v3648
      %v3650 = vpop.f32.mrb[0].mxu0
      %v3651 = vpop.f32.mrb[0].mxu0
      %3652 = vdwg.mxu0
      %v3653 = vadd.f32 %v2374, %v3524
      %v3654 = vadd.f32 %v2376, %v3526
      %v3655 = vadd.f32 %v2497, %v3647
      %v3656 = vadd.f32 %v2499, %v3649
      %v3657 = vrot.slane %v3653, 4
      %v3658 = vadd.f32 %v3653, %v3657
      %v3659 = vrot.slane %v3658, 2
      %v3660 = vadd.f32 %v3658, %v3659
      %v3661 = vrot.slane %v3660, 1
      %v3662 = vadd.f32 %v3660, %v3661
      %v3663 = vrot.slane %v3654, 4
      %v3664 = vadd.f32 %v3654, %v3663
      %v3665 = vrot.slane %v3664, 2
      %v3666 = vadd.f32 %v3664, %v3665
      %v3667 = vrot.slane %v3666, 1
      %v3668 = vadd.f32 %v3666, %v3667
      %v3669 = vrot.slane %v3655, 4
      %v3670 = vadd.f32 %v3655, %v3669
      %v3671 = vrot.slane %v3670, 2
      %v3672 = vadd.f32 %v3670, %v3671
      %v3673 = vrot.slane %v3672, 1
      %v3674 = vadd.f32 %v3672, %v3673
      %v3675 = vrot.slane %v3656, 4
      %v3676 = vadd.f32 %v3656, %v3675
      %v3677 = vrot.slane %v3676, 2
      %v3678 = vadd.f32 %v3676, %v3677
      %v3679 = vrot.slane %v3678, 1
      %v3680 = vadd.f32 %v3678, %v3679
      %v3685 = vcombine.low %v3662, %v3668
      %v3686 = vcombine.low %v3674, %v3680
      %v3688 = vunpack.c.l.s4 1966171168
      %v3689 = vunpack.c.0.s8 %v3688
      %v3690 = vlaneseq
      %v3691 = vshrl.u32 %v3690, 7
      %v3692 = vsub.s32 %v3689, %v3691
      %v3693 = vrot.slane %v3685, %v3692
      %v3695 = vunpack.c.l.s4 1966171168
      %v3696 = vunpack.c.0.s8 %v3695
      %v3697 = vlaneseq
      %v3698 = vshrl.u32 %v3697, 7
      %v3699 = vsub.s32 %v3696, %v3698
      %v3700 = vrot.slane %v3686, %v3699
      %v3701 = vcombine.low %v3693, %v3700
      %v3703 = vunpack.c.l.s4 1966171168
      %v3704 = vunpack.c.0.s8 %v3703
      %v3705 = vlaneseq
      %v3706 = vshrl.u32 %v3705, 7
      %v3707 = vsub.s32 %v3704, %v3706
      %v3708 = vrot.slane %v3701, %v3707
      %v3710 = vlaneseq
      %vm3711 = vcmp.ge.s32.totalorder %v3710, 0
      %vm3712 = vcmp.lt.s32.totalorder %v3710, 512
      %vm3713 = vmand %vm3711, %vm3712
      %3714 = vst.msk [vmem:[%s183] ss:$2 sm:$0xf] %vm3713, %v3708
      %v3715 = vmul.f32 %v3653, %v3653
      %v3716 = vmul.f32 %v3654, %v3654
      %v3717 = vmul.f32 %v3655, %v3655
      %v3718 = vmul.f32 %v3656, %v3656
      %v3719 = vrot.slane %v3715, 4
      %v3720 = vadd.f32 %v3715, %v3719
      %v3721 = vrot.slane %v3720, 2
      %v3722 = vadd.f32 %v3720, %v3721
      %v3723 = vrot.slane %v3722, 1
      %v3724 = vadd.f32 %v3722, %v3723
      %v3725 = vrot.slane %v3716, 4
      %v3726 = vadd.f32 %v3716, %v3725
      %v3727 = vrot.slane %v3726, 2
      %v3728 = vadd.f32 %v3726, %v3727
      %v3729 = vrot.slane %v3728, 1
      %v3730 = vadd.f32 %v3728, %v3729
      %v3731 = vrot.slane %v3717, 4
      %v3732 = vadd.f32 %v3717, %v3731
      %v3733 = vrot.slane %v3732, 2
      %v3734 = vadd.f32 %v3732, %v3733
      %v3735 = vrot.slane %v3734, 1
      %v3736 = vadd.f32 %v3734, %v3735
      %v3737 = vrot.slane %v3718, 4
      %v3738 = vadd.f32 %v3718, %v3737
      %v3739 = vrot.slane %v3738, 2
      %v3740 = vadd.f32 %v3738, %v3739
      %v3741 = vrot.slane %v3740, 1
      %v3742 = vadd.f32 %v3740, %v3741
      %v3747 = vcombine.low %v3724, %v3730
      %v3748 = vcombine.low %v3736, %v3742
      %v3750 = vunpack.c.l.s4 1966171168
      %v3751 = vunpack.c.0.s8 %v3750
      %v3752 = vlaneseq
      %v3753 = vshrl.u32 %v3752, 7
      %v3754 = vsub.s32 %v3751, %v3753
      %v3755 = vrot.slane %v3747, %v3754
      %v3757 = vunpack.c.l.s4 1966171168
      %v3758 = vunpack.c.0.s8 %v3757
      %v3759 = vlaneseq
      %v3760 = vshrl.u32 %v3759, 7
      %v3761 = vsub.s32 %v3758, %v3760
      %v3762 = vrot.slane %v3748, %v3761
      %v3763 = vcombine.low %v3755, %v3762
      %v3765 = vunpack.c.l.s4 1966171168
      %v3766 = vunpack.c.0.s8 %v3765
      %v3767 = vlaneseq
      %v3768 = vshrl.u32 %v3767, 7
      %v3769 = vsub.s32 %v3766, %v3768
      %v3770 = vrot.slane %v3763, %v3769
      %s3772 = scalar_lea.vmem %s183, 1
      %3773 = vst.msk [vmem:[%s3772] ss:$2 sm:$0xf] %vm3713, %v3770
      %3774 = vst [vmem:[%s178] sm:$0xff] %v3653
      %3775 = vst [vmem:[%s178 + $0x8] sm:$0xff] %v3654
      %3776 = vst [vmem:[%s178 + $0x10] sm:$0xff] %v3655
      %3777 = vst [vmem:[%s178 + $0x18] sm:$0xff] %v3656
      %p3778 = scmp.lt.s32.totalorder %s15, 1
      %s3779 = scalar_select %p3778, %s15, 1
      %s3780 = smul.addr %s3779, 4
      %s3781 = smul.addr %s3780, 8
      %s3782 = scalar_lea.vmem %s2, %s3781
      %p3783 = scmp.lt.s32.totalorder %s15, 1
      %s3784 = scalar_select %p3783, %s15, 1
      %s3785 = smul.addr %s3784, 4
      %s3786 = smul.addr %s3785, 2
      %s3787 = scalar_lea.vmem %s3, %s3786
      // Predicated region
      $region29: #{dilconv_forward.1} parent=27 // pred_check
        %p3788 = pneg %p80
      $region30: #{dilconv_forward.1} parent=27 // pred_check_branch
        %3790 = sbr.rel (%p3788) target = $region32
      $region31: #{dilconv_forward.1} parent=27 // pred_region
        _
      $region32: #{dilconv_forward.1} parent=27 // pred_fallthru
        _
      // Predicated region
      $region33: #{dilconv_forward.1} parent=27 // pred_check
        %p3791 = pneg %p106
      $region34: #{dilconv_forward.1} parent=27 // pred_check_branch
        %3793 = sbr.rel (%p3791) target = $region36
      $region35: #{dilconv_forward.1} parent=27 // pred_region
        _
      $region36: #{dilconv_forward.1} parent=27 // pred_fallthru
        _
    $region28: #{dilconv_forward.1} parent=5 // pred_fallthru
      _
    %p3794 = scmp.le.s32.totalorder 2, %s10
    // Predicated region
    $region37: #{dilconv_forward.1} parent=5 // pred_check
      %p3795 = pneg %p3794
    $region38: #{dilconv_forward.1} parent=5 // pred_check_branch
      %3797 = sbr.rel (%p3795) target = $region40
    $region39: #{dilconv_forward.1} parent=5 // pred_region
      %s3798 = ssub.s32 %s10, 2
      // Predicated region
      $region41: #{dilconv_forward.1} parent=39 // pred_check
        %p3799 = pneg %p86
      $region42: #{dilconv_forward.1} parent=39 // pred_check_branch
        %3801 = sbr.rel (%p3799) target = $region44
      $region43: #{dilconv_forward.1} parent=39 // pred_region
        %p3802 = scmp.lt.s32.totalorder %s16, 1
        %s3803 = scalar_select %p3802, %s16, 1
        %s3804 = smul.addr %s3803, 4
        %s3805 = smul.addr %s3804, 8
        %s3806 = scalar_lea.vmem %s2, %s3805
      $region44: #{dilconv_forward.1} parent=39 // pred_fallthru
        _
      // Predicated region
      $region45: #{dilconv_forward.1} parent=39 // pred_check
        %p3807 = pneg %p112
      $region46: #{dilconv_forward.1} parent=39 // pred_check_branch
        %3809 = sbr.rel (%p3807) target = $region48
      $region47: #{dilconv_forward.1} parent=39 // pred_region
        %p3810 = scmp.lt.s32.totalorder %s16, 1
        %s3811 = scalar_select %p3810, %s16, 1
        %s3812 = smul.addr %s3811, 4
        %s3813 = smul.addr %s3812, 2
        %s3814 = scalar_lea.vmem %s3, %s3813
      $region48: #{dilconv_forward.1} parent=39 // pred_fallthru
        _
    $region40: #{dilconv_forward.1} parent=5 // pred_fallthru
      _
  $region6: #{dilconv_forward.1} parent=0 // loop_footer
    %s14 = sadd.s32 1, %s10
  $region7: #{dilconv_forward.1} parent=0 // loop_footer_branch
    %9 = sbr.rel target = $region3
  $region8: #{dilconv_forward.1} parent=0 // loop_exit
    _

</llo_original>
